<compile_context>
chip_gen: v7x
topology: tpu7x:2x2x1
jax: 0.10.0
libtpu: 0.0.40
codegen_flags: <defaults>
</compile_context>

<pallas_src>
import functools
import math

import jax
import jax.numpy as jnp
from jax.experimental import pallas as pl
from jax.experimental.pallas import tpu as pltpu

_EPS = 1e-5
_INNER_MLP_MULT = 2


def _round_up(x, m):
    return ((x + m - 1) // m) * m


def _lane_multiple():
    """Lane/MXU pad target: 128 on <=v5 (128-wide MXU), 256 on v6e/v7x (2x256^2 MXU)."""
    try:
        kind = jax.devices()[0].device_kind.lower()
    except Exception:
        return 128
    for tag in ("v2", "v3", "v4", "v5"):
        if tag in kind:
            return 128
    return 256


# ------------------------------ fused kernel ------------------------------- #

def _bn_relu(h, gamma, beta):
    """Training-mode BatchNorm1d over the full batch (one block) + ReLU, all f32."""
    mean = jnp.mean(h, axis=0, keepdims=True)
    var = jnp.mean(jnp.square(h - mean), axis=0, keepdims=True)
    y = gamma * (h - mean) * jax.lax.rsqrt(var + _EPS) + beta
    return jnp.maximum(y, 0.0)


def _mlp(x, w_ref, vec_ref, layer_specs, vec_base):
    """Linear -> BatchNorm -> ReLU stack. bf16 MXU inputs, f32 accumulate/epilogue."""
    for li, (w_off, k, out_w) in enumerate(layer_specs):
        w = w_ref[w_off:w_off + k, :out_w]          # bf16, 128-aligned static slice
        r = vec_base + 3 * li
        b = vec_ref[r:r + 1, :out_w]
        g = vec_ref[r + 1:r + 2, :out_w]
        be = vec_ref[r + 2:r + 3, :out_w]
        h = jnp.dot(x.astype(jnp.bfloat16), w,
                    preferred_element_type=jnp.float32) + b
        x = _bn_relu(h, g, be)
    return x


def _fused_edge_cycle_kernel(cfg, edge_ref, cycle_ref, ge2c_ref, gc2e_ref,
                             gc2e_seg_ref, segb_ref, segbt_ref, waut_ref,
                             wcyc_ref, wedg_ref, vec_ref,
                             edge_out_ref, cycle_out_ref):
    f32, bf16 = jnp.float32, jnp.bfloat16
    dp, dcp = cfg["dp"], cfg["dcp"]

    edge_rep = edge_ref[...]                                    # [E, dp] f32
    cycle_rep = cycle_ref[...]                                  # [R, dp] f32
    n_rows = cycle_rep.shape[0]

    # ---- edge -> cycle gather: one stacked bf16 matmul, f32 accumulate. ----
    e2c = jnp.dot(ge2c_ref[...], edge_rep.astype(bf16),
                  preferred_element_type=f32)                   # [R, dp]
    e2c_bf = e2c.astype(bf16)

    # ---- Autobahn: full-tile matmul per cycle size, selected by a row mask
    #      (no sublane slicing / axis-0 concat). ----
    rows = jax.lax.broadcasted_iota(jnp.int32, (n_rows, 1), 0)
    aut = jnp.zeros((n_rows, dcp), f32)
    for i, (off, cnt) in enumerate(zip(cfg["row_offsets"], cfg["row_counts"])):
        r = cfg["aut_bias_rows"][i]
        p = (jnp.dot(e2c_bf, waut_ref[i], preferred_element_type=f32)
             + vec_ref[r:r + 1, :dcp])
        mask = jnp.logical_and(rows >= off, rows < off + cnt)
        aut = jnp.where(mask, p, aut)                           # [R, dcp]

    # ---- "sum" half of the 1->1 linmap as a factored per-cycle segment sum:
    #      lin_sum = B @ (B^T @ x), B = [R, n_cycles] membership (replaces the
    #      dense O(R^2) block-diagonal matmul). ----
    seg = jnp.dot(segbt_ref[...], e2c_bf, preferred_element_type=f32)        # [NC, dp]
    lin_sum = jnp.dot(segb_ref[...], seg.astype(bf16),
                      preferred_element_type=f32)                            # [R, dp]

    # ---- cycle MLP: 128-aligned lane concat -> single wide first-layer dot. ----
    x = jnp.concatenate([cycle_rep, aut, lin_sum, e2c], axis=-1)
    cycle_out = _mlp(x, wcyc_ref, vec_ref, cfg["cyc_layers"], cfg["cyc_vec_base"])
    cycle_out_ref[...] = cycle_out                              # [R, dp] lane-dense store

    # ---- cycle -> edge: (sum | identity) 1->1 linmap, then 1->0 gather-sum.
    #      Sum path uses the precomposed (gc2e @ B) [E, NC] map. ----
    cycle_out_bf = cycle_out.astype(bf16)
    seg2 = jnp.dot(segbt_ref[...], cycle_out_bf, preferred_element_type=f32)  # [NC, dp]
    c2e_sum = jnp.dot(gc2e_seg_ref[...], seg2.astype(bf16),
                      preferred_element_type=f32)                             # [E, dp]
    c2e_id = jnp.dot(gc2e_ref[...], cycle_out_bf, preferred_element_type=f32)  # [E, dp]

    # ---- edge MLP. ----
    x = jnp.concatenate([edge_rep, c2e_sum, c2e_id], axis=-1)
    edge_out_ref[...] = _mlp(x, wedg_ref, vec_ref, cfg["edg_layers"],
                             cfg["edg_vec_base"])               # [E, dp]


# ----------------------------- packing / wrapper ----------------------------- #

def _pad2(a, rows, cols):
    return jnp.pad(a, ((0, rows - a.shape[0]), (0, cols - a.shape[1])))


def pack_edge_cycle(params, graph, lane):
    """Pad everything to lane-dense widths and pack parameters into 4 slabs."""
    d = params["rep_dim"]
    c = params["num_channels"]
    dp = _round_up(d, lane)
    hp = _round_up(_INNER_MLP_MULT * d, lane)
    dcp = _round_up(c * d, lane)
    wcol = max(dp, hp, dcp)
    bf16 = jnp.bfloat16

    n_sizes = len(graph["row_offsets"])
    n_cyc = len(params["cycle_mlp"])

    # Autobahn weights [n_sizes, dp, dcp] bf16; biases become the first vec rows.
    waut = jnp.pad(params["w_aut"],
                   ((0, 0), (0, dp - d), (0, dcp - c * d))).astype(bf16)
    vec_parts = [jnp.pad(params["b_aut"][:, 0, :], ((0, 0), (0, wcol - c * d)))]
    aut_bias_rows = tuple(range(n_sizes))

    def pack_mlp(layers, first_chunks):
        w_parts, specs, w_off = [], [], 0
        for li, (w, b, g, be) in enumerate(layers):
            out_w = hp if li < len(layers) - 1 else dp
            if li == 0:
                wp = jnp.concatenate(
                    [_pad2(chunk, rows, wcol) for chunk, rows in first_chunks(w)],
                    axis=0)
            else:
                wp = _pad2(w, hp, wcol)
            w_parts.append(wp.astype(bf16))
            specs.append((w_off, wp.shape[0], out_w))
            w_off += wp.shape[0]
            for v in (b, g, be):
                vec_parts.append(jnp.pad(v, ((0, 0), (0, wcol - v.shape[1]))))
        return jnp.concatenate(w_parts, axis=0), tuple(specs)

    # cycle MLP first-layer input order: [cycle_rep | aut | lin_sum | e2c(identity)]
    def cyc_chunks(w):
        return [(w[0:d], dp), (w[d:d + c * d], dcp),
                (w[d + c * d:d + c * d + d], dp), (w[d + c * d + d:], dp)]

    # edge MLP first-layer input order: [edge_rep | c2e_sum | c2e_id]
    def edg_chunks(w):
        return [(w[0:d], dp), (w[d:2 * d], dp), (w[2 * d:], dp)]

    cyc_vec_base = n_sizes
    wcyc, cyc_layers = pack_mlp(params["cycle_mlp"], cyc_chunks)
    edg_vec_base = n_sizes + 3 * n_cyc
    wedg, edg_layers = pack_mlp(params["edge_mlp"], edg_chunks)
    vec = jnp.concatenate(vec_parts, axis=0).astype(jnp.float32)   # [NV, wcol] f32

    segb = graph["segb"]                                           # [R, NC] 0/1
    packed = dict(
        ge2c=graph["e2c"].astype(bf16),
        gc2e=graph["c2e"].astype(bf16),
        gc2e_seg=jnp.dot(graph["c2e"], segb).astype(bf16),  # small-int counts, bf16-exact
        segb=segb.astype(bf16),
        segbt=segb.T.astype(bf16),
        waut=waut, wcyc=wcyc, wedg=wedg, vec=vec)
    cfg = dict(dp=dp, hp=hp, dcp=dcp,
               row_offsets=tuple(graph["row_offsets"]),
               row_counts=tuple(graph["row_counts"]),
               aut_bias_rows=aut_bias_rows,
               cyc_layers=cyc_layers, cyc_vec_base=cyc_vec_base,
               edg_layers=edg_layers, edg_vec_base=edg_vec_base)
    return packed, cfg


def edge_cycle_forward(params, graph, edge_rep, cycle_rep, lane=None):
    if lane is None:
        lane = _lane_multiple()
    packed, cfg = pack_edge_cycle(params, graph, lane)
    d, dp, dcp = params["rep_dim"], cfg["dp"], cfg["dcp"]
    n_edges, n_rows = edge_rep.shape[0], cycle_rep.shape[0]
    n_cycles = graph["n_cycles"]

    edge_p = jnp.pad(edge_rep, ((0, 0), (0, dp - d)))
    cycle_p = jnp.pad(cycle_rep, ((0, 0), (0, dp - d)))
    inputs = [edge_p, cycle_p, packed["ge2c"], packed["gc2e"], packed["gc2e_seg"],
              packed["segb"], packed["segbt"], packed["waut"],
              packed["wcyc"], packed["wedg"], packed["vec"]]

    # Advisory cost estimate (approximate) for XLA scheduling around the custom call.
    flops = 2 * n_rows * n_edges * dp                                  # e2c gather
    flops += 2 * len(cfg["row_offsets"]) * n_rows * dp * dcp           # Autobahn
    flops += 2 * 3 * n_cycles * n_rows * dp                            # segment sums
    flops += 2 * n_edges * n_cycles * dp + 2 * n_edges * n_rows * dp   # cycle -> edge
    for m, specs in ((n_rows, cfg["cyc_layers"]), (n_edges, cfg["edg_layers"])):
        for _, k, w in specs:
            flops += 2 * m * k * w
    bn_cols = sum(w for _, _, w in cfg["cyc_layers"]) \
        + sum(w for _, _, w in cfg["edg_layers"])
    bytes_accessed = sum(int(a.size) * jnp.dtype(a.dtype).itemsize for a in inputs)
    bytes_accessed += (n_edges + n_rows) * dp * 4

    vmem = lambda: pl.BlockSpec(memory_space=pltpu.MemorySpace.VMEM)
    edge_out, cycle_out = pl.pallas_call(
        functools.partial(_fused_edge_cycle_kernel, cfg),
        in_specs=[vmem() for _ in inputs],
        out_specs=(vmem(), vmem()),
        out_shape=(jax.ShapeDtypeStruct((n_edges, dp), jnp.float32),
                   jax.ShapeDtypeStruct((n_rows, dp), jnp.float32)),
        cost_estimate=pl.CostEstimate(flops=int(flops),
                                      transcendentals=int(bn_cols),
                                      bytes_accessed=int(bytes_accessed)),
    )(*inputs)
    return edge_out[:, :d], cycle_out[:, :d]


# ---------------------------- parameter helpers ----------------------------- #

def _linear_init(key, fan_in, fan_out):
    w = jax.random.normal(key, (fan_in, fan_out), jnp.float32) / math.sqrt(fan_in)
    b = jnp.zeros((1, fan_out), jnp.float32)
    return w, b


def _mlp_init(key, in_dim, hidden_dim, out_dim, num_layers):
    # get_mlp: num_layers x (Linear -> BatchNorm1d -> ReLU)
    dims = [in_dim] + [hidden_dim] * (num_layers - 1) + [out_dim]
    keys = jax.random.split(key, num_layers)
    params = []
    for k, din, dout in zip(keys, dims[:-1], dims[1:]):
        w, b = _linear_init(k, din, dout)
        gamma = jnp.ones((1, dout), jnp.float32)
        beta = jnp.zeros((1, dout), jnp.float32)
        params.append((w, b, gamma, beta))
    return params


def init_edge_cycle(key, rep_dim, num_channels, cycle_sizes):
    k1, k2, k3 = jax.random.split(key, 3)
    cycle_mlp = _mlp_init(
        k1, (1 + 2 + num_channels) * rep_dim, rep_dim * _INNER_MLP_MULT, rep_dim, 3)
    edge_mlp = _mlp_init(
        k2, 3 * rep_dim, rep_dim * _INNER_MLP_MULT, rep_dim, 2)
    aut_keys = jax.random.split(k3, len(cycle_sizes))
    w_list, b_list = [], []
    for ak in aut_keys:
        w, b = _linear_init(ak, rep_dim, rep_dim * num_channels)
        w_list.append(w)
        b_list.append(b)
    w_aut = jnp.stack(w_list, axis=0)        # [n_sizes, D, D*C]
    b_aut = jnp.stack(b_list, axis=0)        # [n_sizes, 1, D*C]
    return dict(rep_dim=rep_dim, num_channels=num_channels,
                cycle_mlp=cycle_mlp, edge_mlp=edge_mlp,
                w_aut=w_aut, b_aut=b_aut)


# ------------------------------ synthetic graph ----------------------------- #

def build_graph(key, n_edges, cycle_counts, cycle_sizes):
    """Deterministic synthetic graph; gather maps as dense 0/1 matrices (bf16-exact)."""
    ks = jax.random.split(key, len(cycle_sizes) + 1)
    e2c_blocks, seg_blocks, row_counts = [], [], []
    for i, (cnt, size) in enumerate(zip(cycle_counts, cycle_sizes)):
        rows = cnt * size
        row_counts.append(rows)
        # edge (0th order) -> cycle (1st order) gather map block
        e2c_blocks.append(
            jax.random.bernoulli(ks[i], 0.25, (rows, n_edges)).astype(jnp.float32))
        # row -> cycle membership block (factored form of the per-cycle sum linmap)
        seg_blocks.append(jnp.kron(jnp.eye(cnt, dtype=jnp.float32),
                                   jnp.ones((size, 1), jnp.float32)))
    offsets, off = [], 0
    for rc in row_counts:
        offsets.append(off)
        off += rc
    total = off
    e2c = jnp.concatenate(e2c_blocks, axis=0)                            # [R, E]
    segb = jax.scipy.linalg.block_diag(*seg_blocks)                      # [R, NC]
    # cycle (1st order) -> edge (0th order) gather-sum map
    c2e = jax.random.bernoulli(ks[-1], 0.25, (n_edges, total)).astype(jnp.float32)
    return dict(cycle_sizes=tuple(cycle_sizes), e2c=e2c, segb=segb, c2e=c2e,
                row_offsets=tuple(offsets), row_counts=tuple(row_counts),
                n_cycles=int(sum(cycle_counts)))


# ----------------------------------- main ------------------------------------ #

if __name__ == "__main__":
    rep_dim = 32
    num_channels = 4
    cycle_sizes = [4, 8]
    cycle_counts = [4, 2]          # 4 cycles of size 4, 2 cycles of size 8 -> 32 rows
    n_edges = 16
    # gather_overlap = 2 is encoded in the synthetic gather matrices.

    key = jax.random.PRNGKey(0)
    kg, kp, ke, kc = jax.random.split(key, 4)

    graph = build_graph(kg, n_edges, cycle_counts, cycle_sizes)
    params = init_edge_cycle(kp, rep_dim, num_channels, cycle_sizes)

    n_cycle_rows = sum(c * s for c, s in zip(cycle_counts, cycle_sizes))
    edge_rep = jax.random.normal(ke, (n_edges, rep_dim), jnp.float32)
    cycle_rep = jax.random.normal(kc, (n_cycle_rows, rep_dim), jnp.float32)

    fwd = jax.jit(functools.partial(edge_cycle_forward, params, graph))
    edge_out, cycle_out = fwd(edge_rep, cycle_rep)
    jax.block_until_ready((edge_out, cycle_out))

    assert edge_out.shape == (n_edges, rep_dim)
    assert cycle_out.shape == (n_cycle_rows, rep_dim)
    assert bool(jnp.all(jnp.isfinite(edge_out))) and bool(jnp.all(jnp.isfinite(cycle_out)))
    print("KERNEL_OK")
</pallas_src>

<mosaic_0001>
module attributes {stable_mosaic.version = 11 : i64} {
  func.func @_fused_edge_cycle_kernel(%arg0: memref<16x256xf32, #tpu.memory_space<vmem>>, %arg1: memref<32x256xf32, #tpu.memory_space<vmem>>, %arg2: memref<32x16xbf16, #tpu.memory_space<vmem>>, %arg3: memref<16x32xbf16, #tpu.memory_space<vmem>>, %arg4: memref<16x6xbf16, #tpu.memory_space<vmem>>, %arg5: memref<32x6xbf16, #tpu.memory_space<vmem>>, %arg6: memref<6x32xbf16, #tpu.memory_space<vmem>>, %arg7: memref<2x256x256xbf16, #tpu.memory_space<vmem>>, %arg8: memref<1536x256xbf16, #tpu.memory_space<vmem>>, %arg9: memref<1024x256xbf16, #tpu.memory_space<vmem>>, %arg10: memref<17x256xf32, #tpu.memory_space<vmem>>, %arg11: memref<16x256xf32, #tpu.memory_space<vmem>>, %arg12: memref<32x256xf32, #tpu.memory_space<vmem>>) attributes {dimension_semantics = [], scalar_prefetch = 0 : i64, scratch_operands = 0 : i64, tpu.core_type = #tpu.core_type<tc>} {
    %c0 = arith.constant 0 : index
    %c0_0 = arith.constant 0 : index
    %0 = vector.load %arg0[%c0, %c0_0] : memref<16x256xf32, #tpu.memory_space<vmem>>, vector<16x256xf32>
    %c0_1 = arith.constant 0 : index
    %c0_2 = arith.constant 0 : index
    %1 = vector.load %arg1[%c0_1, %c0_2] : memref<32x256xf32, #tpu.memory_space<vmem>>, vector<32x256xf32>
    %c0_3 = arith.constant 0 : index
    %c0_4 = arith.constant 0 : index
    %2 = vector.load %arg2[%c0_3, %c0_4] : memref<32x16xbf16, #tpu.memory_space<vmem>>, vector<32x16xbf16>
    %3 = arith.truncf %0 : vector<16x256xf32> to vector<16x256xbf16>
    %cst = arith.constant dense<0.000000e+00> : vector<32x256xf32>
    %4 = tpu.matmul %2, %3, %cst {dimension_numbers = #tpu.dot_dimension_numbers<[1], [0], [0], [1], [0, 0, 1, 1], [], []>} : vector<32x16xbf16>, vector<16x256xbf16>, vector<32x256xf32> -> vector<32x256xf32>
    %5 = arith.truncf %4 : vector<32x256xf32> to vector<32x256xbf16>
    %6 = tpu.iota {dimensions = array<i32: 0>} : vector<32x1xi32>
    %cst_5 = arith.constant 0.000000e+00 : f32
    %7 = vector.broadcast %cst_5 : f32 to vector<32x256xf32>
    %c0_6 = arith.constant 0 : index
    %c0_7 = arith.constant 0 : index
    %c0_8 = arith.constant 0 : index
    %8 = vector.load %arg7[%c0_6, %c0_7, %c0_8] : memref<2x256x256xbf16, #tpu.memory_space<vmem>>, vector<1x256x256xbf16>
    %9 = vector.shape_cast %8 : vector<1x256x256xbf16> to vector<256x256xbf16>
    %cst_9 = arith.constant dense<0.000000e+00> : vector<32x256xf32>
    %10 = tpu.matmul %5, %9, %cst_9 {dimension_numbers = #tpu.dot_dimension_numbers<[1], [0], [0], [1], [0, 0, 1, 1], [], []>} : vector<32x256xbf16>, vector<256x256xbf16>, vector<32x256xf32> -> vector<32x256xf32>
    %c0_10 = arith.constant 0 : index
    %c0_11 = arith.constant 0 : index
    %11 = vector.load %arg10[%c0_10, %c0_11] : memref<17x256xf32, #tpu.memory_space<vmem>>, vector<1x256xf32>
    %12 = vector.broadcast %11 : vector<1x256xf32> to vector<32x256xf32>
    %13 = arith.addf %10, %12 : vector<32x256xf32>
    %c0_i32 = arith.constant 0 : i32
    %14 = vector.broadcast %c0_i32 : i32 to vector<32x1xi32>
    %15 = arith.cmpi sge, %6, %14 : vector<32x1xi32>
    %c16_i32 = arith.constant 16 : i32
    %16 = vector.broadcast %c16_i32 : i32 to vector<32x1xi32>
    %17 = arith.cmpi slt, %6, %16 : vector<32x1xi32>
    %18 = arith.andi %15, %17 : vector<32x1xi1>
    %19 = vector.shape_cast %18 : vector<32x1xi1> to vector<32x1xi1>
    %20 = vector.broadcast %19 : vector<32x1xi1> to vector<32x256xi1>
    %21 = arith.select %20, %13, %7 : vector<32x256xi1>, vector<32x256xf32>
    %c1 = arith.constant 1 : index
    %c0_12 = arith.constant 0 : index
    %c0_13 = arith.constant 0 : index
    %22 = vector.load %arg7[%c1, %c0_12, %c0_13] : memref<2x256x256xbf16, #tpu.memory_space<vmem>>, vector<1x256x256xbf16>
    %23 = vector.shape_cast %22 : vector<1x256x256xbf16> to vector<256x256xbf16>
    %cst_14 = arith.constant dense<0.000000e+00> : vector<32x256xf32>
    %24 = tpu.matmul %5, %23, %cst_14 {dimension_numbers = #tpu.dot_dimension_numbers<[1], [0], [0], [1], [0, 0, 1, 1], [], []>} : vector<32x256xbf16>, vector<256x256xbf16>, vector<32x256xf32> -> vector<32x256xf32>
    %c1_15 = arith.constant 1 : index
    %c0_16 = arith.constant 0 : index
    %25 = vector.load %arg10[%c1_15, %c0_16] : memref<17x256xf32, #tpu.memory_space<vmem>>, vector<1x256xf32>
    %26 = vector.broadcast %25 : vector<1x256xf32> to vector<32x256xf32>
    %27 = arith.addf %24, %26 : vector<32x256xf32>
    %c16_i32_17 = arith.constant 16 : i32
    %28 = vector.broadcast %c16_i32_17 : i32 to vector<32x1xi32>
    %29 = arith.cmpi sge, %6, %28 : vector<32x1xi32>
    %c32_i32 = arith.constant 32 : i32
    %30 = vector.broadcast %c32_i32 : i32 to vector<32x1xi32>
    %31 = arith.cmpi slt, %6, %30 : vector<32x1xi32>
    %32 = arith.andi %29, %31 : vector<32x1xi1>
    %33 = vector.shape_cast %32 : vector<32x1xi1> to vector<32x1xi1>
    %34 = vector.broadcast %33 : vector<32x1xi1> to vector<32x256xi1>
    %35 = arith.select %34, %27, %21 : vector<32x256xi1>, vector<32x256xf32>
    %c0_18 = arith.constant 0 : index
    %c0_19 = arith.constant 0 : index
    %36 = vector.load %arg6[%c0_18, %c0_19] : memref<6x32xbf16, #tpu.memory_space<vmem>>, vector<6x32xbf16>
    %cst_20 = arith.constant dense<0.000000e+00> : vector<6x256xf32>
    %37 = tpu.matmul %36, %5, %cst_20 {dimension_numbers = #tpu.dot_dimension_numbers<[1], [0], [0], [1], [0, 0, 1, 1], [], []>} : vector<6x32xbf16>, vector<32x256xbf16>, vector<6x256xf32> -> vector<6x256xf32>
    %c0_21 = arith.constant 0 : index
    %c0_22 = arith.constant 0 : index
    %38 = vector.load %arg5[%c0_21, %c0_22] : memref<32x6xbf16, #tpu.memory_space<vmem>>, vector<32x6xbf16>
    %39 = arith.truncf %37 : vector<6x256xf32> to vector<6x256xbf16>
    %cst_23 = arith.constant dense<0.000000e+00> : vector<32x256xf32>
    %40 = tpu.matmul %38, %39, %cst_23 {dimension_numbers = #tpu.dot_dimension_numbers<[1], [0], [0], [1], [0, 0, 1, 1], [], []>} : vector<32x6xbf16>, vector<6x256xbf16>, vector<32x256xf32> -> vector<32x256xf32>
    %41 = tpu.concatenate %1, %35, %40, %4 in 1 : vector<32x256xf32>, vector<32x256xf32>, vector<32x256xf32>, vector<32x256xf32> -> vector<32x1024xf32>
    %c0_24 = arith.constant 0 : index
    %c0_25 = arith.constant 0 : index
    %42 = vector.load %arg8[%c0_24, %c0_25] : memref<1536x256xbf16, #tpu.memory_space<vmem>>, vector<1024x256xbf16>
    %c2 = arith.constant 2 : index
    %c0_26 = arith.constant 0 : index
    %43 = vector.load %arg10[%c2, %c0_26] : memref<17x256xf32, #tpu.memory_space<vmem>>, vector<1x256xf32>
    %c3 = arith.constant 3 : index
    %c0_27 = arith.constant 0 : index
    %44 = vector.load %arg10[%c3, %c0_27] : memref<17x256xf32, #tpu.memory_space<vmem>>, vector<1x256xf32>
    %c4 = arith.constant 4 : index
    %c0_28 = arith.constant 0 : index
    %45 = vector.load %arg10[%c4, %c0_28] : memref<17x256xf32, #tpu.memory_space<vmem>>, vector<1x256xf32>
    %46 = arith.truncf %41 : vector<32x1024xf32> to vector<32x1024xbf16>
    %cst_29 = arith.constant dense<0.000000e+00> : vector<32x256xf32>
    %47 = tpu.matmul %46, %42, %cst_29 {dimension_numbers = #tpu.dot_dimension_numbers<[1], [0], [0], [1], [0, 0, 1, 1], [], []>} : vector<32x1024xbf16>, vector<1024x256xbf16>, vector<32x256xf32> -> vector<32x256xf32>
    %48 = vector.broadcast %43 : vector<1x256xf32> to vector<32x256xf32>
    %49 = arith.addf %47, %48 : vector<32x256xf32>
    %cst_30 = arith.constant dense<0.000000e+00> : vector<256xf32>
    %50 = vector.multi_reduction <add>, %49, %cst_30 [0] : vector<32x256xf32> to vector<256xf32>
    %51 = vector.shape_cast %50 : vector<256xf32> to vector<1x256xf32>
    %cst_31 = arith.constant 3.200000e+01 : f32
    %52 = vector.broadcast %cst_31 : f32 to vector<1x256xf32>
    %53 = arith.divf %51, %52 : vector<1x256xf32>
    %54 = vector.broadcast %53 : vector<1x256xf32> to vector<32x256xf32>
    %55 = arith.subf %49, %54 : vector<32x256xf32>
    %56 = arith.mulf %55, %55 : vector<32x256xf32>
    %cst_32 = arith.constant dense<0.000000e+00> : vector<256xf32>
    %57 = vector.multi_reduction <add>, %56, %cst_32 [0] : vector<32x256xf32> to vector<256xf32>
    %58 = vector.shape_cast %57 : vector<256xf32> to vector<1x256xf32>
    %cst_33 = arith.constant 3.200000e+01 : f32
    %59 = vector.broadcast %cst_33 : f32 to vector<1x256xf32>
    %60 = arith.divf %58, %59 : vector<1x256xf32>
    %61 = vector.broadcast %53 : vector<1x256xf32> to vector<32x256xf32>
    %62 = arith.subf %49, %61 : vector<32x256xf32>
    %63 = vector.broadcast %44 : vector<1x256xf32> to vector<32x256xf32>
    %64 = arith.mulf %63, %62 : vector<32x256xf32>
    %cst_34 = arith.constant 9.99999974E-6 : f32
    %65 = vector.broadcast %cst_34 : f32 to vector<1x256xf32>
    %66 = arith.addf %60, %65 : vector<1x256xf32>
    %67 = math.rsqrt %66 : vector<1x256xf32>
    %68 = vector.broadcast %67 : vector<1x256xf32> to vector<32x256xf32>
    %69 = arith.mulf %64, %68 : vector<32x256xf32>
    %70 = vector.broadcast %45 : vector<1x256xf32> to vector<32x256xf32>
    %71 = arith.addf %69, %70 : vector<32x256xf32>
    %cst_35 = arith.constant 0.000000e+00 : f32
    %72 = vector.broadcast %cst_35 : f32 to vector<32x256xf32>
    %73 = arith.maximumf %71, %72 : vector<32x256xf32>
    %c1024 = arith.constant 1024 : index
    %c0_36 = arith.constant 0 : index
    %74 = vector.load %arg8[%c1024, %c0_36] : memref<1536x256xbf16, #tpu.memory_space<vmem>>, vector<256x256xbf16>
    %c5 = arith.constant 5 : index
    %c0_37 = arith.constant 0 : index
    %75 = vector.load %arg10[%c5, %c0_37] : memref<17x256xf32, #tpu.memory_space<vmem>>, vector<1x256xf32>
    %c6 = arith.constant 6 : index
    %c0_38 = arith.constant 0 : index
    %76 = vector.load %arg10[%c6, %c0_38] : memref<17x256xf32, #tpu.memory_space<vmem>>, vector<1x256xf32>
    %c7 = arith.constant 7 : index
    %c0_39 = arith.constant 0 : index
    %77 = vector.load %arg10[%c7, %c0_39] : memref<17x256xf32, #tpu.memory_space<vmem>>, vector<1x256xf32>
    %78 = arith.truncf %73 : vector<32x256xf32> to vector<32x256xbf16>
    %cst_40 = arith.constant dense<0.000000e+00> : vector<32x256xf32>
    %79 = tpu.matmul %78, %74, %cst_40 {dimension_numbers = #tpu.dot_dimension_numbers<[1], [0], [0], [1], [0, 0, 1, 1], [], []>} : vector<32x256xbf16>, vector<256x256xbf16>, vector<32x256xf32> -> vector<32x256xf32>
    %80 = vector.broadcast %75 : vector<1x256xf32> to vector<32x256xf32>
    %81 = arith.addf %79, %80 : vector<32x256xf32>
    %cst_41 = arith.constant dense<0.000000e+00> : vector<256xf32>
    %82 = vector.multi_reduction <add>, %81, %cst_41 [0] : vector<32x256xf32> to vector<256xf32>
    %83 = vector.shape_cast %82 : vector<256xf32> to vector<1x256xf32>
    %cst_42 = arith.constant 3.200000e+01 : f32
    %84 = vector.broadcast %cst_42 : f32 to vector<1x256xf32>
    %85 = arith.divf %83, %84 : vector<1x256xf32>
    %86 = vector.broadcast %85 : vector<1x256xf32> to vector<32x256xf32>
    %87 = arith.subf %81, %86 : vector<32x256xf32>
    %88 = arith.mulf %87, %87 : vector<32x256xf32>
    %cst_43 = arith.constant dense<0.000000e+00> : vector<256xf32>
    %89 = vector.multi_reduction <add>, %88, %cst_43 [0] : vector<32x256xf32> to vector<256xf32>
    %90 = vector.shape_cast %89 : vector<256xf32> to vector<1x256xf32>
    %cst_44 = arith.constant 3.200000e+01 : f32
    %91 = vector.broadcast %cst_44 : f32 to vector<1x256xf32>
    %92 = arith.divf %90, %91 : vector<1x256xf32>
    %93 = vector.broadcast %85 : vector<1x256xf32> to vector<32x256xf32>
    %94 = arith.subf %81, %93 : vector<32x256xf32>
    %95 = vector.broadcast %76 : vector<1x256xf32> to vector<32x256xf32>
    %96 = arith.mulf %95, %94 : vector<32x256xf32>
    %cst_45 = arith.constant 9.99999974E-6 : f32
    %97 = vector.broadcast %cst_45 : f32 to vector<1x256xf32>
    %98 = arith.addf %92, %97 : vector<1x256xf32>
    %99 = math.rsqrt %98 : vector<1x256xf32>
    %100 = vector.broadcast %99 : vector<1x256xf32> to vector<32x256xf32>
    %101 = arith.mulf %96, %100 : vector<32x256xf32>
    %102 = vector.broadcast %77 : vector<1x256xf32> to vector<32x256xf32>
    %103 = arith.addf %101, %102 : vector<32x256xf32>
    %cst_46 = arith.constant 0.000000e+00 : f32
    %104 = vector.broadcast %cst_46 : f32 to vector<32x256xf32>
    %105 = arith.maximumf %103, %104 : vector<32x256xf32>
    %c1280 = arith.constant 1280 : index
    %c0_47 = arith.constant 0 : index
    %106 = vector.load %arg8[%c1280, %c0_47] : memref<1536x256xbf16, #tpu.memory_space<vmem>>, vector<256x256xbf16>
    %c8 = arith.constant 8 : index
    %c0_48 = arith.constant 0 : index
    %107 = vector.load %arg10[%c8, %c0_48] : memref<17x256xf32, #tpu.memory_space<vmem>>, vector<1x256xf32>
    %c9 = arith.constant 9 : index
    %c0_49 = arith.constant 0 : index
    %108 = vector.load %arg10[%c9, %c0_49] : memref<17x256xf32, #tpu.memory_space<vmem>>, vector<1x256xf32>
    %c10 = arith.constant 10 : index
    %c0_50 = arith.constant 0 : index
    %109 = vector.load %arg10[%c10, %c0_50] : memref<17x256xf32, #tpu.memory_space<vmem>>, vector<1x256xf32>
    %110 = arith.truncf %105 : vector<32x256xf32> to vector<32x256xbf16>
    %cst_51 = arith.constant dense<0.000000e+00> : vector<32x256xf32>
    %111 = tpu.matmul %110, %106, %cst_51 {dimension_numbers = #tpu.dot_dimension_numbers<[1], [0], [0], [1], [0, 0, 1, 1], [], []>} : vector<32x256xbf16>, vector<256x256xbf16>, vector<32x256xf32> -> vector<32x256xf32>
    %112 = vector.broadcast %107 : vector<1x256xf32> to vector<32x256xf32>
    %113 = arith.addf %111, %112 : vector<32x256xf32>
    %cst_52 = arith.constant dense<0.000000e+00> : vector<256xf32>
    %114 = vector.multi_reduction <add>, %113, %cst_52 [0] : vector<32x256xf32> to vector<256xf32>
    %115 = vector.shape_cast %114 : vector<256xf32> to vector<1x256xf32>
    %cst_53 = arith.constant 3.200000e+01 : f32
    %116 = vector.broadcast %cst_53 : f32 to vector<1x256xf32>
    %117 = arith.divf %115, %116 : vector<1x256xf32>
    %118 = vector.broadcast %117 : vector<1x256xf32> to vector<32x256xf32>
    %119 = arith.subf %113, %118 : vector<32x256xf32>
    %120 = arith.mulf %119, %119 : vector<32x256xf32>
    %cst_54 = arith.constant dense<0.000000e+00> : vector<256xf32>
    %121 = vector.multi_reduction <add>, %120, %cst_54 [0] : vector<32x256xf32> to vector<256xf32>
    %122 = vector.shape_cast %121 : vector<256xf32> to vector<1x256xf32>
    %cst_55 = arith.constant 3.200000e+01 : f32
    %123 = vector.broadcast %cst_55 : f32 to vector<1x256xf32>
    %124 = arith.divf %122, %123 : vector<1x256xf32>
    %125 = vector.broadcast %117 : vector<1x256xf32> to vector<32x256xf32>
    %126 = arith.subf %113, %125 : vector<32x256xf32>
    %127 = vector.broadcast %108 : vector<1x256xf32> to vector<32x256xf32>
    %128 = arith.mulf %127, %126 : vector<32x256xf32>
    %cst_56 = arith.constant 9.99999974E-6 : f32
    %129 = vector.broadcast %cst_56 : f32 to vector<1x256xf32>
    %130 = arith.addf %124, %129 : vector<1x256xf32>
    %131 = math.rsqrt %130 : vector<1x256xf32>
    %132 = vector.broadcast %131 : vector<1x256xf32> to vector<32x256xf32>
    %133 = arith.mulf %128, %132 : vector<32x256xf32>
    %134 = vector.broadcast %109 : vector<1x256xf32> to vector<32x256xf32>
    %135 = arith.addf %133, %134 : vector<32x256xf32>
    %cst_57 = arith.constant 0.000000e+00 : f32
    %136 = vector.broadcast %cst_57 : f32 to vector<32x256xf32>
    %137 = arith.maximumf %135, %136 : vector<32x256xf32>
    %c0_58 = arith.constant 0 : index
    %c0_59 = arith.constant 0 : index
    %138 = vector.load %arg12[%c0_58, %c0_59] : memref<32x256xf32, #tpu.memory_space<vmem>>, vector<32x256xf32>
    tpu.vector_store %arg12[%c0_58, %c0_59], %137 {strides = array<i32>} : memref<32x256xf32, #tpu.memory_space<vmem>>, vector<32x256xf32>,
    %139 = arith.truncf %137 : vector<32x256xf32> to vector<32x256xbf16>
    %c0_60 = arith.constant 0 : index
    %c0_61 = arith.constant 0 : index
    %140 = vector.load %arg6[%c0_60, %c0_61] : memref<6x32xbf16, #tpu.memory_space<vmem>>, vector<6x32xbf16>
    %cst_62 = arith.constant dense<0.000000e+00> : vector<6x256xf32>
    %141 = tpu.matmul %140, %139, %cst_62 {dimension_numbers = #tpu.dot_dimension_numbers<[1], [0], [0], [1], [0, 0, 1, 1], [], []>} : vector<6x32xbf16>, vector<32x256xbf16>, vector<6x256xf32> -> vector<6x256xf32>
    %c0_63 = arith.constant 0 : index
    %c0_64 = arith.constant 0 : index
    %142 = vector.load %arg4[%c0_63, %c0_64] : memref<16x6xbf16, #tpu.memory_space<vmem>>, vector<16x6xbf16>
    %143 = arith.truncf %141 : vector<6x256xf32> to vector<6x256xbf16>
    %cst_65 = arith.constant dense<0.000000e+00> : vector<16x256xf32>
    %144 = tpu.matmul %142, %143, %cst_65 {dimension_numbers = #tpu.dot_dimension_numbers<[1], [0], [0], [1], [0, 0, 1, 1], [], []>} : vector<16x6xbf16>, vector<6x256xbf16>, vector<16x256xf32> -> vector<16x256xf32>
    %c0_66 = arith.constant 0 : index
    %c0_67 = arith.constant 0 : index
    %145 = vector.load %arg3[%c0_66, %c0_67] : memref<16x32xbf16, #tpu.memory_space<vmem>>, vector<16x32xbf16>
    %cst_68 = arith.constant dense<0.000000e+00> : vector<16x256xf32>
    %146 = tpu.matmul %145, %139, %cst_68 {dimension_numbers = #tpu.dot_dimension_numbers<[1], [0], [0], [1], [0, 0, 1, 1], [], []>} : vector<16x32xbf16>, vector<32x256xbf16>, vector<16x256xf32> -> vector<16x256xf32>
    %147 = tpu.concatenate %0, %144, %146 in 1 : vector<16x256xf32>, vector<16x256xf32>, vector<16x256xf32> -> vector<16x768xf32>
    %c0_69 = arith.constant 0 : index
    %c0_70 = arith.constant 0 : index
    %148 = vector.load %arg9[%c0_69, %c0_70] : memref<1024x256xbf16, #tpu.memory_space<vmem>>, vector<768x256xbf16>
    %c11 = arith.constant 11 : index
    %c0_71 = arith.constant 0 : index
    %149 = vector.load %arg10[%c11, %c0_71] : memref<17x256xf32, #tpu.memory_space<vmem>>, vector<1x256xf32>
    %c12 = arith.constant 12 : index
    %c0_72 = arith.constant 0 : index
    %150 = vector.load %arg10[%c12, %c0_72] : memref<17x256xf32, #tpu.memory_space<vmem>>, vector<1x256xf32>
    %c13 = arith.constant 13 : index
    %c0_73 = arith.constant 0 : index
    %151 = vector.load %arg10[%c13, %c0_73] : memref<17x256xf32, #tpu.memory_space<vmem>>, vector<1x256xf32>
    %152 = arith.truncf %147 : vector<16x768xf32> to vector<16x768xbf16>
    %cst_74 = arith.constant dense<0.000000e+00> : vector<16x256xf32>
    %153 = tpu.matmul %152, %148, %cst_74 {dimension_numbers = #tpu.dot_dimension_numbers<[1], [0], [0], [1], [0, 0, 1, 1], [], []>} : vector<16x768xbf16>, vector<768x256xbf16>, vector<16x256xf32> -> vector<16x256xf32>
    %154 = vector.broadcast %149 : vector<1x256xf32> to vector<16x256xf32>
    %155 = arith.addf %153, %154 : vector<16x256xf32>
    %cst_75 = arith.constant dense<0.000000e+00> : vector<256xf32>
    %156 = vector.multi_reduction <add>, %155, %cst_75 [0] : vector<16x256xf32> to vector<256xf32>
    %157 = vector.shape_cast %156 : vector<256xf32> to vector<1x256xf32>
    %cst_76 = arith.constant 1.600000e+01 : f32
    %158 = vector.broadcast %cst_76 : f32 to vector<1x256xf32>
    %159 = arith.divf %157, %158 : vector<1x256xf32>
    %160 = vector.broadcast %159 : vector<1x256xf32> to vector<16x256xf32>
    %161 = arith.subf %155, %160 : vector<16x256xf32>
    %162 = arith.mulf %161, %161 : vector<16x256xf32>
    %cst_77 = arith.constant dense<0.000000e+00> : vector<256xf32>
    %163 = vector.multi_reduction <add>, %162, %cst_77 [0] : vector<16x256xf32> to vector<256xf32>
    %164 = vector.shape_cast %163 : vector<256xf32> to vector<1x256xf32>
    %cst_78 = arith.constant 1.600000e+01 : f32
    %165 = vector.broadcast %cst_78 : f32 to vector<1x256xf32>
    %166 = arith.divf %164, %165 : vector<1x256xf32>
    %167 = vector.broadcast %159 : vector<1x256xf32> to vector<16x256xf32>
    %168 = arith.subf %155, %167 : vector<16x256xf32>
    %169 = vector.broadcast %150 : vector<1x256xf32> to vector<16x256xf32>
    %170 = arith.mulf %169, %168 : vector<16x256xf32>
    %cst_79 = arith.constant 9.99999974E-6 : f32
    %171 = vector.broadcast %cst_79 : f32 to vector<1x256xf32>
    %172 = arith.addf %166, %171 : vector<1x256xf32>
    %173 = math.rsqrt %172 : vector<1x256xf32>
    %174 = vector.broadcast %173 : vector<1x256xf32> to vector<16x256xf32>
    %175 = arith.mulf %170, %174 : vector<16x256xf32>
    %176 = vector.broadcast %151 : vector<1x256xf32> to vector<16x256xf32>
    %177 = arith.addf %175, %176 : vector<16x256xf32>
    %cst_80 = arith.constant 0.000000e+00 : f32
    %178 = vector.broadcast %cst_80 : f32 to vector<16x256xf32>
    %179 = arith.maximumf %177, %178 : vector<16x256xf32>
    %c768 = arith.constant 768 : index
    %c0_81 = arith.constant 0 : index
    %180 = vector.load %arg9[%c768, %c0_81] : memref<1024x256xbf16, #tpu.memory_space<vmem>>, vector<256x256xbf16>
    %c14 = arith.constant 14 : index
    %c0_82 = arith.constant 0 : index
    %181 = vector.load %arg10[%c14, %c0_82] : memref<17x256xf32, #tpu.memory_space<vmem>>, vector<1x256xf32>
    %c15 = arith.constant 15 : index
    %c0_83 = arith.constant 0 : index
    %182 = vector.load %arg10[%c15, %c0_83] : memref<17x256xf32, #tpu.memory_space<vmem>>, vector<1x256xf32>
    %c16 = arith.constant 16 : index
    %c0_84 = arith.constant 0 : index
    %183 = vector.load %arg10[%c16, %c0_84] : memref<17x256xf32, #tpu.memory_space<vmem>>, vector<1x256xf32>
    %184 = arith.truncf %179 : vector<16x256xf32> to vector<16x256xbf16>
    %cst_85 = arith.constant dense<0.000000e+00> : vector<16x256xf32>
    %185 = tpu.matmul %184, %180, %cst_85 {dimension_numbers = #tpu.dot_dimension_numbers<[1], [0], [0], [1], [0, 0, 1, 1], [], []>} : vector<16x256xbf16>, vector<256x256xbf16>, vector<16x256xf32> -> vector<16x256xf32>
    %186 = vector.broadcast %181 : vector<1x256xf32> to vector<16x256xf32>
    %187 = arith.addf %185, %186 : vector<16x256xf32>
    %cst_86 = arith.constant dense<0.000000e+00> : vector<256xf32>
    %188 = vector.multi_reduction <add>, %187, %cst_86 [0] : vector<16x256xf32> to vector<256xf32>
    %189 = vector.shape_cast %188 : vector<256xf32> to vector<1x256xf32>
    %cst_87 = arith.constant 1.600000e+01 : f32
    %190 = vector.broadcast %cst_87 : f32 to vector<1x256xf32>
    %191 = arith.divf %189, %190 : vector<1x256xf32>
    %192 = vector.broadcast %191 : vector<1x256xf32> to vector<16x256xf32>
    %193 = arith.subf %187, %192 : vector<16x256xf32>
    %194 = arith.mulf %193, %193 : vector<16x256xf32>
    %cst_88 = arith.constant dense<0.000000e+00> : vector<256xf32>
    %195 = vector.multi_reduction <add>, %194, %cst_88 [0] : vector<16x256xf32> to vector<256xf32>
    %196 = vector.shape_cast %195 : vector<256xf32> to vector<1x256xf32>
    %cst_89 = arith.constant 1.600000e+01 : f32
    %197 = vector.broadcast %cst_89 : f32 to vector<1x256xf32>
    %198 = arith.divf %196, %197 : vector<1x256xf32>
    %199 = vector.broadcast %191 : vector<1x256xf32> to vector<16x256xf32>
    %200 = arith.subf %187, %199 : vector<16x256xf32>
    %201 = vector.broadcast %182 : vector<1x256xf32> to vector<16x256xf32>
    %202 = arith.mulf %201, %200 : vector<16x256xf32>
    %cst_90 = arith.constant 9.99999974E-6 : f32
    %203 = vector.broadcast %cst_90 : f32 to vector<1x256xf32>
    %204 = arith.addf %198, %203 : vector<1x256xf32>
    %205 = math.rsqrt %204 : vector<1x256xf32>
    %206 = vector.broadcast %205 : vector<1x256xf32> to vector<16x256xf32>
    %207 = arith.mulf %202, %206 : vector<16x256xf32>
    %208 = vector.broadcast %183 : vector<1x256xf32> to vector<16x256xf32>
    %209 = arith.addf %207, %208 : vector<16x256xf32>
    %cst_91 = arith.constant 0.000000e+00 : f32
    %210 = vector.broadcast %cst_91 : f32 to vector<16x256xf32>
    %211 = arith.maximumf %209, %210 : vector<16x256xf32>
    %c0_92 = arith.constant 0 : index
    %c0_93 = arith.constant 0 : index
    %212 = vector.load %arg11[%c0_92, %c0_93] : memref<16x256xf32, #tpu.memory_space<vmem>>, vector<16x256xf32>
    tpu.vector_store %arg11[%c0_92, %c0_93], %211 {strides = array<i32>} : memref<16x256xf32, #tpu.memory_space<vmem>>, vector<16x256xf32>,
    return
  }
}

</mosaic_0001>

<llo_original>
// kernel: squeeze.1
$region0: #{squeeze.1}
  #allocation0 [shape = 's32[1]{0}', space=sflag, size = 0x4, scoped, tag = 'scoped memory for squeeze.1']
  %s0 = inlined_call_operand.<no memory space> [shape: f32[], index: 0, kind: input, shape index: {}]
  %s1 = inlined_call_operand.vmem [shape: f32[128], index: 1, kind: output, shape index: {}]
  %v2 = vstv %s0
  %3 = vst [vmem:[%s1] sm:$0x1] %v2

// kernel: edge_cycle_forward.1
$region0: #{edge_cycle_forward.1}
  #allocation0 [shape = 'u32[]', space=smem, size = 0x4, offset = 0x4, fixed_abs, tag = 'smem constant byte address 0x4 - core index']
  #allocation1 [shape = 'u32[144,128]{1,0:T(1,128)}', space=vmem, size = 0x12000, scoped, tag = 'internal scratch']
  %s0 = inlined_call_operand.vmem [shape: f32[16,256], index: 0, kind: input, shape index: {}]
  %s1 = inlined_call_operand.vmem [shape: f32[32,256], index: 1, kind: input, shape index: {}]
  %s2 = inlined_call_operand.vmem [shape: bf16[32,16], index: 2, kind: input, shape index: {}]
  %s3 = inlined_call_operand.vmem [shape: bf16[16,32], index: 3, kind: input, shape index: {}]
  %s4 = inlined_call_operand.vmem [shape: bf16[16,6], index: 4, kind: input, shape index: {}]
  %s5 = inlined_call_operand.vmem [shape: bf16[32,6], index: 5, kind: input, shape index: {}]
  %s6 = inlined_call_operand.vmem [shape: bf16[6,32], index: 6, kind: input, shape index: {}]
  %s7 = inlined_call_operand.vmem [shape: bf16[2,256,256], index: 7, kind: input, shape index: {}]
  %s8 = inlined_call_operand.vmem [shape: bf16[1536,256], index: 8, kind: input, shape index: {}]
  %s9 = inlined_call_operand.vmem [shape: bf16[1024,256], index: 9, kind: input, shape index: {}]
  %s10 = inlined_call_operand.vmem [shape: f32[17,256], index: 10, kind: input, shape index: {}]
  %s11 = inlined_call_operand.vmem [shape: f32[16,256], index: 11, kind: output, shape index: {0}]
  %s12 = inlined_call_operand.vmem [shape: f32[32,256], index: 12, kind: output, shape index: {1}]
  %13 = xla_tuple %s11, %s12
  %s14 = sld [smem:[#allocation0]]
  $region62: #{edge_cycle_forward.1} parent=0
    _
  %s16 = ssub.s32 1, %s14
  %s17 = scalar_select 0, %s16, %s14
  // Predicated region
  $region2: #{edge_cycle_forward.1} parent=0 // pred_check
    _
  $region3: #{edge_cycle_forward.1} parent=0 // pred_check_branch
    %19 = sbr.rel (0) target = $region5
  $region4: #{edge_cycle_forward.1} parent=0 // pred_region
    _
  $region5: #{edge_cycle_forward.1} parent=0 // pred_fallthru
    _
  // Predicated region
  $region6: #{edge_cycle_forward.1} parent=0 // pred_check
    _
  $region7: #{edge_cycle_forward.1} parent=0 // pred_check_branch
    %21 = sbr.rel (0) target = $region9
  $region8: #{edge_cycle_forward.1} parent=0 // pred_region
    _
  $region9: #{edge_cycle_forward.1} parent=0 // pred_fallthru
    _
  // Predicated region
  $region10: #{edge_cycle_forward.1} parent=0 // pred_check
    _
  $region11: #{edge_cycle_forward.1} parent=0 // pred_check_branch
    %23 = sbr.rel (0) target = $region13
  $region12: #{edge_cycle_forward.1} parent=0 // pred_region
    _
  $region13: #{edge_cycle_forward.1} parent=0 // pred_fallthru
    _
  // Predicated region
  $region14: #{edge_cycle_forward.1} parent=0 // pred_check
    _
  $region15: #{edge_cycle_forward.1} parent=0 // pred_check_branch
    %25 = sbr.rel (0) target = $region17
  $region16: #{edge_cycle_forward.1} parent=0 // pred_region
    _
  $region17: #{edge_cycle_forward.1} parent=0 // pred_fallthru
    _
  // Predicated region
  $region18: #{edge_cycle_forward.1} parent=0 // pred_check
    _
  $region19: #{edge_cycle_forward.1} parent=0 // pred_check_branch
    %27 = sbr.rel (0) target = $region21
  $region20: #{edge_cycle_forward.1} parent=0 // pred_region
    _
  $region21: #{edge_cycle_forward.1} parent=0 // pred_fallthru
    _
  // Predicated region
  $region22: #{edge_cycle_forward.1} parent=0 // pred_check
    _
  $region23: #{edge_cycle_forward.1} parent=0 // pred_check_branch
    %29 = sbr.rel (0) target = $region25
  $region24: #{edge_cycle_forward.1} parent=0 // pred_region
    _
  $region25: #{edge_cycle_forward.1} parent=0 // pred_fallthru
    _
  // Predicated region
  $region26: #{edge_cycle_forward.1} parent=0 // pred_check
    _
  $region27: #{edge_cycle_forward.1} parent=0 // pred_check_branch
    %31 = sbr.rel (0) target = $region29
  $region28: #{edge_cycle_forward.1} parent=0 // pred_region
    _
  $region29: #{edge_cycle_forward.1} parent=0 // pred_fallthru
    _
  // Predicated region
  $region30: #{edge_cycle_forward.1} parent=0 // pred_check
    _
  $region31: #{edge_cycle_forward.1} parent=0 // pred_check_branch
    %33 = sbr.rel (0) target = $region33
  $region32: #{edge_cycle_forward.1} parent=0 // pred_region
    _
  $region33: #{edge_cycle_forward.1} parent=0 // pred_fallthru
    _
  // Predicated region
  $region34: #{edge_cycle_forward.1} parent=0 // pred_check
    _
  $region35: #{edge_cycle_forward.1} parent=0 // pred_check_branch
    %35 = sbr.rel (0) target = $region37
  $region36: #{edge_cycle_forward.1} parent=0 // pred_region
    _
  $region37: #{edge_cycle_forward.1} parent=0 // pred_fallthru
    _
  // Predicated region
  $region38: #{edge_cycle_forward.1} parent=0 // pred_check
    _
  $region39: #{edge_cycle_forward.1} parent=0 // pred_check_branch
    %37 = sbr.rel (0) target = $region41
  $region40: #{edge_cycle_forward.1} parent=0 // pred_region
    _
  $region41: #{edge_cycle_forward.1} parent=0 // pred_fallthru
    _
  // Predicated region
  $region42: #{edge_cycle_forward.1} parent=0 // pred_check
    _
  $region43: #{edge_cycle_forward.1} parent=0 // pred_check_branch
    %39 = sbr.rel (0) target = $region45
  $region44: #{edge_cycle_forward.1} parent=0 // pred_region
    _
  $region45: #{edge_cycle_forward.1} parent=0 // pred_fallthru
    _
  %v41 = vld [vmem:[%s0] sm:$0xff]
  %v42 = vld [vmem:[%s0 + $0x8] sm:$0xff]
  %v43 = vld [vmem:[%s0 + $0x10] sm:$0xff]
  %v44 = vld [vmem:[%s0 + $0x18] sm:$0xff]
  %v45 = vld [vmem:[%s1] sm:$0xff]
  %v46 = vld [vmem:[%s1 + $0x8] sm:$0xff]
  %v47 = vld [vmem:[%s1 + $0x10] sm:$0xff]
  %v48 = vld [vmem:[%s1 + $0x18] sm:$0xff]
  %v49 = vld [vmem:[%s1 + $0x20] sm:$0xff]
  %v50 = vld [vmem:[%s1 + $0x28] sm:$0xff]
  %v51 = vld [vmem:[%s1 + $0x30] sm:$0xff]
  %v52 = vld [vmem:[%s1 + $0x38] sm:$0xff]
  %v53 = vld [vmem:[%s2] sm:$0xf]
  %v54 = vld [vmem:[%s2 + $0x4] sm:$0xf]
  %v55 = vld [vmem:[%s2 + $0x8] sm:$0xf]
  %v56 = vld [vmem:[%s2 + $0xc] sm:$0xf]
  %v57 = vpack.c.bf16 %v43, %v41
  %v58 = vpack.c.bf16 %v44, %v42
  %v63 = vunpack.c.l.b16 %v53
  %v64 = vunpack.c.l.b16 %v54
  %v65 = vunpack.c.l.b16 %v55
  %v66 = vunpack.c.l.b16 %v56
  %v67 = vpack.c.b16 %v64, %v63
  %v68 = vpack.c.b16 %v66, %v65
  %vm69 = vcmask 130048
  %v71 = vsel %vm69, %v67, 0
  %v74 = vsel %vm69, %v68, 0
  %76 = vmatprep.subr.bf16.mxu0 %v58
  %77 = vmatpush1.bf16.msra.mxu0 %v57
  %78 = vmatprep.subr.bf16.mxu0 0
  %79 = vmatpush1.bf16.msra.mxu0 0
  %80 = vmatprep.subr.bf16.mxu0 0
  %81 = vmatpush1.bf16.msra.mxu0 0
  %82 = vmatprep.subr.bf16.mxu0 0
  %83 = vmatpush1.bf16.msra.mxu0 0
  %84 = vmatprep.subr.bf16.mxu0 0
  %85 = vmatpush1.bf16.msra.mxu0 0
  %86 = vmatprep.subr.bf16.mxu0 0
  %87 = vmatpush1.bf16.msra.mxu0 0
  %88 = vmatprep.subr.bf16.mxu0 0
  %89 = vmatpush1.bf16.msra.mxu0 0
  %90 = vmatprep.subr.bf16.mxu0 0
  %91 = vmatpush1.bf16.msra.mxu0 0
  %92 = vmatprep.subr.bf16.mxu0 0
  %93 = vmatpush1.bf16.msra.mxu0 0
  %94 = vmatprep.subr.bf16.mxu0 0
  %95 = vmatpush1.bf16.msra.mxu0 0
  %96 = vmatprep.subr.bf16.mxu0 0
  %97 = vmatpush1.bf16.msra.mxu0 0
  %98 = vmatprep.subr.bf16.mxu0 0
  %99 = vmatpush1.bf16.msra.mxu0 0
  %100 = vmatprep.subr.bf16.mxu0 0
  %101 = vmatpush1.bf16.msra.mxu0 0
  %102 = vmatprep.subr.bf16.mxu0 0
  %103 = vmatpush1.bf16.msra.mxu0 0
  %104 = vmatprep.subr.bf16.mxu0 0
  %105 = vmatpush1.bf16.msra.mxu0 0
  %106 = vmatprep.subr.bf16.mxu0 0
  %107 = vmatpush1.bf16.msra.mxu0 0
  %108 = vmatprep.mubr.bf16.mxu0 0
  %109 = vmatmul.mubr.bf16.gmra.mrb[0].mxu0 %v71
  %v110 = vpop.f32.mrb[0].mxu0
  %v111 = vadd.f32 0.0, %v110
  %v112 = vpop.f32.mrb[0].mxu0
  %v113 = vadd.f32 0.0, %v112
  %v114 = vpop.f32.mrb[0].mxu0
  %v115 = vadd.f32 0.0, %v114
  %v116 = vpop.f32.mrb[0].mxu0
  %v117 = vadd.f32 0.0, %v116
  %118 = vmatprep.mubr.bf16.mxu0 0
  %119 = vmatmul.mubr.bf16.gmra.mrb[0].mxu0 %v74
  %v120 = vpop.f32.mrb[0].mxu0
  %v121 = vadd.f32 0.0, %v120
  %v122 = vpop.f32.mrb[0].mxu0
  %v123 = vadd.f32 0.0, %v122
  %v124 = vpop.f32.mrb[0].mxu0
  %v125 = vadd.f32 0.0, %v124
  %v126 = vpop.f32.mrb[0].mxu0
  %v127 = vadd.f32 0.0, %v126
  %128 = vdwg.mxu0
  %v129 = vpack.c.bf16 %v115, %v111
  %v130 = vpack.c.bf16 %v117, %v113
  %v131 = vpack.c.bf16 %v125, %v121
  %v132 = vpack.c.bf16 %v127, %v123
  %v133 = vlaneseq
  %v134 = vshrl.u32 %v133, 7
  %v135 = vadd.s32 %v134, 8
  %v136 = vadd.s32 %v134, 16
  %v137 = vadd.s32 %v134, 24
  %v138 = vld [vmem:[%s7] sm:$0xff]
  %v139 = vld [vmem:[%s7 + $0x8] sm:$0xff]
  %v140 = vld [vmem:[%s7 + $0x10] sm:$0xff]
  %v141 = vld [vmem:[%s7 + $0x18] sm:$0xff]
  %v142 = vld [vmem:[%s7 + $0x20] sm:$0xff]
  %v143 = vld [vmem:[%s7 + $0x28] sm:$0xff]
  %v144 = vld [vmem:[%s7 + $0x30] sm:$0xff]
  %v145 = vld [vmem:[%s7 + $0x38] sm:$0xff]
  %v146 = vld [vmem:[%s7 + $0x40] sm:$0xff]
  %v147 = vld [vmem:[%s7 + $0x48] sm:$0xff]
  %v148 = vld [vmem:[%s7 + $0x50] sm:$0xff]
  %v149 = vld [vmem:[%s7 + $0x58] sm:$0xff]
  %v150 = vld [vmem:[%s7 + $0x60] sm:$0xff]
  %v151 = vld [vmem:[%s7 + $0x68] sm:$0xff]
  %v152 = vld [vmem:[%s7 + $0x70] sm:$0xff]
  %v153 = vld [vmem:[%s7 + $0x78] sm:$0xff]
  %v154 = vld [vmem:[%s7 + $0x80] sm:$0xff]
  %v155 = vld [vmem:[%s7 + $0x88] sm:$0xff]
  %v156 = vld [vmem:[%s7 + $0x90] sm:$0xff]
  %v157 = vld [vmem:[%s7 + $0x98] sm:$0xff]
  %v158 = vld [vmem:[%s7 + $0xa0] sm:$0xff]
  %v159 = vld [vmem:[%s7 + $0xa8] sm:$0xff]
  %v160 = vld [vmem:[%s7 + $0xb0] sm:$0xff]
  %v161 = vld [vmem:[%s7 + $0xb8] sm:$0xff]
  %v162 = vld [vmem:[%s7 + $0xc0] sm:$0xff]
  %v163 = vld [vmem:[%s7 + $0xc8] sm:$0xff]
  %v164 = vld [vmem:[%s7 + $0xd0] sm:$0xff]
  %v165 = vld [vmem:[%s7 + $0xd8] sm:$0xff]
  %v166 = vld [vmem:[%s7 + $0xe0] sm:$0xff]
  %v167 = vld [vmem:[%s7 + $0xe8] sm:$0xff]
  %v168 = vld [vmem:[%s7 + $0xf0] sm:$0xff]
  %v169 = vld [vmem:[%s7 + $0xf8] sm:$0xff]
  %v170 = vld [vmem:[%s10] ss:$8 sm:$0x3]
  %v172 = vlaneseq
  %v173 = vshrl.u32 %v172, 7
  %v174 = vsub.s32 0, %v173
  %v175 = vrot.slane %v170, %v174
  %v176 = vlaneseq
  %v177 = vshrl.u32 %v176, 7
  %v178 = vsub.s32 1, %v177
  %v179 = vrot.slane %v170, %v178
  %v214 = vunpack.c.l.b16 %v138
  %v215 = vunpack.c.h.b16 %v138
  %v216 = vunpack.c.l.b16 %v139
  %v217 = vunpack.c.h.b16 %v139
  %v218 = vunpack.c.l.b16 %v140
  %v219 = vunpack.c.h.b16 %v140
  %v220 = vunpack.c.l.b16 %v141
  %v221 = vunpack.c.h.b16 %v141
  %v222 = vunpack.c.l.b16 %v142
  %v223 = vunpack.c.h.b16 %v142
  %v224 = vunpack.c.l.b16 %v143
  %v225 = vunpack.c.h.b16 %v143
  %v226 = vunpack.c.l.b16 %v144
  %v227 = vunpack.c.h.b16 %v144
  %v228 = vunpack.c.l.b16 %v145
  %v229 = vunpack.c.h.b16 %v145
  %v230 = vunpack.c.l.b16 %v146
  %v231 = vunpack.c.h.b16 %v146
  %v232 = vunpack.c.l.b16 %v147
  %v233 = vunpack.c.h.b16 %v147
  %v234 = vunpack.c.l.b16 %v148
  %v235 = vunpack.c.h.b16 %v148
  %v236 = vunpack.c.l.b16 %v149
  %v237 = vunpack.c.h.b16 %v149
  %v238 = vunpack.c.l.b16 %v150
  %v239 = vunpack.c.h.b16 %v150
  %v240 = vunpack.c.l.b16 %v151
  %v241 = vunpack.c.h.b16 %v151
  %v242 = vunpack.c.l.b16 %v152
  %v243 = vunpack.c.h.b16 %v152
  %v244 = vunpack.c.l.b16 %v153
  %v245 = vunpack.c.h.b16 %v153
  %v246 = vunpack.c.l.b16 %v154
  %v247 = vunpack.c.h.b16 %v154
  %v248 = vunpack.c.l.b16 %v155
  %v249 = vunpack.c.h.b16 %v155
  %v250 = vunpack.c.l.b16 %v156
  %v251 = vunpack.c.h.b16 %v156
  %v252 = vunpack.c.l.b16 %v157
  %v253 = vunpack.c.h.b16 %v157
  %v254 = vunpack.c.l.b16 %v158
  %v255 = vunpack.c.h.b16 %v158
  %v256 = vunpack.c.l.b16 %v159
  %v257 = vunpack.c.h.b16 %v159
  %v258 = vunpack.c.l.b16 %v160
  %v259 = vunpack.c.h.b16 %v160
  %v260 = vunpack.c.l.b16 %v161
  %v261 = vunpack.c.h.b16 %v161
  %v262 = vunpack.c.l.b16 %v162
  %v263 = vunpack.c.h.b16 %v162
  %v264 = vunpack.c.l.b16 %v163
  %v265 = vunpack.c.h.b16 %v163
  %v266 = vunpack.c.l.b16 %v164
  %v267 = vunpack.c.h.b16 %v164
  %v268 = vunpack.c.l.b16 %v165
  %v269 = vunpack.c.h.b16 %v165
  %v270 = vunpack.c.l.b16 %v166
  %v271 = vunpack.c.h.b16 %v166
  %v272 = vunpack.c.l.b16 %v167
  %v273 = vunpack.c.h.b16 %v167
  %v274 = vunpack.c.l.b16 %v168
  %v275 = vunpack.c.h.b16 %v168
  %v276 = vunpack.c.l.b16 %v169
  %v277 = vunpack.c.h.b16 %v169
  %v278 = vpack.c.b16 %v216, %v214
  %v279 = vpack.c.b16 %v217, %v215
  %v280 = vpack.c.b16 %v220, %v218
  %v281 = vpack.c.b16 %v221, %v219
  %v282 = vpack.c.b16 %v224, %v222
  %v283 = vpack.c.b16 %v225, %v223
  %v284 = vpack.c.b16 %v228, %v226
  %v285 = vpack.c.b16 %v229, %v227
  %v286 = vpack.c.b16 %v232, %v230
  %v287 = vpack.c.b16 %v233, %v231
  %v288 = vpack.c.b16 %v236, %v234
  %v289 = vpack.c.b16 %v237, %v235
  %v290 = vpack.c.b16 %v240, %v238
  %v291 = vpack.c.b16 %v241, %v239
  %v292 = vpack.c.b16 %v244, %v242
  %v293 = vpack.c.b16 %v245, %v243
  %v294 = vpack.c.b16 %v248, %v246
  %v295 = vpack.c.b16 %v249, %v247
  %v296 = vpack.c.b16 %v252, %v250
  %v297 = vpack.c.b16 %v253, %v251
  %v298 = vpack.c.b16 %v256, %v254
  %v299 = vpack.c.b16 %v257, %v255
  %v300 = vpack.c.b16 %v260, %v258
  %v301 = vpack.c.b16 %v261, %v259
  %v302 = vpack.c.b16 %v264, %v262
  %v303 = vpack.c.b16 %v265, %v263
  %v304 = vpack.c.b16 %v268, %v266
  %v305 = vpack.c.b16 %v269, %v267
  %v306 = vpack.c.b16 %v272, %v270
  %v307 = vpack.c.b16 %v273, %v271
  %v308 = vpack.c.b16 %v276, %v274
  %v309 = vpack.c.b16 %v277, %v275
  %342 = vmatprep.subr.bf16.mxu0 %v279
  %343 = vmatpush1.bf16.msra.mxu0 %v278
  %344 = vmatprep.subr.bf16.mxu0 %v281
  %345 = vmatpush1.bf16.msra.mxu0 %v280
  %346 = vmatprep.subr.bf16.mxu0 %v283
  %347 = vmatpush1.bf16.msra.mxu0 %v282
  %348 = vmatprep.subr.bf16.mxu0 %v285
  %349 = vmatpush1.bf16.msra.mxu0 %v284
  %350 = vmatprep.subr.bf16.mxu0 %v287
  %351 = vmatpush1.bf16.msra.mxu0 %v286
  %352 = vmatprep.subr.bf16.mxu0 %v289
  %353 = vmatpush1.bf16.msra.mxu0 %v288
  %354 = vmatprep.subr.bf16.mxu0 %v291
  %355 = vmatpush1.bf16.msra.mxu0 %v290
  %356 = vmatprep.subr.bf16.mxu0 %v293
  %357 = vmatpush1.bf16.msra.mxu0 %v292
  %358 = vmatprep.subr.bf16.mxu0 %v295
  %359 = vmatpush1.bf16.msra.mxu0 %v294
  %360 = vmatprep.subr.bf16.mxu0 %v297
  %361 = vmatpush1.bf16.msra.mxu0 %v296
  %362 = vmatprep.subr.bf16.mxu0 %v299
  %363 = vmatpush1.bf16.msra.mxu0 %v298
  %364 = vmatprep.subr.bf16.mxu0 %v301
  %365 = vmatpush1.bf16.msra.mxu0 %v300
  %366 = vmatprep.subr.bf16.mxu0 %v303
  %367 = vmatpush1.bf16.msra.mxu0 %v302
  %368 = vmatprep.subr.bf16.mxu0 %v305
  %369 = vmatpush1.bf16.msra.mxu0 %v304
  %370 = vmatprep.subr.bf16.mxu0 %v307
  %371 = vmatpush1.bf16.msra.mxu0 %v306
  %372 = vmatprep.subr.bf16.mxu0 %v309
  %373 = vmatpush1.bf16.msra.mxu0 %v308
  %374 = vmatprep.mubr.bf16.mxu0 %v130
  %375 = vmatmul.mubr.bf16.gmra.mrb[0].mxu0 %v129
  %v376 = vpop.f32.mrb[0].mxu0
  %v377 = vadd.f32 %v175, %v376
  %v378 = vpop.f32.mrb[0].mxu0
  %v379 = vadd.f32 %v179, %v378
  %v380 = vpop.f32.mrb[0].mxu0
  %v381 = vadd.f32 %v175, %v380
  %v382 = vpop.f32.mrb[0].mxu0
  %v383 = vadd.f32 %v179, %v382
  %384 = vmatprep.mubr.bf16.mxu0 %v132
  %385 = vmatmul.mubr.bf16.gmra.mrb[0].mxu0 %v131
  %v386 = vpop.f32.mrb[0].mxu0
  %v387 = vadd.f32 %v175, %v386
  %v388 = vpop.f32.mrb[0].mxu0
  %v389 = vadd.f32 %v179, %v388
  %v390 = vpop.f32.mrb[0].mxu0
  %v391 = vadd.f32 %v175, %v390
  %v392 = vpop.f32.mrb[0].mxu0
  %v393 = vadd.f32 %v179, %v392
  %394 = vdwg.mxu0
  %vm395 = vcmp.ge.s32.totalorder %v134, 0
  %vm396 = vcmp.ge.s32.totalorder %v135, 0
  %vm397 = vcmp.ge.s32.totalorder %v136, 0
  %vm398 = vcmp.ge.s32.totalorder %v137, 0
  %vm399 = vcmp.lt.s32.totalorder %v134, 16
  %vm400 = vcmp.lt.s32.totalorder %v135, 16
  %vm401 = vcmp.lt.s32.totalorder %v136, 16
  %vm402 = vcmp.lt.s32.totalorder %v137, 16
  %vm403 = vmand %vm395, %vm399
  %vm404 = vmand %vm396, %vm400
  %vm405 = vmand %vm397, %vm401
  %vm406 = vmand %vm398, %vm402
  %v407 = vsel %vm403, 1, 0
  %v408 = vsel %vm404, 1, 0
  %v409 = vsel %vm405, 1, 0
  %v410 = vsel %vm406, 1, 0
  %vm411 = vcmp.eq.s32.totalorder %v407, 1
  %vm412 = vcmp.eq.s32.totalorder %v408, 1
  %vm413 = vcmp.eq.s32.totalorder %v409, 1
  %vm414 = vcmp.eq.s32.totalorder %v410, 1
  %v415 = vsel %vm411, %v377, 0.0
  %v416 = vsel %vm411, %v379, 0.0
  %v417 = vsel %vm412, %v381, 0.0
  %v418 = vsel %vm412, %v383, 0.0
  %v419 = vsel %vm413, %v387, 0.0
  %v420 = vsel %vm413, %v389, 0.0
  %v421 = vsel %vm414, %v391, 0.0
  %v422 = vsel %vm414, %v393, 0.0
  %s423 = scalar_lea.vmem %s7, 256
  %v424 = vld [vmem:[%s423] sm:$0xff]
  %v425 = vld [vmem:[%s423 + $0x8] sm:$0xff]
  %v426 = vld [vmem:[%s423 + $0x10] sm:$0xff]
  %v427 = vld [vmem:[%s423 + $0x18] sm:$0xff]
  %v428 = vld [vmem:[%s423 + $0x20] sm:$0xff]
  %v429 = vld [vmem:[%s423 + $0x28] sm:$0xff]
  %v430 = vld [vmem:[%s423 + $0x30] sm:$0xff]
  %v431 = vld [vmem:[%s423 + $0x38] sm:$0xff]
  %v432 = vld [vmem:[%s423 + $0x40] sm:$0xff]
  %v433 = vld [vmem:[%s423 + $0x48] sm:$0xff]
  %v434 = vld [vmem:[%s423 + $0x50] sm:$0xff]
  %v435 = vld [vmem:[%s423 + $0x58] sm:$0xff]
  %v436 = vld [vmem:[%s423 + $0x60] sm:$0xff]
  %v437 = vld [vmem:[%s423 + $0x68] sm:$0xff]
  %v438 = vld [vmem:[%s423 + $0x70] sm:$0xff]
  %v439 = vld [vmem:[%s423 + $0x78] sm:$0xff]
  %v440 = vld [vmem:[%s423 + $0x80] sm:$0xff]
  %v441 = vld [vmem:[%s423 + $0x88] sm:$0xff]
  %v442 = vld [vmem:[%s423 + $0x90] sm:$0xff]
  %v443 = vld [vmem:[%s423 + $0x98] sm:$0xff]
  %v444 = vld [vmem:[%s423 + $0xa0] sm:$0xff]
  %v445 = vld [vmem:[%s423 + $0xa8] sm:$0xff]
  %v446 = vld [vmem:[%s423 + $0xb0] sm:$0xff]
  %v447 = vld [vmem:[%s423 + $0xb8] sm:$0xff]
  %v448 = vld [vmem:[%s423 + $0xc0] sm:$0xff]
  %v449 = vld [vmem:[%s423 + $0xc8] sm:$0xff]
  %v450 = vld [vmem:[%s423 + $0xd0] sm:$0xff]
  %v451 = vld [vmem:[%s423 + $0xd8] sm:$0xff]
  %v452 = vld [vmem:[%s423 + $0xe0] sm:$0xff]
  %v453 = vld [vmem:[%s423 + $0xe8] sm:$0xff]
  %v454 = vld [vmem:[%s423 + $0xf0] sm:$0xff]
  %v455 = vld [vmem:[%s423 + $0xf8] sm:$0xff]
  %s456 = scalar_lea.vmem %s10, 1
  %v457 = vld [vmem:[%s456] ss:$8 sm:$0x3]
  %v459 = vlaneseq
  %v460 = vshrl.u32 %v459, 7
  %v461 = vsub.s32 0, %v460
  %v462 = vrot.slane %v457, %v461
  %v463 = vlaneseq
  %v464 = vshrl.u32 %v463, 7
  %v465 = vsub.s32 1, %v464
  %v466 = vrot.slane %v457, %v465
  %v501 = vunpack.c.l.b16 %v424
  %v502 = vunpack.c.h.b16 %v424
  %v503 = vunpack.c.l.b16 %v425
  %v504 = vunpack.c.h.b16 %v425
  %v505 = vunpack.c.l.b16 %v426
  %v506 = vunpack.c.h.b16 %v426
  %v507 = vunpack.c.l.b16 %v427
  %v508 = vunpack.c.h.b16 %v427
  %v509 = vunpack.c.l.b16 %v428
  %v510 = vunpack.c.h.b16 %v428
  %v511 = vunpack.c.l.b16 %v429
  %v512 = vunpack.c.h.b16 %v429
  %v513 = vunpack.c.l.b16 %v430
  %v514 = vunpack.c.h.b16 %v430
  %v515 = vunpack.c.l.b16 %v431
  %v516 = vunpack.c.h.b16 %v431
  %v517 = vunpack.c.l.b16 %v432
  %v518 = vunpack.c.h.b16 %v432
  %v519 = vunpack.c.l.b16 %v433
  %v520 = vunpack.c.h.b16 %v433
  %v521 = vunpack.c.l.b16 %v434
  %v522 = vunpack.c.h.b16 %v434
  %v523 = vunpack.c.l.b16 %v435
  %v524 = vunpack.c.h.b16 %v435
  %v525 = vunpack.c.l.b16 %v436
  %v526 = vunpack.c.h.b16 %v436
  %v527 = vunpack.c.l.b16 %v437
  %v528 = vunpack.c.h.b16 %v437
  %v529 = vunpack.c.l.b16 %v438
  %v530 = vunpack.c.h.b16 %v438
  %v531 = vunpack.c.l.b16 %v439
  %v532 = vunpack.c.h.b16 %v439
  %v533 = vunpack.c.l.b16 %v440
  %v534 = vunpack.c.h.b16 %v440
  %v535 = vunpack.c.l.b16 %v441
  %v536 = vunpack.c.h.b16 %v441
  %v537 = vunpack.c.l.b16 %v442
  %v538 = vunpack.c.h.b16 %v442
  %v539 = vunpack.c.l.b16 %v443
  %v540 = vunpack.c.h.b16 %v443
  %v541 = vunpack.c.l.b16 %v444
  %v542 = vunpack.c.h.b16 %v444
  %v543 = vunpack.c.l.b16 %v445
  %v544 = vunpack.c.h.b16 %v445
  %v545 = vunpack.c.l.b16 %v446
  %v546 = vunpack.c.h.b16 %v446
  %v547 = vunpack.c.l.b16 %v447
  %v548 = vunpack.c.h.b16 %v447
  %v549 = vunpack.c.l.b16 %v448
  %v550 = vunpack.c.h.b16 %v448
  %v551 = vunpack.c.l.b16 %v449
  %v552 = vunpack.c.h.b16 %v449
  %v553 = vunpack.c.l.b16 %v450
  %v554 = vunpack.c.h.b16 %v450
  %v555 = vunpack.c.l.b16 %v451
  %v556 = vunpack.c.h.b16 %v451
  %v557 = vunpack.c.l.b16 %v452
  %v558 = vunpack.c.h.b16 %v452
  %v559 = vunpack.c.l.b16 %v453
  %v560 = vunpack.c.h.b16 %v453
  %v561 = vunpack.c.l.b16 %v454
  %v562 = vunpack.c.h.b16 %v454
  %v563 = vunpack.c.l.b16 %v455
  %v564 = vunpack.c.h.b16 %v455
  %v565 = vpack.c.b16 %v503, %v501
  %v566 = vpack.c.b16 %v504, %v502
  %v567 = vpack.c.b16 %v507, %v505
  %v568 = vpack.c.b16 %v508, %v506
  %v569 = vpack.c.b16 %v511, %v509
  %v570 = vpack.c.b16 %v512, %v510
  %v571 = vpack.c.b16 %v515, %v513
  %v572 = vpack.c.b16 %v516, %v514
  %v573 = vpack.c.b16 %v519, %v517
  %v574 = vpack.c.b16 %v520, %v518
  %v575 = vpack.c.b16 %v523, %v521
  %v576 = vpack.c.b16 %v524, %v522
  %v577 = vpack.c.b16 %v527, %v525
  %v578 = vpack.c.b16 %v528, %v526
  %v579 = vpack.c.b16 %v531, %v529
  %v580 = vpack.c.b16 %v532, %v530
  %v581 = vpack.c.b16 %v535, %v533
  %v582 = vpack.c.b16 %v536, %v534
  %v583 = vpack.c.b16 %v539, %v537
  %v584 = vpack.c.b16 %v540, %v538
  %v585 = vpack.c.b16 %v543, %v541
  %v586 = vpack.c.b16 %v544, %v542
  %v587 = vpack.c.b16 %v547, %v545
  %v588 = vpack.c.b16 %v548, %v546
  %v589 = vpack.c.b16 %v551, %v549
  %v590 = vpack.c.b16 %v552, %v550
  %v591 = vpack.c.b16 %v555, %v553
  %v592 = vpack.c.b16 %v556, %v554
  %v593 = vpack.c.b16 %v559, %v557
  %v594 = vpack.c.b16 %v560, %v558
  %v595 = vpack.c.b16 %v563, %v561
  %v596 = vpack.c.b16 %v564, %v562
  %629 = vmatprep.subr.bf16.mxu0 %v566
  %630 = vmatpush1.bf16.msra.mxu0 %v565
  %631 = vmatprep.subr.bf16.mxu0 %v568
  %632 = vmatpush1.bf16.msra.mxu0 %v567
  %633 = vmatprep.subr.bf16.mxu0 %v570
  %634 = vmatpush1.bf16.msra.mxu0 %v569
  %635 = vmatprep.subr.bf16.mxu0 %v572
  %636 = vmatpush1.bf16.msra.mxu0 %v571
  %637 = vmatprep.subr.bf16.mxu0 %v574
  %638 = vmatpush1.bf16.msra.mxu0 %v573
  %639 = vmatprep.subr.bf16.mxu0 %v576
  %640 = vmatpush1.bf16.msra.mxu0 %v575
  %641 = vmatprep.subr.bf16.mxu0 %v578
  %642 = vmatpush1.bf16.msra.mxu0 %v577
  %643 = vmatprep.subr.bf16.mxu0 %v580
  %644 = vmatpush1.bf16.msra.mxu0 %v579
  %645 = vmatprep.subr.bf16.mxu0 %v582
  %646 = vmatpush1.bf16.msra.mxu0 %v581
  %647 = vmatprep.subr.bf16.mxu0 %v584
  %648 = vmatpush1.bf16.msra.mxu0 %v583
  %649 = vmatprep.subr.bf16.mxu0 %v586
  %650 = vmatpush1.bf16.msra.mxu0 %v585
  %651 = vmatprep.subr.bf16.mxu0 %v588
  %652 = vmatpush1.bf16.msra.mxu0 %v587
  %653 = vmatprep.subr.bf16.mxu0 %v590
  %654 = vmatpush1.bf16.msra.mxu0 %v589
  %655 = vmatprep.subr.bf16.mxu0 %v592
  %656 = vmatpush1.bf16.msra.mxu0 %v591
  %657 = vmatprep.subr.bf16.mxu0 %v594
  %658 = vmatpush1.bf16.msra.mxu0 %v593
  %659 = vmatprep.subr.bf16.mxu0 %v596
  %660 = vmatpush1.bf16.msra.mxu0 %v595
  %661 = vmatprep.mubr.bf16.mxu0 %v130
  %662 = vmatmul.mubr.bf16.gmra.mrb[0].mxu0 %v129
  %v663 = vpop.f32.mrb[0].mxu0
  %v664 = vadd.f32 %v462, %v663
  %v665 = vpop.f32.mrb[0].mxu0
  %v666 = vadd.f32 %v466, %v665
  %v667 = vpop.f32.mrb[0].mxu0
  %v668 = vadd.f32 %v462, %v667
  %v669 = vpop.f32.mrb[0].mxu0
  %v670 = vadd.f32 %v466, %v669
  %671 = vmatprep.mubr.bf16.mxu0 %v132
  %672 = vmatmul.mubr.bf16.gmra.mrb[0].mxu0 %v131
  %v673 = vpop.f32.mrb[0].mxu0
  %v674 = vadd.f32 %v462, %v673
  %v675 = vpop.f32.mrb[0].mxu0
  %v676 = vadd.f32 %v466, %v675
  %v677 = vpop.f32.mrb[0].mxu0
  %v678 = vadd.f32 %v462, %v677
  %v679 = vpop.f32.mrb[0].mxu0
  %v680 = vadd.f32 %v466, %v679
  %681 = vdwg.mxu0
  %vm682 = vcmp.ge.s32.totalorder %v134, 16
  %vm683 = vcmp.ge.s32.totalorder %v135, 16
  %vm684 = vcmp.ge.s32.totalorder %v136, 16
  %vm685 = vcmp.ge.s32.totalorder %v137, 16
  %vm686 = vcmp.lt.s32.totalorder %v134, 32
  %vm687 = vcmp.lt.s32.totalorder %v135, 32
  %vm688 = vcmp.lt.s32.totalorder %v136, 32
  %vm689 = vcmp.lt.s32.totalorder %v137, 32
  %vm690 = vmand %vm682, %vm686
  %vm691 = vmand %vm683, %vm687
  %vm692 = vmand %vm684, %vm688
  %vm693 = vmand %vm685, %vm689
  %v694 = vsel %vm690, 1, 0
  %v695 = vsel %vm691, 1, 0
  %v696 = vsel %vm692, 1, 0
  %v697 = vsel %vm693, 1, 0
  %vm698 = vcmp.eq.s32.totalorder %v694, 1
  %vm699 = vcmp.eq.s32.totalorder %v695, 1
  %vm700 = vcmp.eq.s32.totalorder %v696, 1
  %vm701 = vcmp.eq.s32.totalorder %v697, 1
  %v702 = vsel %vm698, %v664, %v415
  %v703 = vsel %vm698, %v666, %v416
  %v704 = vsel %vm699, %v668, %v417
  %v705 = vsel %vm699, %v670, %v418
  %v706 = vsel %vm700, %v674, %v419
  %v707 = vsel %vm700, %v676, %v420
  %v708 = vsel %vm701, %v678, %v421
  %v709 = vsel %vm701, %v680, %v422
  %v710 = vld [vmem:[%s6] sm:$0x7]
  %vm711 = vcmask 261120
  %v713 = vsel %vm711, %v710, 0
  %715 = vmatprep.subr.bf16.mxu0 %v130
  %716 = vmatpush1.bf16.msra.mxu0 %v129
  %717 = vmatprep.subr.bf16.mxu0 %v132
  %718 = vmatpush1.bf16.msra.mxu0 %v131
  %719 = vmatprep.subr.bf16.mxu0 0
  %720 = vmatpush1.bf16.msra.mxu0 0
  %721 = vmatprep.subr.bf16.mxu0 0
  %722 = vmatpush1.bf16.msra.mxu0 0
  %723 = vmatprep.subr.bf16.mxu0 0
  %724 = vmatpush1.bf16.msra.mxu0 0
  %725 = vmatprep.subr.bf16.mxu0 0
  %726 = vmatpush1.bf16.msra.mxu0 0
  %727 = vmatprep.subr.bf16.mxu0 0
  %728 = vmatpush1.bf16.msra.mxu0 0
  %729 = vmatprep.subr.bf16.mxu0 0
  %730 = vmatpush1.bf16.msra.mxu0 0
  %731 = vmatprep.subr.bf16.mxu0 0
  %732 = vmatpush1.bf16.msra.mxu0 0
  %733 = vmatprep.subr.bf16.mxu0 0
  %734 = vmatpush1.bf16.msra.mxu0 0
  %735 = vmatprep.subr.bf16.mxu0 0
  %736 = vmatpush1.bf16.msra.mxu0 0
  %737 = vmatprep.subr.bf16.mxu0 0
  %738 = vmatpush1.bf16.msra.mxu0 0
  %739 = vmatprep.subr.bf16.mxu0 0
  %740 = vmatpush1.bf16.msra.mxu0 0
  %741 = vmatprep.subr.bf16.mxu0 0
  %742 = vmatpush1.bf16.msra.mxu0 0
  %743 = vmatprep.subr.bf16.mxu0 0
  %744 = vmatpush1.bf16.msra.mxu0 0
  %745 = vmatprep.subr.bf16.mxu0 0
  %746 = vmatpush1.bf16.msra.mxu0 0
  %747 = vmatprep.mubr.bf16.mxu0 0
  %748 = vmatmul.mubr.bf16.gmra.mrb[0].mxu0 %v713
  %v749 = vpop.f32.mrb[0].mxu0
  %v750 = vadd.f32 0.0, %v749
  %v751 = vpop.f32.mrb[0].mxu0
  %v752 = vadd.f32 0.0, %v751
  %v753 = vpop.f32.mrb[0].mxu0
  %v754 = vpop.f32.mrb[0].mxu0
  %755 = vdwg.mxu0
  %v756 = vld [vmem:[%s5] sm:$0xf]
  %v757 = vld [vmem:[%s5 + $0x4] sm:$0xf]
  %v758 = vld [vmem:[%s5 + $0x8] sm:$0xf]
  %v759 = vld [vmem:[%s5 + $0xc] sm:$0xf]
  %v760 = vpack.c.bf16 %v750, %v750
  %v761 = vpack.c.bf16 %v752, %v752
  %v766 = vunpack.c.l.b16 %v756
  %v767 = vunpack.c.l.b16 %v757
  %v768 = vunpack.c.l.b16 %v758
  %v769 = vunpack.c.l.b16 %v759
  %v770 = vpack.c.b16 %v767, %v766
  %v771 = vpack.c.b16 %v769, %v768
  %vm772 = vcmask 48128
  %v774 = vsel %vm772, %v770, 0
  %v777 = vsel %vm772, %v771, 0
  %vm779 = vcmask 1042432
  %v781 = vsel %vm779, %v760, 0
  %v784 = vsel %vm779, %v761, 0
  %786 = vmatprep.subr.bf16.mxu0 %v784
  %787 = vmatpush1.bf16.msra.mxu0 %v781
  %788 = vmatprep.subr.bf16.mxu0 0
  %789 = vmatpush1.bf16.msra.mxu0 0
  %790 = vmatprep.subr.bf16.mxu0 0
  %791 = vmatpush1.bf16.msra.mxu0 0
  %792 = vmatprep.subr.bf16.mxu0 0
  %793 = vmatpush1.bf16.msra.mxu0 0
  %794 = vmatprep.subr.bf16.mxu0 0
  %795 = vmatpush1.bf16.msra.mxu0 0
  %796 = vmatprep.subr.bf16.mxu0 0
  %797 = vmatpush1.bf16.msra.mxu0 0
  %798 = vmatprep.subr.bf16.mxu0 0
  %799 = vmatpush1.bf16.msra.mxu0 0
  %800 = vmatprep.subr.bf16.mxu0 0
  %801 = vmatpush1.bf16.msra.mxu0 0
  %802 = vmatprep.subr.bf16.mxu0 0
  %803 = vmatpush1.bf16.msra.mxu0 0
  %804 = vmatprep.subr.bf16.mxu0 0
  %805 = vmatpush1.bf16.msra.mxu0 0
  %806 = vmatprep.subr.bf16.mxu0 0
  %807 = vmatpush1.bf16.msra.mxu0 0
  %808 = vmatprep.subr.bf16.mxu0 0
  %809 = vmatpush1.bf16.msra.mxu0 0
  %810 = vmatprep.subr.bf16.mxu0 0
  %811 = vmatpush1.bf16.msra.mxu0 0
  %812 = vmatprep.subr.bf16.mxu0 0
  %813 = vmatpush1.bf16.msra.mxu0 0
  %814 = vmatprep.subr.bf16.mxu0 0
  %815 = vmatpush1.bf16.msra.mxu0 0
  %816 = vmatprep.subr.bf16.mxu0 0
  %817 = vmatpush1.bf16.msra.mxu0 0
  %818 = vmatprep.mubr.bf16.mxu0 0
  %819 = vmatmul.mubr.bf16.gmra.mrb[0].mxu0 %v774
  %v820 = vpop.f32.mrb[0].mxu0
  %v821 = vadd.f32 0.0, %v820
  %v822 = vpop.f32.mrb[0].mxu0
  %v823 = vadd.f32 0.0, %v822
  %v824 = vpop.f32.mrb[0].mxu0
  %v825 = vadd.f32 0.0, %v824
  %v826 = vpop.f32.mrb[0].mxu0
  %v827 = vadd.f32 0.0, %v826
  %828 = vmatprep.mubr.bf16.mxu0 0
  %829 = vmatmul.mubr.bf16.gmra.mrb[0].mxu0 %v777
  %v830 = vpop.f32.mrb[0].mxu0
  %v831 = vadd.f32 0.0, %v830
  %v832 = vpop.f32.mrb[0].mxu0
  %v833 = vadd.f32 0.0, %v832
  %v834 = vpop.f32.mrb[0].mxu0
  %v835 = vadd.f32 0.0, %v834
  %v836 = vpop.f32.mrb[0].mxu0
  %v837 = vadd.f32 0.0, %v836
  %838 = vdwg.mxu0
  %v839 = vld [vmem:[%s8] sm:$0xff]
  %v840 = vld [vmem:[%s8 + $0x8] sm:$0xff]
  %v841 = vld [vmem:[%s8 + $0x10] sm:$0xff]
  %v842 = vld [vmem:[%s8 + $0x18] sm:$0xff]
  %v843 = vld [vmem:[%s8 + $0x20] sm:$0xff]
  %v844 = vld [vmem:[%s8 + $0x28] sm:$0xff]
  %v845 = vld [vmem:[%s8 + $0x30] sm:$0xff]
  %v846 = vld [vmem:[%s8 + $0x38] sm:$0xff]
  %v847 = vld [vmem:[%s8 + $0x40] sm:$0xff]
  %v848 = vld [vmem:[%s8 + $0x48] sm:$0xff]
  %v849 = vld [vmem:[%s8 + $0x50] sm:$0xff]
  %v850 = vld [vmem:[%s8 + $0x58] sm:$0xff]
  %v851 = vld [vmem:[%s8 + $0x60] sm:$0xff]
  %v852 = vld [vmem:[%s8 + $0x68] sm:$0xff]
  %v853 = vld [vmem:[%s8 + $0x70] sm:$0xff]
  %v854 = vld [vmem:[%s8 + $0x78] sm:$0xff]
  %v855 = vld [vmem:[%s8 + $0x80] sm:$0xff]
  %v856 = vld [vmem:[%s8 + $0x88] sm:$0xff]
  %v857 = vld [vmem:[%s8 + $0x90] sm:$0xff]
  %v858 = vld [vmem:[%s8 + $0x98] sm:$0xff]
  %v859 = vld [vmem:[%s8 + $0xa0] sm:$0xff]
  %v860 = vld [vmem:[%s8 + $0xa8] sm:$0xff]
  %v861 = vld [vmem:[%s8 + $0xb0] sm:$0xff]
  %v862 = vld [vmem:[%s8 + $0xb8] sm:$0xff]
  %v863 = vld [vmem:[%s8 + $0xc0] sm:$0xff]
  %v864 = vld [vmem:[%s8 + $0xc8] sm:$0xff]
  %v865 = vld [vmem:[%s8 + $0xd0] sm:$0xff]
  %v866 = vld [vmem:[%s8 + $0xd8] sm:$0xff]
  %v867 = vld [vmem:[%s8 + $0xe0] sm:$0xff]
  %v868 = vld [vmem:[%s8 + $0xe8] sm:$0xff]
  %v869 = vld [vmem:[%s8 + $0xf0] sm:$0xff]
  %v870 = vld [vmem:[%s8 + $0xf8] sm:$0xff]
  %v871 = vld [vmem:[%s8 + $0x100] sm:$0xff]
  %v872 = vld [vmem:[%s8 + $0x108] sm:$0xff]
  %v873 = vld [vmem:[%s8 + $0x110] sm:$0xff]
  %v874 = vld [vmem:[%s8 + $0x118] sm:$0xff]
  %v875 = vld [vmem:[%s8 + $0x120] sm:$0xff]
  %v876 = vld [vmem:[%s8 + $0x128] sm:$0xff]
  %v877 = vld [vmem:[%s8 + $0x130] sm:$0xff]
  %v878 = vld [vmem:[%s8 + $0x138] sm:$0xff]
  %v879 = vld [vmem:[%s8 + $0x140] sm:$0xff]
  %v880 = vld [vmem:[%s8 + $0x148] sm:$0xff]
  %v881 = vld [vmem:[%s8 + $0x150] sm:$0xff]
  %v882 = vld [vmem:[%s8 + $0x158] sm:$0xff]
  %v883 = vld [vmem:[%s8 + $0x160] sm:$0xff]
  %v884 = vld [vmem:[%s8 + $0x168] sm:$0xff]
  %v885 = vld [vmem:[%s8 + $0x170] sm:$0xff]
  %v886 = vld [vmem:[%s8 + $0x178] sm:$0xff]
  %v887 = vld [vmem:[%s8 + $0x180] sm:$0xff]
  %v888 = vld [vmem:[%s8 + $0x188] sm:$0xff]
  %v889 = vld [vmem:[%s8 + $0x190] sm:$0xff]
  %v890 = vld [vmem:[%s8 + $0x198] sm:$0xff]
  %v891 = vld [vmem:[%s8 + $0x1a0] sm:$0xff]
  %v892 = vld [vmem:[%s8 + $0x1a8] sm:$0xff]
  %v893 = vld [vmem:[%s8 + $0x1b0] sm:$0xff]
  %v894 = vld [vmem:[%s8 + $0x1b8] sm:$0xff]
  %v895 = vld [vmem:[%s8 + $0x1c0] sm:$0xff]
  %v896 = vld [vmem:[%s8 + $0x1c8] sm:$0xff]
  %v897 = vld [vmem:[%s8 + $0x1d0] sm:$0xff]
  %v898 = vld [vmem:[%s8 + $0x1d8] sm:$0xff]
  %v899 = vld [vmem:[%s8 + $0x1e0] sm:$0xff]
  %v900 = vld [vmem:[%s8 + $0x1e8] sm:$0xff]
  %v901 = vld [vmem:[%s8 + $0x1f0] sm:$0xff]
  %v902 = vld [vmem:[%s8 + $0x1f8] sm:$0xff]
  %v903 = vld [vmem:[%s8 + $0x200] sm:$0xff]
  %v904 = vld [vmem:[%s8 + $0x208] sm:$0xff]
  %v905 = vld [vmem:[%s8 + $0x210] sm:$0xff]
  %v906 = vld [vmem:[%s8 + $0x218] sm:$0xff]
  %v907 = vld [vmem:[%s8 + $0x220] sm:$0xff]
  %v908 = vld [vmem:[%s8 + $0x228] sm:$0xff]
  %v909 = vld [vmem:[%s8 + $0x230] sm:$0xff]
  %v910 = vld [vmem:[%s8 + $0x238] sm:$0xff]
  %v911 = vld [vmem:[%s8 + $0x240] sm:$0xff]
  %v912 = vld [vmem:[%s8 + $0x248] sm:$0xff]
  %v913 = vld [vmem:[%s8 + $0x250] sm:$0xff]
  %v914 = vld [vmem:[%s8 + $0x258] sm:$0xff]
  %v915 = vld [vmem:[%s8 + $0x260] sm:$0xff]
  %v916 = vld [vmem:[%s8 + $0x268] sm:$0xff]
  %v917 = vld [vmem:[%s8 + $0x270] sm:$0xff]
  %v918 = vld [vmem:[%s8 + $0x278] sm:$0xff]
  %v919 = vld [vmem:[%s8 + $0x280] sm:$0xff]
  %v920 = vld [vmem:[%s8 + $0x288] sm:$0xff]
  %v921 = vld [vmem:[%s8 + $0x290] sm:$0xff]
  %v922 = vld [vmem:[%s8 + $0x298] sm:$0xff]
  %v923 = vld [vmem:[%s8 + $0x2a0] sm:$0xff]
  %v924 = vld [vmem:[%s8 + $0x2a8] sm:$0xff]
  %v925 = vld [vmem:[%s8 + $0x2b0] sm:$0xff]
  %v926 = vld [vmem:[%s8 + $0x2b8] sm:$0xff]
  %v927 = vld [vmem:[%s8 + $0x2c0] sm:$0xff]
  %v928 = vld [vmem:[%s8 + $0x2c8] sm:$0xff]
  %v929 = vld [vmem:[%s8 + $0x2d0] sm:$0xff]
  %v930 = vld [vmem:[%s8 + $0x2d8] sm:$0xff]
  %v931 = vld [vmem:[%s8 + $0x2e0] sm:$0xff]
  %v932 = vld [vmem:[%s8 + $0x2e8] sm:$0xff]
  %v933 = vld [vmem:[%s8 + $0x2f0] sm:$0xff]
  %v934 = vld [vmem:[%s8 + $0x2f8] sm:$0xff]
  %v935 = vld [vmem:[%s8 + $0x300] sm:$0xff]
  %v936 = vld [vmem:[%s8 + $0x308] sm:$0xff]
  %v937 = vld [vmem:[%s8 + $0x310] sm:$0xff]
  %v938 = vld [vmem:[%s8 + $0x318] sm:$0xff]
  %v939 = vld [vmem:[%s8 + $0x320] sm:$0xff]
  %v940 = vld [vmem:[%s8 + $0x328] sm:$0xff]
  %v941 = vld [vmem:[%s8 + $0x330] sm:$0xff]
  %v942 = vld [vmem:[%s8 + $0x338] sm:$0xff]
  %v943 = vld [vmem:[%s8 + $0x340] sm:$0xff]
  %v944 = vld [vmem:[%s8 + $0x348] sm:$0xff]
  %v945 = vld [vmem:[%s8 + $0x350] sm:$0xff]
  %v946 = vld [vmem:[%s8 + $0x358] sm:$0xff]
  %v947 = vld [vmem:[%s8 + $0x360] sm:$0xff]
  %v948 = vld [vmem:[%s8 + $0x368] sm:$0xff]
  %v949 = vld [vmem:[%s8 + $0x370] sm:$0xff]
  %v950 = vld [vmem:[%s8 + $0x378] sm:$0xff]
  %v951 = vld [vmem:[%s8 + $0x380] sm:$0xff]
  %v952 = vld [vmem:[%s8 + $0x388] sm:$0xff]
  %v953 = vld [vmem:[%s8 + $0x390] sm:$0xff]
  %v954 = vld [vmem:[%s8 + $0x398] sm:$0xff]
  %v955 = vld [vmem:[%s8 + $0x3a0] sm:$0xff]
  %v956 = vld [vmem:[%s8 + $0x3a8] sm:$0xff]
  %v957 = vld [vmem:[%s8 + $0x3b0] sm:$0xff]
  %v958 = vld [vmem:[%s8 + $0x3b8] sm:$0xff]
  %v959 = vld [vmem:[%s8 + $0x3c0] sm:$0xff]
  %v960 = vld [vmem:[%s8 + $0x3c8] sm:$0xff]
  %v961 = vld [vmem:[%s8 + $0x3d0] sm:$0xff]
  %v962 = vld [vmem:[%s8 + $0x3d8] sm:$0xff]
  %v963 = vld [vmem:[%s8 + $0x3e0] sm:$0xff]
  %v964 = vld [vmem:[%s8 + $0x3e8] sm:$0xff]
  %v965 = vld [vmem:[%s8 + $0x3f0] sm:$0xff]
  %v966 = vld [vmem:[%s8 + $0x3f8] sm:$0xff]
  %s967 = scalar_lea.vmem %s10, 2
  %v968 = vld [vmem:[%s967] ss:$8 sm:$0x3]
  %s969 = scalar_lea.vmem %s10, 3
  %v970 = vld [vmem:[%s969] ss:$8 sm:$0x3]
  %s971 = scalar_lea.vmem %s10, 4
  %v972 = vld [vmem:[%s971] ss:$8 sm:$0x3]
  %v973 = vpack.c.bf16 %v47, %v45
  %v974 = vpack.c.bf16 %v48, %v46
  %v975 = vpack.c.bf16 %v704, %v702
  %v976 = vpack.c.bf16 %v705, %v703
  %v977 = vpack.c.bf16 %v825, %v821
  %v978 = vpack.c.bf16 %v827, %v823
  %v979 = vpack.c.bf16 %v51, %v49
  %v980 = vpack.c.bf16 %v52, %v50
  %v981 = vpack.c.bf16 %v708, %v706
  %v982 = vpack.c.bf16 %v709, %v707
  %v983 = vpack.c.bf16 %v835, %v831
  %v984 = vpack.c.bf16 %v837, %v833
  %v986 = vlaneseq
  %v987 = vshrl.u32 %v986, 7
  %v988 = vsub.s32 0, %v987
  %v989 = vrot.slane %v968, %v988
  %v990 = vlaneseq
  %v991 = vshrl.u32 %v990, 7
  %v992 = vsub.s32 1, %v991
  %v993 = vrot.slane %v968, %v992
  %v1124 = vunpack.c.l.b16 %v839
  %v1125 = vunpack.c.h.b16 %v839
  %v1126 = vunpack.c.l.b16 %v840
  %v1127 = vunpack.c.h.b16 %v840
  %v1128 = vunpack.c.l.b16 %v841
  %v1129 = vunpack.c.h.b16 %v841
  %v1130 = vunpack.c.l.b16 %v842
  %v1131 = vunpack.c.h.b16 %v842
  %v1132 = vunpack.c.l.b16 %v843
  %v1133 = vunpack.c.h.b16 %v843
  %v1134 = vunpack.c.l.b16 %v844
  %v1135 = vunpack.c.h.b16 %v844
  %v1136 = vunpack.c.l.b16 %v845
  %v1137 = vunpack.c.h.b16 %v845
  %v1138 = vunpack.c.l.b16 %v846
  %v1139 = vunpack.c.h.b16 %v846
  %v1140 = vunpack.c.l.b16 %v847
  %v1141 = vunpack.c.h.b16 %v847
  %v1142 = vunpack.c.l.b16 %v848
  %v1143 = vunpack.c.h.b16 %v848
  %v1144 = vunpack.c.l.b16 %v849
  %v1145 = vunpack.c.h.b16 %v849
  %v1146 = vunpack.c.l.b16 %v850
  %v1147 = vunpack.c.h.b16 %v850
  %v1148 = vunpack.c.l.b16 %v851
  %v1149 = vunpack.c.h.b16 %v851
  %v1150 = vunpack.c.l.b16 %v852
  %v1151 = vunpack.c.h.b16 %v852
  %v1152 = vunpack.c.l.b16 %v853
  %v1153 = vunpack.c.h.b16 %v853
  %v1154 = vunpack.c.l.b16 %v854
  %v1155 = vunpack.c.h.b16 %v854
  %v1156 = vunpack.c.l.b16 %v855
  %v1157 = vunpack.c.h.b16 %v855
  %v1158 = vunpack.c.l.b16 %v856
  %v1159 = vunpack.c.h.b16 %v856
  %v1160 = vunpack.c.l.b16 %v857
  %v1161 = vunpack.c.h.b16 %v857
  %v1162 = vunpack.c.l.b16 %v858
  %v1163 = vunpack.c.h.b16 %v858
  %v1164 = vunpack.c.l.b16 %v859
  %v1165 = vunpack.c.h.b16 %v859
  %v1166 = vunpack.c.l.b16 %v860
  %v1167 = vunpack.c.h.b16 %v860
  %v1168 = vunpack.c.l.b16 %v861
  %v1169 = vunpack.c.h.b16 %v861
  %v1170 = vunpack.c.l.b16 %v862
  %v1171 = vunpack.c.h.b16 %v862
  %v1172 = vunpack.c.l.b16 %v863
  %v1173 = vunpack.c.h.b16 %v863
  %v1174 = vunpack.c.l.b16 %v864
  %v1175 = vunpack.c.h.b16 %v864
  %v1176 = vunpack.c.l.b16 %v865
  %v1177 = vunpack.c.h.b16 %v865
  %v1178 = vunpack.c.l.b16 %v866
  %v1179 = vunpack.c.h.b16 %v866
  %v1180 = vunpack.c.l.b16 %v867
  %v1181 = vunpack.c.h.b16 %v867
  %v1182 = vunpack.c.l.b16 %v868
  %v1183 = vunpack.c.h.b16 %v868
  %v1184 = vunpack.c.l.b16 %v869
  %v1185 = vunpack.c.h.b16 %v869
  %v1186 = vunpack.c.l.b16 %v870
  %v1187 = vunpack.c.h.b16 %v870
  %v1188 = vunpack.c.l.b16 %v871
  %v1189 = vunpack.c.h.b16 %v871
  %v1190 = vunpack.c.l.b16 %v872
  %v1191 = vunpack.c.h.b16 %v872
  %v1192 = vunpack.c.l.b16 %v873
  %v1193 = vunpack.c.h.b16 %v873
  %v1194 = vunpack.c.l.b16 %v874
  %v1195 = vunpack.c.h.b16 %v874
  %v1196 = vunpack.c.l.b16 %v875
  %v1197 = vunpack.c.h.b16 %v875
  %v1198 = vunpack.c.l.b16 %v876
  %v1199 = vunpack.c.h.b16 %v876
  %v1200 = vunpack.c.l.b16 %v877
  %v1201 = vunpack.c.h.b16 %v877
  %v1202 = vunpack.c.l.b16 %v878
  %v1203 = vunpack.c.h.b16 %v878
  %v1204 = vunpack.c.l.b16 %v879
  %v1205 = vunpack.c.h.b16 %v879
  %v1206 = vunpack.c.l.b16 %v880
  %v1207 = vunpack.c.h.b16 %v880
  %v1208 = vunpack.c.l.b16 %v881
  %v1209 = vunpack.c.h.b16 %v881
  %v1210 = vunpack.c.l.b16 %v882
  %v1211 = vunpack.c.h.b16 %v882
  %v1212 = vunpack.c.l.b16 %v883
  %v1213 = vunpack.c.h.b16 %v883
  %v1214 = vunpack.c.l.b16 %v884
  %v1215 = vunpack.c.h.b16 %v884
  %v1216 = vunpack.c.l.b16 %v885
  %v1217 = vunpack.c.h.b16 %v885
  %v1218 = vunpack.c.l.b16 %v886
  %v1219 = vunpack.c.h.b16 %v886
  %v1220 = vunpack.c.l.b16 %v887
  %v1221 = vunpack.c.h.b16 %v887
  %v1222 = vunpack.c.l.b16 %v888
  %v1223 = vunpack.c.h.b16 %v888
  %v1224 = vunpack.c.l.b16 %v889
  %v1225 = vunpack.c.h.b16 %v889
  %v1226 = vunpack.c.l.b16 %v890
  %v1227 = vunpack.c.h.b16 %v890
  %v1228 = vunpack.c.l.b16 %v891
  %v1229 = vunpack.c.h.b16 %v891
  %v1230 = vunpack.c.l.b16 %v892
  %v1231 = vunpack.c.h.b16 %v892
  %v1232 = vunpack.c.l.b16 %v893
  %v1233 = vunpack.c.h.b16 %v893
  %v1234 = vunpack.c.l.b16 %v894
  %v1235 = vunpack.c.h.b16 %v894
  %v1236 = vunpack.c.l.b16 %v895
  %v1237 = vunpack.c.h.b16 %v895
  %v1238 = vunpack.c.l.b16 %v896
  %v1239 = vunpack.c.h.b16 %v896
  %v1240 = vunpack.c.l.b16 %v897
  %v1241 = vunpack.c.h.b16 %v897
  %v1242 = vunpack.c.l.b16 %v898
  %v1243 = vunpack.c.h.b16 %v898
  %v1244 = vunpack.c.l.b16 %v899
  %v1245 = vunpack.c.h.b16 %v899
  %v1246 = vunpack.c.l.b16 %v900
  %v1247 = vunpack.c.h.b16 %v900
  %v1248 = vunpack.c.l.b16 %v901
  %v1249 = vunpack.c.h.b16 %v901
  %v1250 = vunpack.c.l.b16 %v902
  %v1251 = vunpack.c.h.b16 %v902
  %v1252 = vunpack.c.l.b16 %v903
  %v1253 = vunpack.c.h.b16 %v903
  %v1254 = vunpack.c.l.b16 %v904
  %v1255 = vunpack.c.h.b16 %v904
  %v1256 = vunpack.c.l.b16 %v905
  %v1257 = vunpack.c.h.b16 %v905
  %v1258 = vunpack.c.l.b16 %v906
  %v1259 = vunpack.c.h.b16 %v906
  %v1260 = vunpack.c.l.b16 %v907
  %v1261 = vunpack.c.h.b16 %v907
  %v1262 = vunpack.c.l.b16 %v908
  %v1263 = vunpack.c.h.b16 %v908
  %v1264 = vunpack.c.l.b16 %v909
  %v1265 = vunpack.c.h.b16 %v909
  %v1266 = vunpack.c.l.b16 %v910
  %v1267 = vunpack.c.h.b16 %v910
  %v1268 = vunpack.c.l.b16 %v911
  %v1269 = vunpack.c.h.b16 %v911
  %v1270 = vunpack.c.l.b16 %v912
  %v1271 = vunpack.c.h.b16 %v912
  %v1272 = vunpack.c.l.b16 %v913
  %v1273 = vunpack.c.h.b16 %v913
  %v1274 = vunpack.c.l.b16 %v914
  %v1275 = vunpack.c.h.b16 %v914
  %v1276 = vunpack.c.l.b16 %v915
  %v1277 = vunpack.c.h.b16 %v915
  %v1278 = vunpack.c.l.b16 %v916
  %v1279 = vunpack.c.h.b16 %v916
  %v1280 = vunpack.c.l.b16 %v917
  %v1281 = vunpack.c.h.b16 %v917
  %v1282 = vunpack.c.l.b16 %v918
  %v1283 = vunpack.c.h.b16 %v918
  %v1284 = vunpack.c.l.b16 %v919
  %v1285 = vunpack.c.h.b16 %v919
  %v1286 = vunpack.c.l.b16 %v920
  %v1287 = vunpack.c.h.b16 %v920
  %v1288 = vunpack.c.l.b16 %v921
  %v1289 = vunpack.c.h.b16 %v921
  %v1290 = vunpack.c.l.b16 %v922
  %v1291 = vunpack.c.h.b16 %v922
  %v1292 = vunpack.c.l.b16 %v923
  %v1293 = vunpack.c.h.b16 %v923
  %v1294 = vunpack.c.l.b16 %v924
  %v1295 = vunpack.c.h.b16 %v924
  %v1296 = vunpack.c.l.b16 %v925
  %v1297 = vunpack.c.h.b16 %v925
  %v1298 = vunpack.c.l.b16 %v926
  %v1299 = vunpack.c.h.b16 %v926
  %v1300 = vunpack.c.l.b16 %v927
  %v1301 = vunpack.c.h.b16 %v927
  %v1302 = vunpack.c.l.b16 %v928
  %v1303 = vunpack.c.h.b16 %v928
  %v1304 = vunpack.c.l.b16 %v929
  %v1305 = vunpack.c.h.b16 %v929
  %v1306 = vunpack.c.l.b16 %v930
  %v1307 = vunpack.c.h.b16 %v930
  %v1308 = vunpack.c.l.b16 %v931
  %v1309 = vunpack.c.h.b16 %v931
  %v1310 = vunpack.c.l.b16 %v932
  %v1311 = vunpack.c.h.b16 %v932
  %v1312 = vunpack.c.l.b16 %v933
  %v1313 = vunpack.c.h.b16 %v933
  %v1314 = vunpack.c.l.b16 %v934
  %v1315 = vunpack.c.h.b16 %v934
  %v1316 = vunpack.c.l.b16 %v935
  %v1317 = vunpack.c.h.b16 %v935
  %v1318 = vunpack.c.l.b16 %v936
  %v1319 = vunpack.c.h.b16 %v936
  %v1320 = vunpack.c.l.b16 %v937
  %v1321 = vunpack.c.h.b16 %v937
  %v1322 = vunpack.c.l.b16 %v938
  %v1323 = vunpack.c.h.b16 %v938
  %v1324 = vunpack.c.l.b16 %v939
  %v1325 = vunpack.c.h.b16 %v939
  %v1326 = vunpack.c.l.b16 %v940
  %v1327 = vunpack.c.h.b16 %v940
  %v1328 = vunpack.c.l.b16 %v941
  %v1329 = vunpack.c.h.b16 %v941
  %v1330 = vunpack.c.l.b16 %v942
  %v1331 = vunpack.c.h.b16 %v942
  %v1332 = vunpack.c.l.b16 %v943
  %v1333 = vunpack.c.h.b16 %v943
  %v1334 = vunpack.c.l.b16 %v944
  %v1335 = vunpack.c.h.b16 %v944
  %v1336 = vunpack.c.l.b16 %v945
  %v1337 = vunpack.c.h.b16 %v945
  %v1338 = vunpack.c.l.b16 %v946
  %v1339 = vunpack.c.h.b16 %v946
  %v1340 = vunpack.c.l.b16 %v947
  %v1341 = vunpack.c.h.b16 %v947
  %v1342 = vunpack.c.l.b16 %v948
  %v1343 = vunpack.c.h.b16 %v948
  %v1344 = vunpack.c.l.b16 %v949
  %v1345 = vunpack.c.h.b16 %v949
  %v1346 = vunpack.c.l.b16 %v950
  %v1347 = vunpack.c.h.b16 %v950
  %v1348 = vunpack.c.l.b16 %v951
  %v1349 = vunpack.c.h.b16 %v951
  %v1350 = vunpack.c.l.b16 %v952
  %v1351 = vunpack.c.h.b16 %v952
  %v1352 = vunpack.c.l.b16 %v953
  %v1353 = vunpack.c.h.b16 %v953
  %v1354 = vunpack.c.l.b16 %v954
  %v1355 = vunpack.c.h.b16 %v954
  %v1356 = vunpack.c.l.b16 %v955
  %v1357 = vunpack.c.h.b16 %v955
  %v1358 = vunpack.c.l.b16 %v956
  %v1359 = vunpack.c.h.b16 %v956
  %v1360 = vunpack.c.l.b16 %v957
  %v1361 = vunpack.c.h.b16 %v957
  %v1362 = vunpack.c.l.b16 %v958
  %v1363 = vunpack.c.h.b16 %v958
  %v1364 = vunpack.c.l.b16 %v959
  %v1365 = vunpack.c.h.b16 %v959
  %v1366 = vunpack.c.l.b16 %v960
  %v1367 = vunpack.c.h.b16 %v960
  %v1368 = vunpack.c.l.b16 %v961
  %v1369 = vunpack.c.h.b16 %v961
  %v1370 = vunpack.c.l.b16 %v962
  %v1371 = vunpack.c.h.b16 %v962
  %v1372 = vunpack.c.l.b16 %v963
  %v1373 = vunpack.c.h.b16 %v963
  %v1374 = vunpack.c.l.b16 %v964
  %v1375 = vunpack.c.h.b16 %v964
  %v1376 = vunpack.c.l.b16 %v965
  %v1377 = vunpack.c.h.b16 %v965
  %v1378 = vunpack.c.l.b16 %v966
  %v1379 = vunpack.c.h.b16 %v966
  %v1380 = vpack.c.b16 %v1126, %v1124
  %v1381 = vpack.c.b16 %v1127, %v1125
  %v1382 = vpack.c.b16 %v1130, %v1128
  %v1383 = vpack.c.b16 %v1131, %v1129
  %v1384 = vpack.c.b16 %v1134, %v1132
  %v1385 = vpack.c.b16 %v1135, %v1133
  %v1386 = vpack.c.b16 %v1138, %v1136
  %v1387 = vpack.c.b16 %v1139, %v1137
  %v1388 = vpack.c.b16 %v1142, %v1140
  %v1389 = vpack.c.b16 %v1143, %v1141
  %v1390 = vpack.c.b16 %v1146, %v1144
  %v1391 = vpack.c.b16 %v1147, %v1145
  %v1392 = vpack.c.b16 %v1150, %v1148
  %v1393 = vpack.c.b16 %v1151, %v1149
  %v1394 = vpack.c.b16 %v1154, %v1152
  %v1395 = vpack.c.b16 %v1155, %v1153
  %v1396 = vpack.c.b16 %v1158, %v1156
  %v1397 = vpack.c.b16 %v1159, %v1157
  %v1398 = vpack.c.b16 %v1162, %v1160
  %v1399 = vpack.c.b16 %v1163, %v1161
  %v1400 = vpack.c.b16 %v1166, %v1164
  %v1401 = vpack.c.b16 %v1167, %v1165
  %v1402 = vpack.c.b16 %v1170, %v1168
  %v1403 = vpack.c.b16 %v1171, %v1169
  %v1404 = vpack.c.b16 %v1174, %v1172
  %v1405 = vpack.c.b16 %v1175, %v1173
  %v1406 = vpack.c.b16 %v1178, %v1176
  %v1407 = vpack.c.b16 %v1179, %v1177
  %v1408 = vpack.c.b16 %v1182, %v1180
  %v1409 = vpack.c.b16 %v1183, %v1181
  %v1410 = vpack.c.b16 %v1186, %v1184
  %v1411 = vpack.c.b16 %v1187, %v1185
  %v1412 = vpack.c.b16 %v1190, %v1188
  %v1413 = vpack.c.b16 %v1191, %v1189
  %v1414 = vpack.c.b16 %v1194, %v1192
  %v1415 = vpack.c.b16 %v1195, %v1193
  %v1416 = vpack.c.b16 %v1198, %v1196
  %v1417 = vpack.c.b16 %v1199, %v1197
  %v1418 = vpack.c.b16 %v1202, %v1200
  %v1419 = vpack.c.b16 %v1203, %v1201
  %v1420 = vpack.c.b16 %v1206, %v1204
  %v1421 = vpack.c.b16 %v1207, %v1205
  %v1422 = vpack.c.b16 %v1210, %v1208
  %v1423 = vpack.c.b16 %v1211, %v1209
  %v1424 = vpack.c.b16 %v1214, %v1212
  %v1425 = vpack.c.b16 %v1215, %v1213
  %v1426 = vpack.c.b16 %v1218, %v1216
  %v1427 = vpack.c.b16 %v1219, %v1217
  %v1428 = vpack.c.b16 %v1222, %v1220
  %v1429 = vpack.c.b16 %v1223, %v1221
  %v1430 = vpack.c.b16 %v1226, %v1224
  %v1431 = vpack.c.b16 %v1227, %v1225
  %v1432 = vpack.c.b16 %v1230, %v1228
  %v1433 = vpack.c.b16 %v1231, %v1229
  %v1434 = vpack.c.b16 %v1234, %v1232
  %v1435 = vpack.c.b16 %v1235, %v1233
  %v1436 = vpack.c.b16 %v1238, %v1236
  %v1437 = vpack.c.b16 %v1239, %v1237
  %v1438 = vpack.c.b16 %v1242, %v1240
  %v1439 = vpack.c.b16 %v1243, %v1241
  %v1440 = vpack.c.b16 %v1246, %v1244
  %v1441 = vpack.c.b16 %v1247, %v1245
  %v1442 = vpack.c.b16 %v1250, %v1248
  %v1443 = vpack.c.b16 %v1251, %v1249
  %v1444 = vpack.c.b16 %v1254, %v1252
  %v1445 = vpack.c.b16 %v1255, %v1253
  %v1446 = vpack.c.b16 %v1258, %v1256
  %v1447 = vpack.c.b16 %v1259, %v1257
  %v1448 = vpack.c.b16 %v1262, %v1260
  %v1449 = vpack.c.b16 %v1263, %v1261
  %v1450 = vpack.c.b16 %v1266, %v1264
  %v1451 = vpack.c.b16 %v1267, %v1265
  %v1452 = vpack.c.b16 %v1270, %v1268
  %v1453 = vpack.c.b16 %v1271, %v1269
  %v1454 = vpack.c.b16 %v1274, %v1272
  %v1455 = vpack.c.b16 %v1275, %v1273
  %v1456 = vpack.c.b16 %v1278, %v1276
  %v1457 = vpack.c.b16 %v1279, %v1277
  %v1458 = vpack.c.b16 %v1282, %v1280
  %v1459 = vpack.c.b16 %v1283, %v1281
  %v1460 = vpack.c.b16 %v1286, %v1284
  %v1461 = vpack.c.b16 %v1287, %v1285
  %v1462 = vpack.c.b16 %v1290, %v1288
  %v1463 = vpack.c.b16 %v1291, %v1289
  %v1464 = vpack.c.b16 %v1294, %v1292
  %v1465 = vpack.c.b16 %v1295, %v1293
  %v1466 = vpack.c.b16 %v1298, %v1296
  %v1467 = vpack.c.b16 %v1299, %v1297
  %v1468 = vpack.c.b16 %v1302, %v1300
  %v1469 = vpack.c.b16 %v1303, %v1301
  %v1470 = vpack.c.b16 %v1306, %v1304
  %v1471 = vpack.c.b16 %v1307, %v1305
  %v1472 = vpack.c.b16 %v1310, %v1308
  %v1473 = vpack.c.b16 %v1311, %v1309
  %v1474 = vpack.c.b16 %v1314, %v1312
  %v1475 = vpack.c.b16 %v1315, %v1313
  %v1476 = vpack.c.b16 %v1318, %v1316
  %v1477 = vpack.c.b16 %v1319, %v1317
  %v1478 = vpack.c.b16 %v1322, %v1320
  %v1479 = vpack.c.b16 %v1323, %v1321
  %v1480 = vpack.c.b16 %v1326, %v1324
  %v1481 = vpack.c.b16 %v1327, %v1325
  %v1482 = vpack.c.b16 %v1330, %v1328
  %v1483 = vpack.c.b16 %v1331, %v1329
  %v1484 = vpack.c.b16 %v1334, %v1332
  %v1485 = vpack.c.b16 %v1335, %v1333
  %v1486 = vpack.c.b16 %v1338, %v1336
  %v1487 = vpack.c.b16 %v1339, %v1337
  %v1488 = vpack.c.b16 %v1342, %v1340
  %v1489 = vpack.c.b16 %v1343, %v1341
  %v1490 = vpack.c.b16 %v1346, %v1344
  %v1491 = vpack.c.b16 %v1347, %v1345
  %v1492 = vpack.c.b16 %v1350, %v1348
  %v1493 = vpack.c.b16 %v1351, %v1349
  %v1494 = vpack.c.b16 %v1354, %v1352
  %v1495 = vpack.c.b16 %v1355, %v1353
  %v1496 = vpack.c.b16 %v1358, %v1356
  %v1497 = vpack.c.b16 %v1359, %v1357
  %v1498 = vpack.c.b16 %v1362, %v1360
  %v1499 = vpack.c.b16 %v1363, %v1361
  %v1500 = vpack.c.b16 %v1366, %v1364
  %v1501 = vpack.c.b16 %v1367, %v1365
  %v1502 = vpack.c.b16 %v1370, %v1368
  %v1503 = vpack.c.b16 %v1371, %v1369
  %v1504 = vpack.c.b16 %v1374, %v1372
  %v1505 = vpack.c.b16 %v1375, %v1373
  %v1506 = vpack.c.b16 %v1378, %v1376
  %v1507 = vpack.c.b16 %v1379, %v1377
  %1636 = vmatprep.subr.bf16.mxu0 %v1381
  %1637 = vmatpush1.bf16.msra.mxu0 %v1380
  %1638 = vmatprep.subr.bf16.mxu0 %v1383
  %1639 = vmatpush1.bf16.msra.mxu0 %v1382
  %1640 = vmatprep.subr.bf16.mxu0 %v1385
  %1641 = vmatpush1.bf16.msra.mxu0 %v1384
  %1642 = vmatprep.subr.bf16.mxu0 %v1387
  %1643 = vmatpush1.bf16.msra.mxu0 %v1386
  %1644 = vmatprep.subr.bf16.mxu0 %v1389
  %1645 = vmatpush1.bf16.msra.mxu0 %v1388
  %1646 = vmatprep.subr.bf16.mxu0 %v1391
  %1647 = vmatpush1.bf16.msra.mxu0 %v1390
  %1648 = vmatprep.subr.bf16.mxu0 %v1393
  %1649 = vmatpush1.bf16.msra.mxu0 %v1392
  %1650 = vmatprep.subr.bf16.mxu0 %v1395
  %1651 = vmatpush1.bf16.msra.mxu0 %v1394
  %1652 = vmatprep.subr.bf16.mxu0 %v1397
  %1653 = vmatpush1.bf16.msra.mxu0 %v1396
  %1654 = vmatprep.subr.bf16.mxu0 %v1399
  %1655 = vmatpush1.bf16.msra.mxu0 %v1398
  %1656 = vmatprep.subr.bf16.mxu0 %v1401
  %1657 = vmatpush1.bf16.msra.mxu0 %v1400
  %1658 = vmatprep.subr.bf16.mxu0 %v1403
  %1659 = vmatpush1.bf16.msra.mxu0 %v1402
  %1660 = vmatprep.subr.bf16.mxu0 %v1405
  %1661 = vmatpush1.bf16.msra.mxu0 %v1404
  %1662 = vmatprep.subr.bf16.mxu0 %v1407
  %1663 = vmatpush1.bf16.msra.mxu0 %v1406
  %1664 = vmatprep.subr.bf16.mxu0 %v1409
  %1665 = vmatpush1.bf16.msra.mxu0 %v1408
  %1666 = vmatprep.subr.bf16.mxu0 %v1411
  %1667 = vmatpush1.bf16.msra.mxu0 %v1410
  %1668 = vmatprep.mubr.bf16.mxu0 %v974
  %1669 = vmatmul.mubr.bf16.gmra.mrb[0].mxu0 %v973
  %v1670 = vpop.f32.mrb[0].mxu0
  %v1671 = vadd.f32 %v989, %v1670
  %v1672 = vpop.f32.mrb[0].mxu0
  %v1673 = vadd.f32 %v993, %v1672
  %v1674 = vpop.f32.mrb[0].mxu0
  %v1675 = vadd.f32 %v989, %v1674
  %v1676 = vpop.f32.mrb[0].mxu0
  %v1677 = vadd.f32 %v993, %v1676
  %1678 = vmatprep.mubr.bf16.mxu0 %v980
  %1679 = vmatmul.mubr.bf16.gmra.mrb[0].mxu0 %v979
  %v1680 = vpop.f32.mrb[0].mxu0
  %v1681 = vadd.f32 %v989, %v1680
  %v1682 = vpop.f32.mrb[0].mxu0
  %v1683 = vadd.f32 %v993, %v1682
  %v1684 = vpop.f32.mrb[0].mxu0
  %v1685 = vadd.f32 %v989, %v1684
  %v1686 = vpop.f32.mrb[0].mxu0
  %v1687 = vadd.f32 %v993, %v1686
  %1688 = vdwg.mxu0
  %1689 = vmatprep.subr.bf16.mxu0 %v1413
  %1690 = vmatpush1.bf16.msra.mxu0 %v1412
  %1691 = vmatprep.subr.bf16.mxu0 %v1415
  %1692 = vmatpush1.bf16.msra.mxu0 %v1414
  %1693 = vmatprep.subr.bf16.mxu0 %v1417
  %1694 = vmatpush1.bf16.msra.mxu0 %v1416
  %1695 = vmatprep.subr.bf16.mxu0 %v1419
  %1696 = vmatpush1.bf16.msra.mxu0 %v1418
  %1697 = vmatprep.subr.bf16.mxu0 %v1421
  %1698 = vmatpush1.bf16.msra.mxu0 %v1420
  %1699 = vmatprep.subr.bf16.mxu0 %v1423
  %1700 = vmatpush1.bf16.msra.mxu0 %v1422
  %1701 = vmatprep.subr.bf16.mxu0 %v1425
  %1702 = vmatpush1.bf16.msra.mxu0 %v1424
  %1703 = vmatprep.subr.bf16.mxu0 %v1427
  %1704 = vmatpush1.bf16.msra.mxu0 %v1426
  %1705 = vmatprep.subr.bf16.mxu0 %v1429
  %1706 = vmatpush1.bf16.msra.mxu0 %v1428
  %1707 = vmatprep.subr.bf16.mxu0 %v1431
  %1708 = vmatpush1.bf16.msra.mxu0 %v1430
  %1709 = vmatprep.subr.bf16.mxu0 %v1433
  %1710 = vmatpush1.bf16.msra.mxu0 %v1432
  %1711 = vmatprep.subr.bf16.mxu0 %v1435
  %1712 = vmatpush1.bf16.msra.mxu0 %v1434
  %1713 = vmatprep.subr.bf16.mxu0 %v1437
  %1714 = vmatpush1.bf16.msra.mxu0 %v1436
  %1715 = vmatprep.subr.bf16.mxu0 %v1439
  %1716 = vmatpush1.bf16.msra.mxu0 %v1438
  %1717 = vmatprep.subr.bf16.mxu0 %v1441
  %1718 = vmatpush1.bf16.msra.mxu0 %v1440
  %1719 = vmatprep.subr.bf16.mxu0 %v1443
  %1720 = vmatpush1.bf16.msra.mxu0 %v1442
  %1721 = vmatprep.mubr.bf16.mxu0 %v976
  %1722 = vmatmul.mubr.bf16.gmra.mrb[0].mxu0 %v975
  %v1723 = vpop.f32.mrb[0].mxu0
  %v1724 = vadd.f32 %v1671, %v1723
  %v1725 = vpop.f32.mrb[0].mxu0
  %v1726 = vadd.f32 %v1673, %v1725
  %v1727 = vpop.f32.mrb[0].mxu0
  %v1728 = vadd.f32 %v1675, %v1727
  %v1729 = vpop.f32.mrb[0].mxu0
  %v1730 = vadd.f32 %v1677, %v1729
  %1731 = vmatprep.mubr.bf16.mxu0 %v982
  %1732 = vmatmul.mubr.bf16.gmra.mrb[0].mxu0 %v981
  %v1733 = vpop.f32.mrb[0].mxu0
  %v1734 = vadd.f32 %v1681, %v1733
  %v1735 = vpop.f32.mrb[0].mxu0
  %v1736 = vadd.f32 %v1683, %v1735
  %v1737 = vpop.f32.mrb[0].mxu0
  %v1738 = vadd.f32 %v1685, %v1737
  %v1739 = vpop.f32.mrb[0].mxu0
  %v1740 = vadd.f32 %v1687, %v1739
  %1741 = vdwg.mxu0
  %1742 = vmatprep.subr.bf16.mxu0 %v1445
  %1743 = vmatpush1.bf16.msra.mxu0 %v1444
  %1744 = vmatprep.subr.bf16.mxu0 %v1447
  %1745 = vmatpush1.bf16.msra.mxu0 %v1446
  %1746 = vmatprep.subr.bf16.mxu0 %v1449
  %1747 = vmatpush1.bf16.msra.mxu0 %v1448
  %1748 = vmatprep.subr.bf16.mxu0 %v1451
  %1749 = vmatpush1.bf16.msra.mxu0 %v1450
  %1750 = vmatprep.subr.bf16.mxu0 %v1453
  %1751 = vmatpush1.bf16.msra.mxu0 %v1452
  %1752 = vmatprep.subr.bf16.mxu0 %v1455
  %1753 = vmatpush1.bf16.msra.mxu0 %v1454
  %1754 = vmatprep.subr.bf16.mxu0 %v1457
  %1755 = vmatpush1.bf16.msra.mxu0 %v1456
  %1756 = vmatprep.subr.bf16.mxu0 %v1459
  %1757 = vmatpush1.bf16.msra.mxu0 %v1458
  %1758 = vmatprep.subr.bf16.mxu0 %v1461
  %1759 = vmatpush1.bf16.msra.mxu0 %v1460
  %1760 = vmatprep.subr.bf16.mxu0 %v1463
  %1761 = vmatpush1.bf16.msra.mxu0 %v1462
  %1762 = vmatprep.subr.bf16.mxu0 %v1465
  %1763 = vmatpush1.bf16.msra.mxu0 %v1464
  %1764 = vmatprep.subr.bf16.mxu0 %v1467
  %1765 = vmatpush1.bf16.msra.mxu0 %v1466
  %1766 = vmatprep.subr.bf16.mxu0 %v1469
  %1767 = vmatpush1.bf16.msra.mxu0 %v1468
  %1768 = vmatprep.subr.bf16.mxu0 %v1471
  %1769 = vmatpush1.bf16.msra.mxu0 %v1470
  %1770 = vmatprep.subr.bf16.mxu0 %v1473
  %1771 = vmatpush1.bf16.msra.mxu0 %v1472
  %1772 = vmatprep.subr.bf16.mxu0 %v1475
  %1773 = vmatpush1.bf16.msra.mxu0 %v1474
  %1774 = vmatprep.mubr.bf16.mxu0 %v978
  %1775 = vmatmul.mubr.bf16.gmra.mrb[0].mxu0 %v977
  %v1776 = vpop.f32.mrb[0].mxu0
  %v1777 = vadd.f32 %v1724, %v1776
  %v1778 = vpop.f32.mrb[0].mxu0
  %v1779 = vadd.f32 %v1726, %v1778
  %v1780 = vpop.f32.mrb[0].mxu0
  %v1781 = vadd.f32 %v1728, %v1780
  %v1782 = vpop.f32.mrb[0].mxu0
  %v1783 = vadd.f32 %v1730, %v1782
  %1784 = vmatprep.mubr.bf16.mxu0 %v984
  %1785 = vmatmul.mubr.bf16.gmra.mrb[0].mxu0 %v983
  %v1786 = vpop.f32.mrb[0].mxu0
  %v1787 = vadd.f32 %v1734, %v1786
  %v1788 = vpop.f32.mrb[0].mxu0
  %v1789 = vadd.f32 %v1736, %v1788
  %v1790 = vpop.f32.mrb[0].mxu0
  %v1791 = vadd.f32 %v1738, %v1790
  %v1792 = vpop.f32.mrb[0].mxu0
  %v1793 = vadd.f32 %v1740, %v1792
  %1794 = vdwg.mxu0
  %1795 = vmatprep.subr.bf16.mxu0 %v1477
  %1796 = vmatpush1.bf16.msra.mxu0 %v1476
  %1797 = vmatprep.subr.bf16.mxu0 %v1479
  %1798 = vmatpush1.bf16.msra.mxu0 %v1478
  %1799 = vmatprep.subr.bf16.mxu0 %v1481
  %1800 = vmatpush1.bf16.msra.mxu0 %v1480
  %1801 = vmatprep.subr.bf16.mxu0 %v1483
  %1802 = vmatpush1.bf16.msra.mxu0 %v1482
  %1803 = vmatprep.subr.bf16.mxu0 %v1485
  %1804 = vmatpush1.bf16.msra.mxu0 %v1484
  %1805 = vmatprep.subr.bf16.mxu0 %v1487
  %1806 = vmatpush1.bf16.msra.mxu0 %v1486
  %1807 = vmatprep.subr.bf16.mxu0 %v1489
  %1808 = vmatpush1.bf16.msra.mxu0 %v1488
  %1809 = vmatprep.subr.bf16.mxu0 %v1491
  %1810 = vmatpush1.bf16.msra.mxu0 %v1490
  %1811 = vmatprep.subr.bf16.mxu0 %v1493
  %1812 = vmatpush1.bf16.msra.mxu0 %v1492
  %1813 = vmatprep.subr.bf16.mxu0 %v1495
  %1814 = vmatpush1.bf16.msra.mxu0 %v1494
  %1815 = vmatprep.subr.bf16.mxu0 %v1497
  %1816 = vmatpush1.bf16.msra.mxu0 %v1496
  %1817 = vmatprep.subr.bf16.mxu0 %v1499
  %1818 = vmatpush1.bf16.msra.mxu0 %v1498
  %1819 = vmatprep.subr.bf16.mxu0 %v1501
  %1820 = vmatpush1.bf16.msra.mxu0 %v1500
  %1821 = vmatprep.subr.bf16.mxu0 %v1503
  %1822 = vmatpush1.bf16.msra.mxu0 %v1502
  %1823 = vmatprep.subr.bf16.mxu0 %v1505
  %1824 = vmatpush1.bf16.msra.mxu0 %v1504
  %1825 = vmatprep.subr.bf16.mxu0 %v1507
  %1826 = vmatpush1.bf16.msra.mxu0 %v1506
  %1827 = vmatprep.mubr.bf16.mxu0 %v130
  %1828 = vmatmul.mubr.bf16.gmra.mrb[0].mxu0 %v129
  %v1829 = vpop.f32.mrb[0].mxu0
  %v1830 = vadd.f32 %v1777, %v1829
  %v1831 = vpop.f32.mrb[0].mxu0
  %v1832 = vadd.f32 %v1779, %v1831
  %v1833 = vpop.f32.mrb[0].mxu0
  %v1834 = vadd.f32 %v1781, %v1833
  %v1835 = vpop.f32.mrb[0].mxu0
  %v1836 = vadd.f32 %v1783, %v1835
  %1837 = vmatprep.mubr.bf16.mxu0 %v132
  %1838 = vmatmul.mubr.bf16.gmra.mrb[0].mxu0 %v131
  %v1839 = vpop.f32.mrb[0].mxu0
  %v1840 = vadd.f32 %v1787, %v1839
  %v1841 = vpop.f32.mrb[0].mxu0
  %v1842 = vadd.f32 %v1789, %v1841
  %v1843 = vpop.f32.mrb[0].mxu0
  %v1844 = vadd.f32 %v1791, %v1843
  %v1845 = vpop.f32.mrb[0].mxu0
  %v1846 = vadd.f32 %v1793, %v1845
  %1847 = vdwg.mxu0
  %v1848 = vadd.f32 %v1830, %v1834
  %v1849 = vadd.f32 %v1848, %v1840
  %v1850 = vadd.f32 %v1849, %v1844
  %v1851 = vrot.slane %v1850, 4
  %v1852 = vadd.f32 %v1850, %v1851
  %v1853 = vrot.slane %v1852, 2
  %v1854 = vadd.f32 %v1852, %v1853
  %v1855 = vrot.slane %v1854, 1
  %v1856 = vadd.f32 %v1854, %v1855
  %v1857 = vadd.f32 %v1832, %v1836
  %v1858 = vadd.f32 %v1857, %v1842
  %v1859 = vadd.f32 %v1858, %v1846
  %v1860 = vrot.slane %v1859, 4
  %v1861 = vadd.f32 %v1859, %v1860
  %v1862 = vrot.slane %v1861, 2
  %v1863 = vadd.f32 %v1861, %v1862
  %v1864 = vrot.slane %v1863, 1
  %v1865 = vadd.f32 %v1863, %v1864
  %v1866 = vrcp.pop 32.0
  %v1867 = vmul.f32 %v1856, %v1866
  %v1868 = vmul.f32 %v1865, %v1866
  %v1869 = vsub.f32 %v1830, %v1867
  %v1870 = vsub.f32 %v1832, %v1868
  %v1871 = vsub.f32 %v1834, %v1867
  %v1872 = vsub.f32 %v1836, %v1868
  %v1873 = vsub.f32 %v1840, %v1867
  %v1874 = vsub.f32 %v1842, %v1868
  %v1875 = vsub.f32 %v1844, %v1867
  %v1876 = vsub.f32 %v1846, %v1868
  %v1877 = vmul.f32 %v1869, %v1869
  %v1878 = vmul.f32 %v1870, %v1870
  %v1879 = vmul.f32 %v1871, %v1871
  %v1880 = vmul.f32 %v1872, %v1872
  %v1881 = vmul.f32 %v1873, %v1873
  %v1882 = vmul.f32 %v1874, %v1874
  %v1883 = vmul.f32 %v1875, %v1875
  %v1884 = vmul.f32 %v1876, %v1876
  %v1885 = vadd.f32 %v1877, %v1879
  %v1886 = vadd.f32 %v1885, %v1881
  %v1887 = vadd.f32 %v1886, %v1883
  %v1888 = vrot.slane %v1887, 4
  %v1889 = vadd.f32 %v1887, %v1888
  %v1890 = vrot.slane %v1889, 2
  %v1891 = vadd.f32 %v1889, %v1890
  %v1892 = vrot.slane %v1891, 1
  %v1893 = vadd.f32 %v1891, %v1892
  %v1894 = vadd.f32 %v1878, %v1880
  %v1895 = vadd.f32 %v1894, %v1882
  %v1896 = vadd.f32 %v1895, %v1884
  %v1897 = vrot.slane %v1896, 4
  %v1898 = vadd.f32 %v1896, %v1897
  %v1899 = vrot.slane %v1898, 2
  %v1900 = vadd.f32 %v1898, %v1899
  %v1901 = vrot.slane %v1900, 1
  %v1902 = vadd.f32 %v1900, %v1901
  %v1903 = vmul.f32 %v1893, %v1866
  %v1904 = vmul.f32 %v1902, %v1866
  %v1906 = vlaneseq
  %v1907 = vshrl.u32 %v1906, 7
  %v1908 = vsub.s32 0, %v1907
  %v1909 = vrot.slane %v970, %v1908
  %v1910 = vlaneseq
  %v1911 = vshrl.u32 %v1910, 7
  %v1912 = vsub.s32 1, %v1911
  %v1913 = vrot.slane %v970, %v1912
  %v1916 = vmul.f32 %v1909, %v1869
  %v1917 = vmul.f32 %v1913, %v1870
  %v1918 = vmul.f32 %v1909, %v1871
  %v1919 = vmul.f32 %v1913, %v1872
  %v1920 = vmul.f32 %v1909, %v1873
  %v1921 = vmul.f32 %v1913, %v1874
  %v1922 = vmul.f32 %v1909, %v1875
  %v1923 = vmul.f32 %v1913, %v1876
  %v1924 = vadd.f32 %v1903, 1e-05
  %v1925 = vadd.f32 %v1904, 1e-05
  %v1926 = vrsqrt.pop %v1924
  %v1927 = vrsqrt.pop %v1925
  %v1928 = vmul.f32 %v1916, %v1926
  %v1929 = vmul.f32 %v1917, %v1927
  %v1930 = vmul.f32 %v1918, %v1926
  %v1931 = vmul.f32 %v1919, %v1927
  %v1932 = vmul.f32 %v1920, %v1926
  %v1933 = vmul.f32 %v1921, %v1927
  %v1934 = vmul.f32 %v1922, %v1926
  %v1935 = vmul.f32 %v1923, %v1927
  %v1937 = vlaneseq
  %v1938 = vshrl.u32 %v1937, 7
  %v1939 = vsub.s32 0, %v1938
  %v1940 = vrot.slane %v972, %v1939
  %v1941 = vlaneseq
  %v1942 = vshrl.u32 %v1941, 7
  %v1943 = vsub.s32 1, %v1942
  %v1944 = vrot.slane %v972, %v1943
  %v1947 = vadd.f32 %v1928, %v1940
  %v1948 = vadd.f32 %v1929, %v1944
  %v1949 = vadd.f32 %v1930, %v1940
  %v1950 = vadd.f32 %v1931, %v1944
  %v1951 = vadd.f32 %v1932, %v1940
  %v1952 = vadd.f32 %v1933, %v1944
  %v1953 = vadd.f32 %v1934, %v1940
  %v1954 = vadd.f32 %v1935, %v1944
  %v1955 = vmax.f32 %v1947, 0.0
  %v1956 = vmax.f32 %v1948, 0.0
  %v1957 = vmax.f32 %v1949, 0.0
  %v1958 = vmax.f32 %v1950, 0.0
  %v1959 = vmax.f32 %v1951, 0.0
  %v1960 = vmax.f32 %v1952, 0.0
  %v1961 = vmax.f32 %v1953, 0.0
  %v1962 = vmax.f32 %v1954, 0.0
  %v1963 = vld [vmem:[%s8 + $0x400] sm:$0xff]
  %v1964 = vld [vmem:[%s8 + $0x408] sm:$0xff]
  %v1965 = vld [vmem:[%s8 + $0x410] sm:$0xff]
  %v1966 = vld [vmem:[%s8 + $0x418] sm:$0xff]
  %v1967 = vld [vmem:[%s8 + $0x420] sm:$0xff]
  %v1968 = vld [vmem:[%s8 + $0x428] sm:$0xff]
  %v1969 = vld [vmem:[%s8 + $0x430] sm:$0xff]
  %v1970 = vld [vmem:[%s8 + $0x438] sm:$0xff]
  %v1971 = vld [vmem:[%s8 + $0x440] sm:$0xff]
  %v1972 = vld [vmem:[%s8 + $0x448] sm:$0xff]
  %v1973 = vld [vmem:[%s8 + $0x450] sm:$0xff]
  %v1974 = vld [vmem:[%s8 + $0x458] sm:$0xff]
  %v1975 = vld [vmem:[%s8 + $0x460] sm:$0xff]
  %v1976 = vld [vmem:[%s8 + $0x468] sm:$0xff]
  %v1977 = vld [vmem:[%s8 + $0x470] sm:$0xff]
  %v1978 = vld [vmem:[%s8 + $0x478] sm:$0xff]
  %v1979 = vld [vmem:[%s8 + $0x480] sm:$0xff]
  %v1980 = vld [vmem:[%s8 + $0x488] sm:$0xff]
  %v1981 = vld [vmem:[%s8 + $0x490] sm:$0xff]
  %v1982 = vld [vmem:[%s8 + $0x498] sm:$0xff]
  %v1983 = vld [vmem:[%s8 + $0x4a0] sm:$0xff]
  %v1984 = vld [vmem:[%s8 + $0x4a8] sm:$0xff]
  %v1985 = vld [vmem:[%s8 + $0x4b0] sm:$0xff]
  %v1986 = vld [vmem:[%s8 + $0x4b8] sm:$0xff]
  %v1987 = vld [vmem:[%s8 + $0x4c0] sm:$0xff]
  %v1988 = vld [vmem:[%s8 + $0x4c8] sm:$0xff]
  %v1989 = vld [vmem:[%s8 + $0x4d0] sm:$0xff]
  %v1990 = vld [vmem:[%s8 + $0x4d8] sm:$0xff]
  %v1991 = vld [vmem:[%s8 + $0x4e0] sm:$0xff]
  %v1992 = vld [vmem:[%s8 + $0x4e8] sm:$0xff]
  %v1993 = vld [vmem:[%s8 + $0x4f0] sm:$0xff]
  %v1994 = vld [vmem:[%s8 + $0x4f8] sm:$0xff]
  %s1995 = scalar_lea.vmem %s10, 5
  %v1996 = vld [vmem:[%s1995] ss:$8 sm:$0x3]
  %s1997 = scalar_lea.vmem %s10, 6
  %v1998 = vld [vmem:[%s1997] ss:$8 sm:$0x3]
  %s1999 = scalar_lea.vmem %s10, 7
  %v2000 = vld [vmem:[%s1999] ss:$8 sm:$0x3]
  %v2001 = vpack.c.bf16 %v1957, %v1955
  %v2002 = vpack.c.bf16 %v1958, %v1956
  %v2003 = vpack.c.bf16 %v1961, %v1959
  %v2004 = vpack.c.bf16 %v1962, %v1960
  %v2006 = vlaneseq
  %v2007 = vshrl.u32 %v2006, 7
  %v2008 = vsub.s32 0, %v2007
  %v2009 = vrot.slane %v1996, %v2008
  %v2010 = vlaneseq
  %v2011 = vshrl.u32 %v2010, 7
  %v2012 = vsub.s32 1, %v2011
  %v2013 = vrot.slane %v1996, %v2012
  %v2048 = vunpack.c.l.b16 %v1963
  %v2049 = vunpack.c.h.b16 %v1963
  %v2050 = vunpack.c.l.b16 %v1964
  %v2051 = vunpack.c.h.b16 %v1964
  %v2052 = vunpack.c.l.b16 %v1965
  %v2053 = vunpack.c.h.b16 %v1965
  %v2054 = vunpack.c.l.b16 %v1966
  %v2055 = vunpack.c.h.b16 %v1966
  %v2056 = vunpack.c.l.b16 %v1967
  %v2057 = vunpack.c.h.b16 %v1967
  %v2058 = vunpack.c.l.b16 %v1968
  %v2059 = vunpack.c.h.b16 %v1968
  %v2060 = vunpack.c.l.b16 %v1969
  %v2061 = vunpack.c.h.b16 %v1969
  %v2062 = vunpack.c.l.b16 %v1970
  %v2063 = vunpack.c.h.b16 %v1970
  %v2064 = vunpack.c.l.b16 %v1971
  %v2065 = vunpack.c.h.b16 %v1971
  %v2066 = vunpack.c.l.b16 %v1972
  %v2067 = vunpack.c.h.b16 %v1972
  %v2068 = vunpack.c.l.b16 %v1973
  %v2069 = vunpack.c.h.b16 %v1973
  %v2070 = vunpack.c.l.b16 %v1974
  %v2071 = vunpack.c.h.b16 %v1974
  %v2072 = vunpack.c.l.b16 %v1975
  %v2073 = vunpack.c.h.b16 %v1975
  %v2074 = vunpack.c.l.b16 %v1976
  %v2075 = vunpack.c.h.b16 %v1976
  %v2076 = vunpack.c.l.b16 %v1977
  %v2077 = vunpack.c.h.b16 %v1977
  %v2078 = vunpack.c.l.b16 %v1978
  %v2079 = vunpack.c.h.b16 %v1978
  %v2080 = vunpack.c.l.b16 %v1979
  %v2081 = vunpack.c.h.b16 %v1979
  %v2082 = vunpack.c.l.b16 %v1980
  %v2083 = vunpack.c.h.b16 %v1980
  %v2084 = vunpack.c.l.b16 %v1981
  %v2085 = vunpack.c.h.b16 %v1981
  %v2086 = vunpack.c.l.b16 %v1982
  %v2087 = vunpack.c.h.b16 %v1982
  %v2088 = vunpack.c.l.b16 %v1983
  %v2089 = vunpack.c.h.b16 %v1983
  %v2090 = vunpack.c.l.b16 %v1984
  %v2091 = vunpack.c.h.b16 %v1984
  %v2092 = vunpack.c.l.b16 %v1985
  %v2093 = vunpack.c.h.b16 %v1985
  %v2094 = vunpack.c.l.b16 %v1986
  %v2095 = vunpack.c.h.b16 %v1986
  %v2096 = vunpack.c.l.b16 %v1987
  %v2097 = vunpack.c.h.b16 %v1987
  %v2098 = vunpack.c.l.b16 %v1988
  %v2099 = vunpack.c.h.b16 %v1988
  %v2100 = vunpack.c.l.b16 %v1989
  %v2101 = vunpack.c.h.b16 %v1989
  %v2102 = vunpack.c.l.b16 %v1990
  %v2103 = vunpack.c.h.b16 %v1990
  %v2104 = vunpack.c.l.b16 %v1991
  %v2105 = vunpack.c.h.b16 %v1991
  %v2106 = vunpack.c.l.b16 %v1992
  %v2107 = vunpack.c.h.b16 %v1992
  %v2108 = vunpack.c.l.b16 %v1993
  %v2109 = vunpack.c.h.b16 %v1993
  %v2110 = vunpack.c.l.b16 %v1994
  %v2111 = vunpack.c.h.b16 %v1994
  %v2112 = vpack.c.b16 %v2050, %v2048
  %v2113 = vpack.c.b16 %v2051, %v2049
  %v2114 = vpack.c.b16 %v2054, %v2052
  %v2115 = vpack.c.b16 %v2055, %v2053
  %v2116 = vpack.c.b16 %v2058, %v2056
  %v2117 = vpack.c.b16 %v2059, %v2057
  %v2118 = vpack.c.b16 %v2062, %v2060
  %v2119 = vpack.c.b16 %v2063, %v2061
  %v2120 = vpack.c.b16 %v2066, %v2064
  %v2121 = vpack.c.b16 %v2067, %v2065
  %v2122 = vpack.c.b16 %v2070, %v2068
  %v2123 = vpack.c.b16 %v2071, %v2069
  %v2124 = vpack.c.b16 %v2074, %v2072
  %v2125 = vpack.c.b16 %v2075, %v2073
  %v2126 = vpack.c.b16 %v2078, %v2076
  %v2127 = vpack.c.b16 %v2079, %v2077
  %v2128 = vpack.c.b16 %v2082, %v2080
  %v2129 = vpack.c.b16 %v2083, %v2081
  %v2130 = vpack.c.b16 %v2086, %v2084
  %v2131 = vpack.c.b16 %v2087, %v2085
  %v2132 = vpack.c.b16 %v2090, %v2088
  %v2133 = vpack.c.b16 %v2091, %v2089
  %v2134 = vpack.c.b16 %v2094, %v2092
  %v2135 = vpack.c.b16 %v2095, %v2093
  %v2136 = vpack.c.b16 %v2098, %v2096
  %v2137 = vpack.c.b16 %v2099, %v2097
  %v2138 = vpack.c.b16 %v2102, %v2100
  %v2139 = vpack.c.b16 %v2103, %v2101
  %v2140 = vpack.c.b16 %v2106, %v2104
  %v2141 = vpack.c.b16 %v2107, %v2105
  %v2142 = vpack.c.b16 %v2110, %v2108
  %v2143 = vpack.c.b16 %v2111, %v2109
  %2176 = vmatprep.subr.bf16.mxu0 %v2113
  %2177 = vmatpush1.bf16.msra.mxu0 %v2112
  %2178 = vmatprep.subr.bf16.mxu0 %v2115
  %2179 = vmatpush1.bf16.msra.mxu0 %v2114
  %2180 = vmatprep.subr.bf16.mxu0 %v2117
  %2181 = vmatpush1.bf16.msra.mxu0 %v2116
  %2182 = vmatprep.subr.bf16.mxu0 %v2119
  %2183 = vmatpush1.bf16.msra.mxu0 %v2118
  %2184 = vmatprep.subr.bf16.mxu0 %v2121
  %2185 = vmatpush1.bf16.msra.mxu0 %v2120
  %2186 = vmatprep.subr.bf16.mxu0 %v2123
  %2187 = vmatpush1.bf16.msra.mxu0 %v2122
  %2188 = vmatprep.subr.bf16.mxu0 %v2125
  %2189 = vmatpush1.bf16.msra.mxu0 %v2124
  %2190 = vmatprep.subr.bf16.mxu0 %v2127
  %2191 = vmatpush1.bf16.msra.mxu0 %v2126
  %2192 = vmatprep.subr.bf16.mxu0 %v2129
  %2193 = vmatpush1.bf16.msra.mxu0 %v2128
  %2194 = vmatprep.subr.bf16.mxu0 %v2131
  %2195 = vmatpush1.bf16.msra.mxu0 %v2130
  %2196 = vmatprep.subr.bf16.mxu0 %v2133
  %2197 = vmatpush1.bf16.msra.mxu0 %v2132
  %2198 = vmatprep.subr.bf16.mxu0 %v2135
  %2199 = vmatpush1.bf16.msra.mxu0 %v2134
  %2200 = vmatprep.subr.bf16.mxu0 %v2137
  %2201 = vmatpush1.bf16.msra.mxu0 %v2136
  %2202 = vmatprep.subr.bf16.mxu0 %v2139
  %2203 = vmatpush1.bf16.msra.mxu0 %v2138
  %2204 = vmatprep.subr.bf16.mxu0 %v2141
  %2205 = vmatpush1.bf16.msra.mxu0 %v2140
  %2206 = vmatprep.subr.bf16.mxu0 %v2143
  %2207 = vmatpush1.bf16.msra.mxu0 %v2142
  %2208 = vmatprep.mubr.bf16.mxu0 %v2002
  %2209 = vmatmul.mubr.bf16.gmra.mrb[0].mxu0 %v2001
  %v2210 = vpop.f32.mrb[0].mxu0
  %v2211 = vadd.f32 %v2009, %v2210
  %v2212 = vpop.f32.mrb[0].mxu0
  %v2213 = vadd.f32 %v2013, %v2212
  %v2214 = vpop.f32.mrb[0].mxu0
  %v2215 = vadd.f32 %v2009, %v2214
  %v2216 = vpop.f32.mrb[0].mxu0
  %v2217 = vadd.f32 %v2013, %v2216
  %2218 = vmatprep.mubr.bf16.mxu0 %v2004
  %2219 = vmatmul.mubr.bf16.gmra.mrb[0].mxu0 %v2003
  %v2220 = vpop.f32.mrb[0].mxu0
  %v2221 = vadd.f32 %v2009, %v2220
  %v2222 = vpop.f32.mrb[0].mxu0
  %v2223 = vadd.f32 %v2013, %v2222
  %v2224 = vpop.f32.mrb[0].mxu0
  %v2225 = vadd.f32 %v2009, %v2224
  %v2226 = vpop.f32.mrb[0].mxu0
  %v2227 = vadd.f32 %v2013, %v2226
  %2228 = vdwg.mxu0
  %v2229 = vadd.f32 %v2211, %v2215
  %v2230 = vadd.f32 %v2229, %v2221
  %v2231 = vadd.f32 %v2230, %v2225
  %v2232 = vrot.slane %v2231, 4
  %v2233 = vadd.f32 %v2231, %v2232
  %v2234 = vrot.slane %v2233, 2
  %v2235 = vadd.f32 %v2233, %v2234
  %v2236 = vrot.slane %v2235, 1
  %v2237 = vadd.f32 %v2235, %v2236
  %v2238 = vadd.f32 %v2213, %v2217
  %v2239 = vadd.f32 %v2238, %v2223
  %v2240 = vadd.f32 %v2239, %v2227
  %v2241 = vrot.slane %v2240, 4
  %v2242 = vadd.f32 %v2240, %v2241
  %v2243 = vrot.slane %v2242, 2
  %v2244 = vadd.f32 %v2242, %v2243
  %v2245 = vrot.slane %v2244, 1
  %v2246 = vadd.f32 %v2244, %v2245
  %v2247 = vmul.f32 %v2237, %v1866
  %v2248 = vmul.f32 %v2246, %v1866
  %v2249 = vsub.f32 %v2211, %v2247
  %v2250 = vsub.f32 %v2213, %v2248
  %v2251 = vsub.f32 %v2215, %v2247
  %v2252 = vsub.f32 %v2217, %v2248
  %v2253 = vsub.f32 %v2221, %v2247
  %v2254 = vsub.f32 %v2223, %v2248
  %v2255 = vsub.f32 %v2225, %v2247
  %v2256 = vsub.f32 %v2227, %v2248
  %v2257 = vmul.f32 %v2249, %v2249
  %v2258 = vmul.f32 %v2250, %v2250
  %v2259 = vmul.f32 %v2251, %v2251
  %v2260 = vmul.f32 %v2252, %v2252
  %v2261 = vmul.f32 %v2253, %v2253
  %v2262 = vmul.f32 %v2254, %v2254
  %v2263 = vmul.f32 %v2255, %v2255
  %v2264 = vmul.f32 %v2256, %v2256
  %v2265 = vadd.f32 %v2257, %v2259
  %v2266 = vadd.f32 %v2265, %v2261
  %v2267 = vadd.f32 %v2266, %v2263
  %v2268 = vrot.slane %v2267, 4
  %v2269 = vadd.f32 %v2267, %v2268
  %v2270 = vrot.slane %v2269, 2
  %v2271 = vadd.f32 %v2269, %v2270
  %v2272 = vrot.slane %v2271, 1
  %v2273 = vadd.f32 %v2271, %v2272
  %v2274 = vadd.f32 %v2258, %v2260
  %v2275 = vadd.f32 %v2274, %v2262
  %v2276 = vadd.f32 %v2275, %v2264
  %v2277 = vrot.slane %v2276, 4
  %v2278 = vadd.f32 %v2276, %v2277
  %v2279 = vrot.slane %v2278, 2
  %v2280 = vadd.f32 %v2278, %v2279
  %v2281 = vrot.slane %v2280, 1
  %v2282 = vadd.f32 %v2280, %v2281
  %v2283 = vmul.f32 %v2273, %v1866
  %v2284 = vmul.f32 %v2282, %v1866
  %v2286 = vlaneseq
  %v2287 = vshrl.u32 %v2286, 7
  %v2288 = vsub.s32 0, %v2287
  %v2289 = vrot.slane %v1998, %v2288
  %v2290 = vlaneseq
  %v2291 = vshrl.u32 %v2290, 7
  %v2292 = vsub.s32 1, %v2291
  %v2293 = vrot.slane %v1998, %v2292
  %v2296 = vmul.f32 %v2289, %v2249
  %v2297 = vmul.f32 %v2293, %v2250
  %v2298 = vmul.f32 %v2289, %v2251
  %v2299 = vmul.f32 %v2293, %v2252
  %v2300 = vmul.f32 %v2289, %v2253
  %v2301 = vmul.f32 %v2293, %v2254
  %v2302 = vmul.f32 %v2289, %v2255
  %v2303 = vmul.f32 %v2293, %v2256
  %v2304 = vadd.f32 %v2283, 1e-05
  %v2305 = vadd.f32 %v2284, 1e-05
  %v2306 = vrsqrt.pop %v2304
  %v2307 = vrsqrt.pop %v2305
  %v2308 = vmul.f32 %v2296, %v2306
  %v2309 = vmul.f32 %v2297, %v2307
  %v2310 = vmul.f32 %v2298, %v2306
  %v2311 = vmul.f32 %v2299, %v2307
  %v2312 = vmul.f32 %v2300, %v2306
  %v2313 = vmul.f32 %v2301, %v2307
  %v2314 = vmul.f32 %v2302, %v2306
  %v2315 = vmul.f32 %v2303, %v2307
  %v2317 = vlaneseq
  %v2318 = vshrl.u32 %v2317, 7
  %v2319 = vsub.s32 0, %v2318
  %v2320 = vrot.slane %v2000, %v2319
  %v2321 = vlaneseq
  %v2322 = vshrl.u32 %v2321, 7
  %v2323 = vsub.s32 1, %v2322
  %v2324 = vrot.slane %v2000, %v2323
  %v2327 = vadd.f32 %v2308, %v2320
  %v2328 = vadd.f32 %v2309, %v2324
  %v2329 = vadd.f32 %v2310, %v2320
  %v2330 = vadd.f32 %v2311, %v2324
  %v2331 = vadd.f32 %v2312, %v2320
  %v2332 = vadd.f32 %v2313, %v2324
  %v2333 = vadd.f32 %v2314, %v2320
  %v2334 = vadd.f32 %v2315, %v2324
  %v2335 = vmax.f32 %v2327, 0.0
  %v2336 = vmax.f32 %v2328, 0.0
  %v2337 = vmax.f32 %v2329, 0.0
  %v2338 = vmax.f32 %v2330, 0.0
  %v2339 = vmax.f32 %v2331, 0.0
  %v2340 = vmax.f32 %v2332, 0.0
  %v2341 = vmax.f32 %v2333, 0.0
  %v2342 = vmax.f32 %v2334, 0.0
  %v2343 = vld [vmem:[%s8 + $0x500] sm:$0xff]
  %v2344 = vld [vmem:[%s8 + $0x508] sm:$0xff]
  %v2345 = vld [vmem:[%s8 + $0x510] sm:$0xff]
  %v2346 = vld [vmem:[%s8 + $0x518] sm:$0xff]
  %v2347 = vld [vmem:[%s8 + $0x520] sm:$0xff]
  %v2348 = vld [vmem:[%s8 + $0x528] sm:$0xff]
  %v2349 = vld [vmem:[%s8 + $0x530] sm:$0xff]
  %v2350 = vld [vmem:[%s8 + $0x538] sm:$0xff]
  %v2351 = vld [vmem:[%s8 + $0x540] sm:$0xff]
  %v2352 = vld [vmem:[%s8 + $0x548] sm:$0xff]
  %v2353 = vld [vmem:[%s8 + $0x550] sm:$0xff]
  %v2354 = vld [vmem:[%s8 + $0x558] sm:$0xff]
  %v2355 = vld [vmem:[%s8 + $0x560] sm:$0xff]
  %v2356 = vld [vmem:[%s8 + $0x568] sm:$0xff]
  %v2357 = vld [vmem:[%s8 + $0x570] sm:$0xff]
  %v2358 = vld [vmem:[%s8 + $0x578] sm:$0xff]
  %v2359 = vld [vmem:[%s8 + $0x580] sm:$0xff]
  %v2360 = vld [vmem:[%s8 + $0x588] sm:$0xff]
  %v2361 = vld [vmem:[%s8 + $0x590] sm:$0xff]
  %v2362 = vld [vmem:[%s8 + $0x598] sm:$0xff]
  %v2363 = vld [vmem:[%s8 + $0x5a0] sm:$0xff]
  %v2364 = vld [vmem:[%s8 + $0x5a8] sm:$0xff]
  %v2365 = vld [vmem:[%s8 + $0x5b0] sm:$0xff]
  %v2366 = vld [vmem:[%s8 + $0x5b8] sm:$0xff]
  %v2367 = vld [vmem:[%s8 + $0x5c0] sm:$0xff]
  %v2368 = vld [vmem:[%s8 + $0x5c8] sm:$0xff]
  %v2369 = vld [vmem:[%s8 + $0x5d0] sm:$0xff]
  %v2370 = vld [vmem:[%s8 + $0x5d8] sm:$0xff]
  %v2371 = vld [vmem:[%s8 + $0x5e0] sm:$0xff]
  %v2372 = vld [vmem:[%s8 + $0x5e8] sm:$0xff]
  %v2373 = vld [vmem:[%s8 + $0x5f0] sm:$0xff]
  %v2374 = vld [vmem:[%s8 + $0x5f8] sm:$0xff]
  %s2375 = scalar_lea.vmem %s10, 16
  %v2376 = vld [vmem:[%s2375] ss:$8 sm:$0x3]
  %s2377 = scalar_lea.vmem %s10, 17
  %v2378 = vld [vmem:[%s2377] ss:$8 sm:$0x3]
  %s2379 = scalar_lea.vmem %s10, 18
  %v2380 = vld [vmem:[%s2379] ss:$8 sm:$0x3]
  %v2381 = vpack.c.bf16 %v2337, %v2335
  %v2382 = vpack.c.bf16 %v2338, %v2336
  %v2383 = vpack.c.bf16 %v2341, %v2339
  %v2384 = vpack.c.bf16 %v2342, %v2340
  %v2386 = vlaneseq
  %v2387 = vshrl.u32 %v2386, 7
  %v2388 = vsub.s32 0, %v2387
  %v2389 = vrot.slane %v2376, %v2388
  %v2390 = vlaneseq
  %v2391 = vshrl.u32 %v2390, 7
  %v2392 = vsub.s32 1, %v2391
  %v2393 = vrot.slane %v2376, %v2392
  %v2428 = vunpack.c.l.b16 %v2343
  %v2429 = vunpack.c.h.b16 %v2343
  %v2430 = vunpack.c.l.b16 %v2344
  %v2431 = vunpack.c.h.b16 %v2344
  %v2432 = vunpack.c.l.b16 %v2345
  %v2433 = vunpack.c.h.b16 %v2345
  %v2434 = vunpack.c.l.b16 %v2346
  %v2435 = vunpack.c.h.b16 %v2346
  %v2436 = vunpack.c.l.b16 %v2347
  %v2437 = vunpack.c.h.b16 %v2347
  %v2438 = vunpack.c.l.b16 %v2348
  %v2439 = vunpack.c.h.b16 %v2348
  %v2440 = vunpack.c.l.b16 %v2349
  %v2441 = vunpack.c.h.b16 %v2349
  %v2442 = vunpack.c.l.b16 %v2350
  %v2443 = vunpack.c.h.b16 %v2350
  %v2444 = vunpack.c.l.b16 %v2351
  %v2445 = vunpack.c.h.b16 %v2351
  %v2446 = vunpack.c.l.b16 %v2352
  %v2447 = vunpack.c.h.b16 %v2352
  %v2448 = vunpack.c.l.b16 %v2353
  %v2449 = vunpack.c.h.b16 %v2353
  %v2450 = vunpack.c.l.b16 %v2354
  %v2451 = vunpack.c.h.b16 %v2354
  %v2452 = vunpack.c.l.b16 %v2355
  %v2453 = vunpack.c.h.b16 %v2355
  %v2454 = vunpack.c.l.b16 %v2356
  %v2455 = vunpack.c.h.b16 %v2356
  %v2456 = vunpack.c.l.b16 %v2357
  %v2457 = vunpack.c.h.b16 %v2357
  %v2458 = vunpack.c.l.b16 %v2358
  %v2459 = vunpack.c.h.b16 %v2358
  %v2460 = vunpack.c.l.b16 %v2359
  %v2461 = vunpack.c.h.b16 %v2359
  %v2462 = vunpack.c.l.b16 %v2360
  %v2463 = vunpack.c.h.b16 %v2360
  %v2464 = vunpack.c.l.b16 %v2361
  %v2465 = vunpack.c.h.b16 %v2361
  %v2466 = vunpack.c.l.b16 %v2362
  %v2467 = vunpack.c.h.b16 %v2362
  %v2468 = vunpack.c.l.b16 %v2363
  %v2469 = vunpack.c.h.b16 %v2363
  %v2470 = vunpack.c.l.b16 %v2364
  %v2471 = vunpack.c.h.b16 %v2364
  %v2472 = vunpack.c.l.b16 %v2365
  %v2473 = vunpack.c.h.b16 %v2365
  %v2474 = vunpack.c.l.b16 %v2366
  %v2475 = vunpack.c.h.b16 %v2366
  %v2476 = vunpack.c.l.b16 %v2367
  %v2477 = vunpack.c.h.b16 %v2367
  %v2478 = vunpack.c.l.b16 %v2368
  %v2479 = vunpack.c.h.b16 %v2368
  %v2480 = vunpack.c.l.b16 %v2369
  %v2481 = vunpack.c.h.b16 %v2369
  %v2482 = vunpack.c.l.b16 %v2370
  %v2483 = vunpack.c.h.b16 %v2370
  %v2484 = vunpack.c.l.b16 %v2371
  %v2485 = vunpack.c.h.b16 %v2371
  %v2486 = vunpack.c.l.b16 %v2372
  %v2487 = vunpack.c.h.b16 %v2372
  %v2488 = vunpack.c.l.b16 %v2373
  %v2489 = vunpack.c.h.b16 %v2373
  %v2490 = vunpack.c.l.b16 %v2374
  %v2491 = vunpack.c.h.b16 %v2374
  %v2492 = vpack.c.b16 %v2430, %v2428
  %v2493 = vpack.c.b16 %v2431, %v2429
  %v2494 = vpack.c.b16 %v2434, %v2432
  %v2495 = vpack.c.b16 %v2435, %v2433
  %v2496 = vpack.c.b16 %v2438, %v2436
  %v2497 = vpack.c.b16 %v2439, %v2437
  %v2498 = vpack.c.b16 %v2442, %v2440
  %v2499 = vpack.c.b16 %v2443, %v2441
  %v2500 = vpack.c.b16 %v2446, %v2444
  %v2501 = vpack.c.b16 %v2447, %v2445
  %v2502 = vpack.c.b16 %v2450, %v2448
  %v2503 = vpack.c.b16 %v2451, %v2449
  %v2504 = vpack.c.b16 %v2454, %v2452
  %v2505 = vpack.c.b16 %v2455, %v2453
  %v2506 = vpack.c.b16 %v2458, %v2456
  %v2507 = vpack.c.b16 %v2459, %v2457
  %v2508 = vpack.c.b16 %v2462, %v2460
  %v2509 = vpack.c.b16 %v2463, %v2461
  %v2510 = vpack.c.b16 %v2466, %v2464
  %v2511 = vpack.c.b16 %v2467, %v2465
  %v2512 = vpack.c.b16 %v2470, %v2468
  %v2513 = vpack.c.b16 %v2471, %v2469
  %v2514 = vpack.c.b16 %v2474, %v2472
  %v2515 = vpack.c.b16 %v2475, %v2473
  %v2516 = vpack.c.b16 %v2478, %v2476
  %v2517 = vpack.c.b16 %v2479, %v2477
  %v2518 = vpack.c.b16 %v2482, %v2480
  %v2519 = vpack.c.b16 %v2483, %v2481
  %v2520 = vpack.c.b16 %v2486, %v2484
  %v2521 = vpack.c.b16 %v2487, %v2485
  %v2522 = vpack.c.b16 %v2490, %v2488
  %v2523 = vpack.c.b16 %v2491, %v2489
  %2556 = vmatprep.subr.bf16.mxu0 %v2493
  %2557 = vmatpush1.bf16.msra.mxu0 %v2492
  %2558 = vmatprep.subr.bf16.mxu0 %v2495
  %2559 = vmatpush1.bf16.msra.mxu0 %v2494
  %2560 = vmatprep.subr.bf16.mxu0 %v2497
  %2561 = vmatpush1.bf16.msra.mxu0 %v2496
  %2562 = vmatprep.subr.bf16.mxu0 %v2499
  %2563 = vmatpush1.bf16.msra.mxu0 %v2498
  %2564 = vmatprep.subr.bf16.mxu0 %v2501
  %2565 = vmatpush1.bf16.msra.mxu0 %v2500
  %2566 = vmatprep.subr.bf16.mxu0 %v2503
  %2567 = vmatpush1.bf16.msra.mxu0 %v2502
  %2568 = vmatprep.subr.bf16.mxu0 %v2505
  %2569 = vmatpush1.bf16.msra.mxu0 %v2504
  %2570 = vmatprep.subr.bf16.mxu0 %v2507
  %2571 = vmatpush1.bf16.msra.mxu0 %v2506
  %2572 = vmatprep.subr.bf16.mxu0 %v2509
  %2573 = vmatpush1.bf16.msra.mxu0 %v2508
  %2574 = vmatprep.subr.bf16.mxu0 %v2511
  %2575 = vmatpush1.bf16.msra.mxu0 %v2510
  %2576 = vmatprep.subr.bf16.mxu0 %v2513
  %2577 = vmatpush1.bf16.msra.mxu0 %v2512
  %2578 = vmatprep.subr.bf16.mxu0 %v2515
  %2579 = vmatpush1.bf16.msra.mxu0 %v2514
  %2580 = vmatprep.subr.bf16.mxu0 %v2517
  %2581 = vmatpush1.bf16.msra.mxu0 %v2516
  %2582 = vmatprep.subr.bf16.mxu0 %v2519
  %2583 = vmatpush1.bf16.msra.mxu0 %v2518
  %2584 = vmatprep.subr.bf16.mxu0 %v2521
  %2585 = vmatpush1.bf16.msra.mxu0 %v2520
  %2586 = vmatprep.subr.bf16.mxu0 %v2523
  %2587 = vmatpush1.bf16.msra.mxu0 %v2522
  %2588 = vmatprep.mubr.bf16.mxu0 %v2382
  %2589 = vmatmul.mubr.bf16.gmra.mrb[0].mxu0 %v2381
  %v2590 = vpop.f32.mrb[0].mxu0
  %v2591 = vadd.f32 %v2389, %v2590
  %v2592 = vpop.f32.mrb[0].mxu0
  %v2593 = vadd.f32 %v2393, %v2592
  %v2594 = vpop.f32.mrb[0].mxu0
  %v2595 = vadd.f32 %v2389, %v2594
  %v2596 = vpop.f32.mrb[0].mxu0
  %v2597 = vadd.f32 %v2393, %v2596
  %2598 = vmatprep.mubr.bf16.mxu0 %v2384
  %2599 = vmatmul.mubr.bf16.gmra.mrb[0].mxu0 %v2383
  %v2600 = vpop.f32.mrb[0].mxu0
  %v2601 = vadd.f32 %v2389, %v2600
  %v2602 = vpop.f32.mrb[0].mxu0
  %v2603 = vadd.f32 %v2393, %v2602
  %v2604 = vpop.f32.mrb[0].mxu0
  %v2605 = vadd.f32 %v2389, %v2604
  %v2606 = vpop.f32.mrb[0].mxu0
  %v2607 = vadd.f32 %v2393, %v2606
  %2608 = vdwg.mxu0
  %v2609 = vadd.f32 %v2591, %v2595
  %v2610 = vadd.f32 %v2609, %v2601
  %v2611 = vadd.f32 %v2610, %v2605
  %v2612 = vrot.slane %v2611, 4
  %v2613 = vadd.f32 %v2611, %v2612
  %v2614 = vrot.slane %v2613, 2
  %v2615 = vadd.f32 %v2613, %v2614
  %v2616 = vrot.slane %v2615, 1
  %v2617 = vadd.f32 %v2615, %v2616
  %v2618 = vadd.f32 %v2593, %v2597
  %v2619 = vadd.f32 %v2618, %v2603
  %v2620 = vadd.f32 %v2619, %v2607
  %v2621 = vrot.slane %v2620, 4
  %v2622 = vadd.f32 %v2620, %v2621
  %v2623 = vrot.slane %v2622, 2
  %v2624 = vadd.f32 %v2622, %v2623
  %v2625 = vrot.slane %v2624, 1
  %v2626 = vadd.f32 %v2624, %v2625
  %v2627 = vmul.f32 %v2617, %v1866
  %v2628 = vmul.f32 %v2626, %v1866
  %v2629 = vsub.f32 %v2591, %v2627
  %v2630 = vsub.f32 %v2593, %v2628
  %v2631 = vsub.f32 %v2595, %v2627
  %v2632 = vsub.f32 %v2597, %v2628
  %v2633 = vsub.f32 %v2601, %v2627
  %v2634 = vsub.f32 %v2603, %v2628
  %v2635 = vsub.f32 %v2605, %v2627
  %v2636 = vsub.f32 %v2607, %v2628
  %v2637 = vmul.f32 %v2629, %v2629
  %v2638 = vmul.f32 %v2630, %v2630
  %v2639 = vmul.f32 %v2631, %v2631
  %v2640 = vmul.f32 %v2632, %v2632
  %v2641 = vmul.f32 %v2633, %v2633
  %v2642 = vmul.f32 %v2634, %v2634
  %v2643 = vmul.f32 %v2635, %v2635
  %v2644 = vmul.f32 %v2636, %v2636
  %v2645 = vadd.f32 %v2637, %v2639
  %v2646 = vadd.f32 %v2645, %v2641
  %v2647 = vadd.f32 %v2646, %v2643
  %v2648 = vrot.slane %v2647, 4
  %v2649 = vadd.f32 %v2647, %v2648
  %v2650 = vrot.slane %v2649, 2
  %v2651 = vadd.f32 %v2649, %v2650
  %v2652 = vrot.slane %v2651, 1
  %v2653 = vadd.f32 %v2651, %v2652
  %v2654 = vadd.f32 %v2638, %v2640
  %v2655 = vadd.f32 %v2654, %v2642
  %v2656 = vadd.f32 %v2655, %v2644
  %v2657 = vrot.slane %v2656, 4
  %v2658 = vadd.f32 %v2656, %v2657
  %v2659 = vrot.slane %v2658, 2
  %v2660 = vadd.f32 %v2658, %v2659
  %v2661 = vrot.slane %v2660, 1
  %v2662 = vadd.f32 %v2660, %v2661
  %v2663 = vmul.f32 %v2653, %v1866
  %v2664 = vmul.f32 %v2662, %v1866
  %v2666 = vlaneseq
  %v2667 = vshrl.u32 %v2666, 7
  %v2668 = vsub.s32 0, %v2667
  %v2669 = vrot.slane %v2378, %v2668
  %v2670 = vlaneseq
  %v2671 = vshrl.u32 %v2670, 7
  %v2672 = vsub.s32 1, %v2671
  %v2673 = vrot.slane %v2378, %v2672
  %v2676 = vmul.f32 %v2669, %v2629
  %v2677 = vmul.f32 %v2673, %v2630
  %v2678 = vmul.f32 %v2669, %v2631
  %v2679 = vmul.f32 %v2673, %v2632
  %v2680 = vmul.f32 %v2669, %v2633
  %v2681 = vmul.f32 %v2673, %v2634
  %v2682 = vmul.f32 %v2669, %v2635
  %v2683 = vmul.f32 %v2673, %v2636
  %v2684 = vadd.f32 %v2663, 1e-05
  %v2685 = vadd.f32 %v2664, 1e-05
  %v2686 = vrsqrt.pop %v2684
  %v2687 = vrsqrt.pop %v2685
  %v2688 = vmul.f32 %v2676, %v2686
  %v2689 = vmul.f32 %v2677, %v2687
  %v2690 = vmul.f32 %v2678, %v2686
  %v2691 = vmul.f32 %v2679, %v2687
  %v2692 = vmul.f32 %v2680, %v2686
  %v2693 = vmul.f32 %v2681, %v2687
  %v2694 = vmul.f32 %v2682, %v2686
  %v2695 = vmul.f32 %v2683, %v2687
  %v2697 = vlaneseq
  %v2698 = vshrl.u32 %v2697, 7
  %v2699 = vsub.s32 0, %v2698
  %v2700 = vrot.slane %v2380, %v2699
  %v2701 = vlaneseq
  %v2702 = vshrl.u32 %v2701, 7
  %v2703 = vsub.s32 1, %v2702
  %v2704 = vrot.slane %v2380, %v2703
  %v2707 = vadd.f32 %v2688, %v2700
  %v2708 = vadd.f32 %v2689, %v2704
  %v2709 = vadd.f32 %v2690, %v2700
  %v2710 = vadd.f32 %v2691, %v2704
  %v2711 = vadd.f32 %v2692, %v2700
  %v2712 = vadd.f32 %v2693, %v2704
  %v2713 = vadd.f32 %v2694, %v2700
  %v2714 = vadd.f32 %v2695, %v2704
  %v2715 = vmax.f32 %v2707, 0.0
  %v2716 = vmax.f32 %v2708, 0.0
  %v2717 = vmax.f32 %v2709, 0.0
  %v2718 = vmax.f32 %v2710, 0.0
  %v2719 = vmax.f32 %v2711, 0.0
  %v2720 = vmax.f32 %v2712, 0.0
  %v2721 = vmax.f32 %v2713, 0.0
  %v2722 = vmax.f32 %v2714, 0.0
  %2723 = vst [vmem:[%s12] sm:$0xff] %v2715
  %2724 = vst [vmem:[%s12 + $0x8] sm:$0xff] %v2716
  %2725 = vst [vmem:[%s12 + $0x10] sm:$0xff] %v2717
  %2726 = vst [vmem:[%s12 + $0x18] sm:$0xff] %v2718
  %2727 = vst [vmem:[%s12 + $0x20] sm:$0xff] %v2719
  %2728 = vst [vmem:[%s12 + $0x28] sm:$0xff] %v2720
  %2729 = vst [vmem:[%s12 + $0x30] sm:$0xff] %v2721
  %2730 = vst [vmem:[%s12 + $0x38] sm:$0xff] %v2722
  %v2731 = vpack.c.bf16 %v2717, %v2715
  %v2732 = vpack.c.bf16 %v2718, %v2716
  %v2733 = vpack.c.bf16 %v2721, %v2719
  %v2734 = vpack.c.bf16 %v2722, %v2720
  %v2735 = vld [vmem:[%s6] sm:$0x7]
  %v2737 = vsel %vm711, %v2735, 0
  %2739 = vmatprep.subr.bf16.mxu0 %v2732
  %2740 = vmatpush1.bf16.msra.mxu0 %v2731
  %2741 = vmatprep.subr.bf16.mxu0 %v2734
  %2742 = vmatpush1.bf16.msra.mxu0 %v2733
  %2743 = vmatprep.subr.bf16.mxu0 0
  %2744 = vmatpush1.bf16.msra.mxu0 0
  %2745 = vmatprep.subr.bf16.mxu0 0
  %2746 = vmatpush1.bf16.msra.mxu0 0
  %2747 = vmatprep.subr.bf16.mxu0 0
  %2748 = vmatpush1.bf16.msra.mxu0 0
  %2749 = vmatprep.subr.bf16.mxu0 0
  %2750 = vmatpush1.bf16.msra.mxu0 0
  %2751 = vmatprep.subr.bf16.mxu0 0
  %2752 = vmatpush1.bf16.msra.mxu0 0
  %2753 = vmatprep.subr.bf16.mxu0 0
  %2754 = vmatpush1.bf16.msra.mxu0 0
  %2755 = vmatprep.subr.bf16.mxu0 0
  %2756 = vmatpush1.bf16.msra.mxu0 0
  %2757 = vmatprep.subr.bf16.mxu0 0
  %2758 = vmatpush1.bf16.msra.mxu0 0
  %2759 = vmatprep.subr.bf16.mxu0 0
  %2760 = vmatpush1.bf16.msra.mxu0 0
  %2761 = vmatprep.subr.bf16.mxu0 0
  %2762 = vmatpush1.bf16.msra.mxu0 0
  %2763 = vmatprep.subr.bf16.mxu0 0
  %2764 = vmatpush1.bf16.msra.mxu0 0
  %2765 = vmatprep.subr.bf16.mxu0 0
  %2766 = vmatpush1.bf16.msra.mxu0 0
  %2767 = vmatprep.subr.bf16.mxu0 0
  %2768 = vmatpush1.bf16.msra.mxu0 0
  %2769 = vmatprep.subr.bf16.mxu0 0
  %2770 = vmatpush1.bf16.msra.mxu0 0
  %2771 = vmatprep.mubr.bf16.mxu0 0
  %2772 = vmatmul.mubr.bf16.gmra.mrb[0].mxu0 %v2737
  %v2773 = vpop.f32.mrb[0].mxu0
  %v2774 = vadd.f32 0.0, %v2773
  %v2775 = vpop.f32.mrb[0].mxu0
  %v2776 = vadd.f32 0.0, %v2775
  %v2777 = vpop.f32.mrb[0].mxu0
  %v2778 = vpop.f32.mrb[0].mxu0
  %2779 = vdwg.mxu0
  %v2780 = vld [vmem:[%s4] sm:$0xf]
  %v2781 = vld [vmem:[%s4 + $0x4] sm:$0xf]
  %v2782 = vpack.c.bf16 %v2774, %v2774
  %v2783 = vpack.c.bf16 %v2776, %v2776
  %v2786 = vunpack.c.l.b16 %v2780
  %v2787 = vunpack.c.l.b16 %v2781
  %v2788 = vpack.c.b16 %v2787, %v2786
  %v2790 = vsel %vm772, %v2788, 0
  %v2793 = vsel %vm779, %v2782, 0
  %v2796 = vsel %vm779, %v2783, 0
  %2798 = vmatprep.subr.bf16.mxu0 %v2796
  %2799 = vmatpush1.bf16.msra.mxu0 %v2793
  %2800 = vmatprep.subr.bf16.mxu0 0
  %2801 = vmatpush1.bf16.msra.mxu0 0
  %2802 = vmatprep.subr.bf16.mxu0 0
  %2803 = vmatpush1.bf16.msra.mxu0 0
  %2804 = vmatprep.subr.bf16.mxu0 0
  %2805 = vmatpush1.bf16.msra.mxu0 0
  %2806 = vmatprep.subr.bf16.mxu0 0
  %2807 = vmatpush1.bf16.msra.mxu0 0
  %2808 = vmatprep.subr.bf16.mxu0 0
  %2809 = vmatpush1.bf16.msra.mxu0 0
  %2810 = vmatprep.subr.bf16.mxu0 0
  %2811 = vmatpush1.bf16.msra.mxu0 0
  %2812 = vmatprep.subr.bf16.mxu0 0
  %2813 = vmatpush1.bf16.msra.mxu0 0
  %2814 = vmatprep.subr.bf16.mxu0 0
  %2815 = vmatpush1.bf16.msra.mxu0 0
  %2816 = vmatprep.subr.bf16.mxu0 0
  %2817 = vmatpush1.bf16.msra.mxu0 0
  %2818 = vmatprep.subr.bf16.mxu0 0
  %2819 = vmatpush1.bf16.msra.mxu0 0
  %2820 = vmatprep.subr.bf16.mxu0 0
  %2821 = vmatpush1.bf16.msra.mxu0 0
  %2822 = vmatprep.subr.bf16.mxu0 0
  %2823 = vmatpush1.bf16.msra.mxu0 0
  %2824 = vmatprep.subr.bf16.mxu0 0
  %2825 = vmatpush1.bf16.msra.mxu0 0
  %2826 = vmatprep.subr.bf16.mxu0 0
  %2827 = vmatpush1.bf16.msra.mxu0 0
  %2828 = vmatprep.subr.bf16.mxu0 0
  %2829 = vmatpush1.bf16.msra.mxu0 0
  %2830 = vmatprep.mubr.bf16.mxu0 0
  %2831 = vmatmul.mubr.bf16.gmra.mrb[0].mxu0 %v2790
  %v2832 = vpop.f32.mrb[0].mxu0
  %v2833 = vadd.f32 0.0, %v2832
  %v2834 = vpop.f32.mrb[0].mxu0
  %v2835 = vadd.f32 0.0, %v2834
  %v2836 = vpop.f32.mrb[0].mxu0
  %v2837 = vadd.f32 0.0, %v2836
  %v2838 = vpop.f32.mrb[0].mxu0
  %v2839 = vadd.f32 0.0, %v2838
  %2840 = vdwg.mxu0
  %v2841 = vld [vmem:[%s3] sm:$0xf]
  %v2842 = vld [vmem:[%s3 + $0x4] sm:$0xf]
  %v2845 = vunpack.c.l.b16 %v2841
  %v2846 = vunpack.c.l.b16 %v2842
  %v2847 = vpack.c.b16 %v2846, %v2845
  %v2849 = vsel %vm711, %v2847, 0
  %2851 = vmatprep.subr.bf16.mxu0 %v2732
  %2852 = vmatpush1.bf16.msra.mxu0 %v2731
  %2853 = vmatprep.subr.bf16.mxu0 %v2734
  %2854 = vmatpush1.bf16.msra.mxu0 %v2733
  %2855 = vmatprep.subr.bf16.mxu0 0
  %2856 = vmatpush1.bf16.msra.mxu0 0
  %2857 = vmatprep.subr.bf16.mxu0 0
  %2858 = vmatpush1.bf16.msra.mxu0 0
  %2859 = vmatprep.subr.bf16.mxu0 0
  %2860 = vmatpush1.bf16.msra.mxu0 0
  %2861 = vmatprep.subr.bf16.mxu0 0
  %2862 = vmatpush1.bf16.msra.mxu0 0
  %2863 = vmatprep.subr.bf16.mxu0 0
  %2864 = vmatpush1.bf16.msra.mxu0 0
  %2865 = vmatprep.subr.bf16.mxu0 0
  %2866 = vmatpush1.bf16.msra.mxu0 0
  %2867 = vmatprep.subr.bf16.mxu0 0
  %2868 = vmatpush1.bf16.msra.mxu0 0
  %2869 = vmatprep.subr.bf16.mxu0 0
  %2870 = vmatpush1.bf16.msra.mxu0 0
  %2871 = vmatprep.subr.bf16.mxu0 0
  %2872 = vmatpush1.bf16.msra.mxu0 0
  %2873 = vmatprep.subr.bf16.mxu0 0
  %2874 = vmatpush1.bf16.msra.mxu0 0
  %2875 = vmatprep.subr.bf16.mxu0 0
  %2876 = vmatpush1.bf16.msra.mxu0 0
  %2877 = vmatprep.subr.bf16.mxu0 0
  %2878 = vmatpush1.bf16.msra.mxu0 0
  %2879 = vmatprep.subr.bf16.mxu0 0
  %2880 = vmatpush1.bf16.msra.mxu0 0
  %2881 = vmatprep.subr.bf16.mxu0 0
  %2882 = vmatpush1.bf16.msra.mxu0 0
  %2883 = vmatprep.mubr.bf16.mxu0 0
  %2884 = vmatmul.mubr.bf16.gmra.mrb[0].mxu0 %v2849
  %v2885 = vpop.f32.mrb[0].mxu0
  %v2886 = vadd.f32 0.0, %v2885
  %v2887 = vpop.f32.mrb[0].mxu0
  %v2888 = vadd.f32 0.0, %v2887
  %v2889 = vpop.f32.mrb[0].mxu0
  %v2890 = vadd.f32 0.0, %v2889
  %v2891 = vpop.f32.mrb[0].mxu0
  %v2892 = vadd.f32 0.0, %v2891
  %2893 = vdwg.mxu0
  %v2894 = vld [vmem:[%s9] sm:$0xff]
  %v2895 = vld [vmem:[%s9 + $0x8] sm:$0xff]
  %v2896 = vld [vmem:[%s9 + $0x10] sm:$0xff]
  %v2897 = vld [vmem:[%s9 + $0x18] sm:$0xff]
  %v2898 = vld [vmem:[%s9 + $0x20] sm:$0xff]
  %v2899 = vld [vmem:[%s9 + $0x28] sm:$0xff]
  %v2900 = vld [vmem:[%s9 + $0x30] sm:$0xff]
  %v2901 = vld [vmem:[%s9 + $0x38] sm:$0xff]
  %v2902 = vld [vmem:[%s9 + $0x40] sm:$0xff]
  %v2903 = vld [vmem:[%s9 + $0x48] sm:$0xff]
  %v2904 = vld [vmem:[%s9 + $0x50] sm:$0xff]
  %v2905 = vld [vmem:[%s9 + $0x58] sm:$0xff]
  %v2906 = vld [vmem:[%s9 + $0x60] sm:$0xff]
  %v2907 = vld [vmem:[%s9 + $0x68] sm:$0xff]
  %v2908 = vld [vmem:[%s9 + $0x70] sm:$0xff]
  %v2909 = vld [vmem:[%s9 + $0x78] sm:$0xff]
  %v2910 = vld [vmem:[%s9 + $0x80] sm:$0xff]
  %v2911 = vld [vmem:[%s9 + $0x88] sm:$0xff]
  %v2912 = vld [vmem:[%s9 + $0x90] sm:$0xff]
  %v2913 = vld [vmem:[%s9 + $0x98] sm:$0xff]
  %v2914 = vld [vmem:[%s9 + $0xa0] sm:$0xff]
  %v2915 = vld [vmem:[%s9 + $0xa8] sm:$0xff]
  %v2916 = vld [vmem:[%s9 + $0xb0] sm:$0xff]
  %v2917 = vld [vmem:[%s9 + $0xb8] sm:$0xff]
  %v2918 = vld [vmem:[%s9 + $0xc0] sm:$0xff]
  %v2919 = vld [vmem:[%s9 + $0xc8] sm:$0xff]
  %v2920 = vld [vmem:[%s9 + $0xd0] sm:$0xff]
  %v2921 = vld [vmem:[%s9 + $0xd8] sm:$0xff]
  %v2922 = vld [vmem:[%s9 + $0xe0] sm:$0xff]
  %v2923 = vld [vmem:[%s9 + $0xe8] sm:$0xff]
  %v2924 = vld [vmem:[%s9 + $0xf0] sm:$0xff]
  %v2925 = vld [vmem:[%s9 + $0xf8] sm:$0xff]
  %v2926 = vld [vmem:[%s9 + $0x100] sm:$0xff]
  %v2927 = vld [vmem:[%s9 + $0x108] sm:$0xff]
  %v2928 = vld [vmem:[%s9 + $0x110] sm:$0xff]
  %v2929 = vld [vmem:[%s9 + $0x118] sm:$0xff]
  %v2930 = vld [vmem:[%s9 + $0x120] sm:$0xff]
  %v2931 = vld [vmem:[%s9 + $0x128] sm:$0xff]
  %v2932 = vld [vmem:[%s9 + $0x130] sm:$0xff]
  %v2933 = vld [vmem:[%s9 + $0x138] sm:$0xff]
  %v2934 = vld [vmem:[%s9 + $0x140] sm:$0xff]
  %v2935 = vld [vmem:[%s9 + $0x148] sm:$0xff]
  %v2936 = vld [vmem:[%s9 + $0x150] sm:$0xff]
  %v2937 = vld [vmem:[%s9 + $0x158] sm:$0xff]
  %v2938 = vld [vmem:[%s9 + $0x160] sm:$0xff]
  %v2939 = vld [vmem:[%s9 + $0x168] sm:$0xff]
  %v2940 = vld [vmem:[%s9 + $0x170] sm:$0xff]
  %v2941 = vld [vmem:[%s9 + $0x178] sm:$0xff]
  %v2942 = vld [vmem:[%s9 + $0x180] sm:$0xff]
  %v2943 = vld [vmem:[%s9 + $0x188] sm:$0xff]
  %v2944 = vld [vmem:[%s9 + $0x190] sm:$0xff]
  %v2945 = vld [vmem:[%s9 + $0x198] sm:$0xff]
  %v2946 = vld [vmem:[%s9 + $0x1a0] sm:$0xff]
  %v2947 = vld [vmem:[%s9 + $0x1a8] sm:$0xff]
  %v2948 = vld [vmem:[%s9 + $0x1b0] sm:$0xff]
  %v2949 = vld [vmem:[%s9 + $0x1b8] sm:$0xff]
  %v2950 = vld [vmem:[%s9 + $0x1c0] sm:$0xff]
  %v2951 = vld [vmem:[%s9 + $0x1c8] sm:$0xff]
  %v2952 = vld [vmem:[%s9 + $0x1d0] sm:$0xff]
  %v2953 = vld [vmem:[%s9 + $0x1d8] sm:$0xff]
  %v2954 = vld [vmem:[%s9 + $0x1e0] sm:$0xff]
  %v2955 = vld [vmem:[%s9 + $0x1e8] sm:$0xff]
  %v2956 = vld [vmem:[%s9 + $0x1f0] sm:$0xff]
  %v2957 = vld [vmem:[%s9 + $0x1f8] sm:$0xff]
  %v2958 = vld [vmem:[%s9 + $0x200] sm:$0xff]
  %v2959 = vld [vmem:[%s9 + $0x208] sm:$0xff]
  %v2960 = vld [vmem:[%s9 + $0x210] sm:$0xff]
  %v2961 = vld [vmem:[%s9 + $0x218] sm:$0xff]
  %v2962 = vld [vmem:[%s9 + $0x220] sm:$0xff]
  %v2963 = vld [vmem:[%s9 + $0x228] sm:$0xff]
  %v2964 = vld [vmem:[%s9 + $0x230] sm:$0xff]
  %v2965 = vld [vmem:[%s9 + $0x238] sm:$0xff]
  %v2966 = vld [vmem:[%s9 + $0x240] sm:$0xff]
  %v2967 = vld [vmem:[%s9 + $0x248] sm:$0xff]
  %v2968 = vld [vmem:[%s9 + $0x250] sm:$0xff]
  %v2969 = vld [vmem:[%s9 + $0x258] sm:$0xff]
  %v2970 = vld [vmem:[%s9 + $0x260] sm:$0xff]
  %v2971 = vld [vmem:[%s9 + $0x268] sm:$0xff]
  %v2972 = vld [vmem:[%s9 + $0x270] sm:$0xff]
  %v2973 = vld [vmem:[%s9 + $0x278] sm:$0xff]
  %v2974 = vld [vmem:[%s9 + $0x280] sm:$0xff]
  %v2975 = vld [vmem:[%s9 + $0x288] sm:$0xff]
  %v2976 = vld [vmem:[%s9 + $0x290] sm:$0xff]
  %v2977 = vld [vmem:[%s9 + $0x298] sm:$0xff]
  %v2978 = vld [vmem:[%s9 + $0x2a0] sm:$0xff]
  %v2979 = vld [vmem:[%s9 + $0x2a8] sm:$0xff]
  %v2980 = vld [vmem:[%s9 + $0x2b0] sm:$0xff]
  %v2981 = vld [vmem:[%s9 + $0x2b8] sm:$0xff]
  %v2982 = vld [vmem:[%s9 + $0x2c0] sm:$0xff]
  %v2983 = vld [vmem:[%s9 + $0x2c8] sm:$0xff]
  %v2984 = vld [vmem:[%s9 + $0x2d0] sm:$0xff]
  %v2985 = vld [vmem:[%s9 + $0x2d8] sm:$0xff]
  %v2986 = vld [vmem:[%s9 + $0x2e0] sm:$0xff]
  %v2987 = vld [vmem:[%s9 + $0x2e8] sm:$0xff]
  %v2988 = vld [vmem:[%s9 + $0x2f0] sm:$0xff]
  %v2989 = vld [vmem:[%s9 + $0x2f8] sm:$0xff]
  %s2990 = scalar_lea.vmem %s10, 19
  %v2991 = vld [vmem:[%s2990] ss:$8 sm:$0x3]
  %s2992 = scalar_lea.vmem %s10, 20
  %v2993 = vld [vmem:[%s2992] ss:$8 sm:$0x3]
  %s2994 = scalar_lea.vmem %s10, 21
  %v2995 = vld [vmem:[%s2994] ss:$8 sm:$0x3]
  %v2996 = vpack.c.bf16 %v2837, %v2833
  %v2997 = vpack.c.bf16 %v2839, %v2835
  %v2998 = vpack.c.bf16 %v2890, %v2886
  %v2999 = vpack.c.bf16 %v2892, %v2888
  %v3001 = vlaneseq
  %v3002 = vshrl.u32 %v3001, 7
  %v3003 = vsub.s32 0, %v3002
  %v3004 = vrot.slane %v2991, %v3003
  %v3005 = vlaneseq
  %v3006 = vshrl.u32 %v3005, 7
  %v3007 = vsub.s32 1, %v3006
  %v3008 = vrot.slane %v2991, %v3007
  %v3107 = vunpack.c.l.b16 %v2894
  %v3108 = vunpack.c.h.b16 %v2894
  %v3109 = vunpack.c.l.b16 %v2895
  %v3110 = vunpack.c.h.b16 %v2895
  %v3111 = vunpack.c.l.b16 %v2896
  %v3112 = vunpack.c.h.b16 %v2896
  %v3113 = vunpack.c.l.b16 %v2897
  %v3114 = vunpack.c.h.b16 %v2897
  %v3115 = vunpack.c.l.b16 %v2898
  %v3116 = vunpack.c.h.b16 %v2898
  %v3117 = vunpack.c.l.b16 %v2899
  %v3118 = vunpack.c.h.b16 %v2899
  %v3119 = vunpack.c.l.b16 %v2900
  %v3120 = vunpack.c.h.b16 %v2900
  %v3121 = vunpack.c.l.b16 %v2901
  %v3122 = vunpack.c.h.b16 %v2901
  %v3123 = vunpack.c.l.b16 %v2902
  %v3124 = vunpack.c.h.b16 %v2902
  %v3125 = vunpack.c.l.b16 %v2903
  %v3126 = vunpack.c.h.b16 %v2903
  %v3127 = vunpack.c.l.b16 %v2904
  %v3128 = vunpack.c.h.b16 %v2904
  %v3129 = vunpack.c.l.b16 %v2905
  %v3130 = vunpack.c.h.b16 %v2905
  %v3131 = vunpack.c.l.b16 %v2906
  %v3132 = vunpack.c.h.b16 %v2906
  %v3133 = vunpack.c.l.b16 %v2907
  %v3134 = vunpack.c.h.b16 %v2907
  %v3135 = vunpack.c.l.b16 %v2908
  %v3136 = vunpack.c.h.b16 %v2908
  %v3137 = vunpack.c.l.b16 %v2909
  %v3138 = vunpack.c.h.b16 %v2909
  %v3139 = vunpack.c.l.b16 %v2910
  %v3140 = vunpack.c.h.b16 %v2910
  %v3141 = vunpack.c.l.b16 %v2911
  %v3142 = vunpack.c.h.b16 %v2911
  %v3143 = vunpack.c.l.b16 %v2912
  %v3144 = vunpack.c.h.b16 %v2912
  %v3145 = vunpack.c.l.b16 %v2913
  %v3146 = vunpack.c.h.b16 %v2913
  %v3147 = vunpack.c.l.b16 %v2914
  %v3148 = vunpack.c.h.b16 %v2914
  %v3149 = vunpack.c.l.b16 %v2915
  %v3150 = vunpack.c.h.b16 %v2915
  %v3151 = vunpack.c.l.b16 %v2916
  %v3152 = vunpack.c.h.b16 %v2916
  %v3153 = vunpack.c.l.b16 %v2917
  %v3154 = vunpack.c.h.b16 %v2917
  %v3155 = vunpack.c.l.b16 %v2918
  %v3156 = vunpack.c.h.b16 %v2918
  %v3157 = vunpack.c.l.b16 %v2919
  %v3158 = vunpack.c.h.b16 %v2919
  %v3159 = vunpack.c.l.b16 %v2920
  %v3160 = vunpack.c.h.b16 %v2920
  %v3161 = vunpack.c.l.b16 %v2921
  %v3162 = vunpack.c.h.b16 %v2921
  %v3163 = vunpack.c.l.b16 %v2922
  %v3164 = vunpack.c.h.b16 %v2922
  %v3165 = vunpack.c.l.b16 %v2923
  %v3166 = vunpack.c.h.b16 %v2923
  %v3167 = vunpack.c.l.b16 %v2924
  %v3168 = vunpack.c.h.b16 %v2924
  %v3169 = vunpack.c.l.b16 %v2925
  %v3170 = vunpack.c.h.b16 %v2925
  %v3171 = vunpack.c.l.b16 %v2926
  %v3172 = vunpack.c.h.b16 %v2926
  %v3173 = vunpack.c.l.b16 %v2927
  %v3174 = vunpack.c.h.b16 %v2927
  %v3175 = vunpack.c.l.b16 %v2928
  %v3176 = vunpack.c.h.b16 %v2928
  %v3177 = vunpack.c.l.b16 %v2929
  %v3178 = vunpack.c.h.b16 %v2929
  %v3179 = vunpack.c.l.b16 %v2930
  %v3180 = vunpack.c.h.b16 %v2930
  %v3181 = vunpack.c.l.b16 %v2931
  %v3182 = vunpack.c.h.b16 %v2931
  %v3183 = vunpack.c.l.b16 %v2932
  %v3184 = vunpack.c.h.b16 %v2932
  %v3185 = vunpack.c.l.b16 %v2933
  %v3186 = vunpack.c.h.b16 %v2933
  %v3187 = vunpack.c.l.b16 %v2934
  %v3188 = vunpack.c.h.b16 %v2934
  %v3189 = vunpack.c.l.b16 %v2935
  %v3190 = vunpack.c.h.b16 %v2935
  %v3191 = vunpack.c.l.b16 %v2936
  %v3192 = vunpack.c.h.b16 %v2936
  %v3193 = vunpack.c.l.b16 %v2937
  %v3194 = vunpack.c.h.b16 %v2937
  %v3195 = vunpack.c.l.b16 %v2938
  %v3196 = vunpack.c.h.b16 %v2938
  %v3197 = vunpack.c.l.b16 %v2939
  %v3198 = vunpack.c.h.b16 %v2939
  %v3199 = vunpack.c.l.b16 %v2940
  %v3200 = vunpack.c.h.b16 %v2940
  %v3201 = vunpack.c.l.b16 %v2941
  %v3202 = vunpack.c.h.b16 %v2941
  %v3203 = vunpack.c.l.b16 %v2942
  %v3204 = vunpack.c.h.b16 %v2942
  %v3205 = vunpack.c.l.b16 %v2943
  %v3206 = vunpack.c.h.b16 %v2943
  %v3207 = vunpack.c.l.b16 %v2944
  %v3208 = vunpack.c.h.b16 %v2944
  %v3209 = vunpack.c.l.b16 %v2945
  %v3210 = vunpack.c.h.b16 %v2945
  %v3211 = vunpack.c.l.b16 %v2946
  %v3212 = vunpack.c.h.b16 %v2946
  %v3213 = vunpack.c.l.b16 %v2947
  %v3214 = vunpack.c.h.b16 %v2947
  %v3215 = vunpack.c.l.b16 %v2948
  %v3216 = vunpack.c.h.b16 %v2948
  %v3217 = vunpack.c.l.b16 %v2949
  %v3218 = vunpack.c.h.b16 %v2949
  %v3219 = vunpack.c.l.b16 %v2950
  %v3220 = vunpack.c.h.b16 %v2950
  %v3221 = vunpack.c.l.b16 %v2951
  %v3222 = vunpack.c.h.b16 %v2951
  %v3223 = vunpack.c.l.b16 %v2952
  %v3224 = vunpack.c.h.b16 %v2952
  %v3225 = vunpack.c.l.b16 %v2953
  %v3226 = vunpack.c.h.b16 %v2953
  %v3227 = vunpack.c.l.b16 %v2954
  %v3228 = vunpack.c.h.b16 %v2954
  %v3229 = vunpack.c.l.b16 %v2955
  %v3230 = vunpack.c.h.b16 %v2955
  %v3231 = vunpack.c.l.b16 %v2956
  %v3232 = vunpack.c.h.b16 %v2956
  %v3233 = vunpack.c.l.b16 %v2957
  %v3234 = vunpack.c.h.b16 %v2957
  %v3235 = vunpack.c.l.b16 %v2958
  %v3236 = vunpack.c.h.b16 %v2958
  %v3237 = vunpack.c.l.b16 %v2959
  %v3238 = vunpack.c.h.b16 %v2959
  %v3239 = vunpack.c.l.b16 %v2960
  %v3240 = vunpack.c.h.b16 %v2960
  %v3241 = vunpack.c.l.b16 %v2961
  %v3242 = vunpack.c.h.b16 %v2961
  %v3243 = vunpack.c.l.b16 %v2962
  %v3244 = vunpack.c.h.b16 %v2962
  %v3245 = vunpack.c.l.b16 %v2963
  %v3246 = vunpack.c.h.b16 %v2963
  %v3247 = vunpack.c.l.b16 %v2964
  %v3248 = vunpack.c.h.b16 %v2964
  %v3249 = vunpack.c.l.b16 %v2965
  %v3250 = vunpack.c.h.b16 %v2965
  %v3251 = vunpack.c.l.b16 %v2966
  %v3252 = vunpack.c.h.b16 %v2966
  %v3253 = vunpack.c.l.b16 %v2967
  %v3254 = vunpack.c.h.b16 %v2967
  %v3255 = vunpack.c.l.b16 %v2968
  %v3256 = vunpack.c.h.b16 %v2968
  %v3257 = vunpack.c.l.b16 %v2969
  %v3258 = vunpack.c.h.b16 %v2969
  %v3259 = vunpack.c.l.b16 %v2970
  %v3260 = vunpack.c.h.b16 %v2970
  %v3261 = vunpack.c.l.b16 %v2971
  %v3262 = vunpack.c.h.b16 %v2971
  %v3263 = vunpack.c.l.b16 %v2972
  %v3264 = vunpack.c.h.b16 %v2972
  %v3265 = vunpack.c.l.b16 %v2973
  %v3266 = vunpack.c.h.b16 %v2973
  %v3267 = vunpack.c.l.b16 %v2974
  %v3268 = vunpack.c.h.b16 %v2974
  %v3269 = vunpack.c.l.b16 %v2975
  %v3270 = vunpack.c.h.b16 %v2975
  %v3271 = vunpack.c.l.b16 %v2976
  %v3272 = vunpack.c.h.b16 %v2976
  %v3273 = vunpack.c.l.b16 %v2977
  %v3274 = vunpack.c.h.b16 %v2977
  %v3275 = vunpack.c.l.b16 %v2978
  %v3276 = vunpack.c.h.b16 %v2978
  %v3277 = vunpack.c.l.b16 %v2979
  %v3278 = vunpack.c.h.b16 %v2979
  %v3279 = vunpack.c.l.b16 %v2980
  %v3280 = vunpack.c.h.b16 %v2980
  %v3281 = vunpack.c.l.b16 %v2981
  %v3282 = vunpack.c.h.b16 %v2981
  %v3283 = vunpack.c.l.b16 %v2982
  %v3284 = vunpack.c.h.b16 %v2982
  %v3285 = vunpack.c.l.b16 %v2983
  %v3286 = vunpack.c.h.b16 %v2983
  %v3287 = vunpack.c.l.b16 %v2984
  %v3288 = vunpack.c.h.b16 %v2984
  %v3289 = vunpack.c.l.b16 %v2985
  %v3290 = vunpack.c.h.b16 %v2985
  %v3291 = vunpack.c.l.b16 %v2986
  %v3292 = vunpack.c.h.b16 %v2986
  %v3293 = vunpack.c.l.b16 %v2987
  %v3294 = vunpack.c.h.b16 %v2987
  %v3295 = vunpack.c.l.b16 %v2988
  %v3296 = vunpack.c.h.b16 %v2988
  %v3297 = vunpack.c.l.b16 %v2989
  %v3298 = vunpack.c.h.b16 %v2989
  %v3299 = vpack.c.b16 %v3109, %v3107
  %v3300 = vpack.c.b16 %v3110, %v3108
  %v3301 = vpack.c.b16 %v3113, %v3111
  %v3302 = vpack.c.b16 %v3114, %v3112
  %v3303 = vpack.c.b16 %v3117, %v3115
  %v3304 = vpack.c.b16 %v3118, %v3116
  %v3305 = vpack.c.b16 %v3121, %v3119
  %v3306 = vpack.c.b16 %v3122, %v3120
  %v3307 = vpack.c.b16 %v3125, %v3123
  %v3308 = vpack.c.b16 %v3126, %v3124
  %v3309 = vpack.c.b16 %v3129, %v3127
  %v3310 = vpack.c.b16 %v3130, %v3128
  %v3311 = vpack.c.b16 %v3133, %v3131
  %v3312 = vpack.c.b16 %v3134, %v3132
  %v3313 = vpack.c.b16 %v3137, %v3135
  %v3314 = vpack.c.b16 %v3138, %v3136
  %v3315 = vpack.c.b16 %v3141, %v3139
  %v3316 = vpack.c.b16 %v3142, %v3140
  %v3317 = vpack.c.b16 %v3145, %v3143
  %v3318 = vpack.c.b16 %v3146, %v3144
  %v3319 = vpack.c.b16 %v3149, %v3147
  %v3320 = vpack.c.b16 %v3150, %v3148
  %v3321 = vpack.c.b16 %v3153, %v3151
  %v3322 = vpack.c.b16 %v3154, %v3152
  %v3323 = vpack.c.b16 %v3157, %v3155
  %v3324 = vpack.c.b16 %v3158, %v3156
  %v3325 = vpack.c.b16 %v3161, %v3159
  %v3326 = vpack.c.b16 %v3162, %v3160
  %v3327 = vpack.c.b16 %v3165, %v3163
  %v3328 = vpack.c.b16 %v3166, %v3164
  %v3329 = vpack.c.b16 %v3169, %v3167
  %v3330 = vpack.c.b16 %v3170, %v3168
  %v3331 = vpack.c.b16 %v3173, %v3171
  %v3332 = vpack.c.b16 %v3174, %v3172
  %v3333 = vpack.c.b16 %v3177, %v3175
  %v3334 = vpack.c.b16 %v3178, %v3176
  %v3335 = vpack.c.b16 %v3181, %v3179
  %v3336 = vpack.c.b16 %v3182, %v3180
  %v3337 = vpack.c.b16 %v3185, %v3183
  %v3338 = vpack.c.b16 %v3186, %v3184
  %v3339 = vpack.c.b16 %v3189, %v3187
  %v3340 = vpack.c.b16 %v3190, %v3188
  %v3341 = vpack.c.b16 %v3193, %v3191
  %v3342 = vpack.c.b16 %v3194, %v3192
  %v3343 = vpack.c.b16 %v3197, %v3195
  %v3344 = vpack.c.b16 %v3198, %v3196
  %v3345 = vpack.c.b16 %v3201, %v3199
  %v3346 = vpack.c.b16 %v3202, %v3200
  %v3347 = vpack.c.b16 %v3205, %v3203
  %v3348 = vpack.c.b16 %v3206, %v3204
  %v3349 = vpack.c.b16 %v3209, %v3207
  %v3350 = vpack.c.b16 %v3210, %v3208
  %v3351 = vpack.c.b16 %v3213, %v3211
  %v3352 = vpack.c.b16 %v3214, %v3212
  %v3353 = vpack.c.b16 %v3217, %v3215
  %v3354 = vpack.c.b16 %v3218, %v3216
  %v3355 = vpack.c.b16 %v3221, %v3219
  %v3356 = vpack.c.b16 %v3222, %v3220
  %v3357 = vpack.c.b16 %v3225, %v3223
  %v3358 = vpack.c.b16 %v3226, %v3224
  %v3359 = vpack.c.b16 %v3229, %v3227
  %v3360 = vpack.c.b16 %v3230, %v3228
  %v3361 = vpack.c.b16 %v3233, %v3231
  %v3362 = vpack.c.b16 %v3234, %v3232
  %v3363 = vpack.c.b16 %v3237, %v3235
  %v3364 = vpack.c.b16 %v3238, %v3236
  %v3365 = vpack.c.b16 %v3241, %v3239
  %v3366 = vpack.c.b16 %v3242, %v3240
  %v3367 = vpack.c.b16 %v3245, %v3243
  %v3368 = vpack.c.b16 %v3246, %v3244
  %v3369 = vpack.c.b16 %v3249, %v3247
  %v3370 = vpack.c.b16 %v3250, %v3248
  %v3371 = vpack.c.b16 %v3253, %v3251
  %v3372 = vpack.c.b16 %v3254, %v3252
  %v3373 = vpack.c.b16 %v3257, %v3255
  %v3374 = vpack.c.b16 %v3258, %v3256
  %v3375 = vpack.c.b16 %v3261, %v3259
  %v3376 = vpack.c.b16 %v3262, %v3260
  %v3377 = vpack.c.b16 %v3265, %v3263
  %v3378 = vpack.c.b16 %v3266, %v3264
  %v3379 = vpack.c.b16 %v3269, %v3267
  %v3380 = vpack.c.b16 %v3270, %v3268
  %v3381 = vpack.c.b16 %v3273, %v3271
  %v3382 = vpack.c.b16 %v3274, %v3272
  %v3383 = vpack.c.b16 %v3277, %v3275
  %v3384 = vpack.c.b16 %v3278, %v3276
  %v3385 = vpack.c.b16 %v3281, %v3279
  %v3386 = vpack.c.b16 %v3282, %v3280
  %v3387 = vpack.c.b16 %v3285, %v3283
  %v3388 = vpack.c.b16 %v3286, %v3284
  %v3389 = vpack.c.b16 %v3289, %v3287
  %v3390 = vpack.c.b16 %v3290, %v3288
  %v3391 = vpack.c.b16 %v3293, %v3291
  %v3392 = vpack.c.b16 %v3294, %v3292
  %v3393 = vpack.c.b16 %v3297, %v3295
  %v3394 = vpack.c.b16 %v3298, %v3296
  %3491 = vmatprep.subr.bf16.mxu0 %v3300
  %3492 = vmatpush1.bf16.msra.mxu0 %v3299
  %3493 = vmatprep.subr.bf16.mxu0 %v3302
  %3494 = vmatpush1.bf16.msra.mxu0 %v3301
  %3495 = vmatprep.subr.bf16.mxu0 %v3304
  %3496 = vmatpush1.bf16.msra.mxu0 %v3303
  %3497 = vmatprep.subr.bf16.mxu0 %v3306
  %3498 = vmatpush1.bf16.msra.mxu0 %v3305
  %3499 = vmatprep.subr.bf16.mxu0 %v3308
  %3500 = vmatpush1.bf16.msra.mxu0 %v3307
  %3501 = vmatprep.subr.bf16.mxu0 %v3310
  %3502 = vmatpush1.bf16.msra.mxu0 %v3309
  %3503 = vmatprep.subr.bf16.mxu0 %v3312
  %3504 = vmatpush1.bf16.msra.mxu0 %v3311
  %3505 = vmatprep.subr.bf16.mxu0 %v3314
  %3506 = vmatpush1.bf16.msra.mxu0 %v3313
  %3507 = vmatprep.subr.bf16.mxu0 %v3316
  %3508 = vmatpush1.bf16.msra.mxu0 %v3315
  %3509 = vmatprep.subr.bf16.mxu0 %v3318
  %3510 = vmatpush1.bf16.msra.mxu0 %v3317
  %3511 = vmatprep.subr.bf16.mxu0 %v3320
  %3512 = vmatpush1.bf16.msra.mxu0 %v3319
  %3513 = vmatprep.subr.bf16.mxu0 %v3322
  %3514 = vmatpush1.bf16.msra.mxu0 %v3321
  %3515 = vmatprep.subr.bf16.mxu0 %v3324
  %3516 = vmatpush1.bf16.msra.mxu0 %v3323
  %3517 = vmatprep.subr.bf16.mxu0 %v3326
  %3518 = vmatpush1.bf16.msra.mxu0 %v3325
  %3519 = vmatprep.subr.bf16.mxu0 %v3328
  %3520 = vmatpush1.bf16.msra.mxu0 %v3327
  %3521 = vmatprep.subr.bf16.mxu0 %v3330
  %3522 = vmatpush1.bf16.msra.mxu0 %v3329
  %3523 = vmatprep.mubr.bf16.mxu0 %v58
  %3524 = vmatmul.mubr.bf16.gmra.mrb[0].mxu0 %v57
  %v3525 = vpop.f32.mrb[0].mxu0
  %v3526 = vadd.f32 %v3004, %v3525
  %v3527 = vpop.f32.mrb[0].mxu0
  %v3528 = vadd.f32 %v3008, %v3527
  %v3529 = vpop.f32.mrb[0].mxu0
  %v3530 = vadd.f32 %v3004, %v3529
  %v3531 = vpop.f32.mrb[0].mxu0
  %v3532 = vadd.f32 %v3008, %v3531
  %3533 = vdwg.mxu0
  %3534 = vmatprep.subr.bf16.mxu0 %v3332
  %3535 = vmatpush1.bf16.msra.mxu0 %v3331
  %3536 = vmatprep.subr.bf16.mxu0 %v3334
  %3537 = vmatpush1.bf16.msra.mxu0 %v3333
  %3538 = vmatprep.subr.bf16.mxu0 %v3336
  %3539 = vmatpush1.bf16.msra.mxu0 %v3335
  %3540 = vmatprep.subr.bf16.mxu0 %v3338
  %3541 = vmatpush1.bf16.msra.mxu0 %v3337
  %3542 = vmatprep.subr.bf16.mxu0 %v3340
  %3543 = vmatpush1.bf16.msra.mxu0 %v3339
  %3544 = vmatprep.subr.bf16.mxu0 %v3342
  %3545 = vmatpush1.bf16.msra.mxu0 %v3341
  %3546 = vmatprep.subr.bf16.mxu0 %v3344
  %3547 = vmatpush1.bf16.msra.mxu0 %v3343
  %3548 = vmatprep.subr.bf16.mxu0 %v3346
  %3549 = vmatpush1.bf16.msra.mxu0 %v3345
  %3550 = vmatprep.subr.bf16.mxu0 %v3348
  %3551 = vmatpush1.bf16.msra.mxu0 %v3347
  %3552 = vmatprep.subr.bf16.mxu0 %v3350
  %3553 = vmatpush1.bf16.msra.mxu0 %v3349
  %3554 = vmatprep.subr.bf16.mxu0 %v3352
  %3555 = vmatpush1.bf16.msra.mxu0 %v3351
  %3556 = vmatprep.subr.bf16.mxu0 %v3354
  %3557 = vmatpush1.bf16.msra.mxu0 %v3353
  %3558 = vmatprep.subr.bf16.mxu0 %v3356
  %3559 = vmatpush1.bf16.msra.mxu0 %v3355
  %3560 = vmatprep.subr.bf16.mxu0 %v3358
  %3561 = vmatpush1.bf16.msra.mxu0 %v3357
  %3562 = vmatprep.subr.bf16.mxu0 %v3360
  %3563 = vmatpush1.bf16.msra.mxu0 %v3359
  %3564 = vmatprep.subr.bf16.mxu0 %v3362
  %3565 = vmatpush1.bf16.msra.mxu0 %v3361
  %3566 = vmatprep.mubr.bf16.mxu0 %v2997
  %3567 = vmatmul.mubr.bf16.gmra.mrb[0].mxu0 %v2996
  %v3568 = vpop.f32.mrb[0].mxu0
  %v3569 = vadd.f32 %v3526, %v3568
  %v3570 = vpop.f32.mrb[0].mxu0
  %v3571 = vadd.f32 %v3528, %v3570
  %v3572 = vpop.f32.mrb[0].mxu0
  %v3573 = vadd.f32 %v3530, %v3572
  %v3574 = vpop.f32.mrb[0].mxu0
  %v3575 = vadd.f32 %v3532, %v3574
  %3576 = vdwg.mxu0
  %3577 = vmatprep.subr.bf16.mxu0 %v3364
  %3578 = vmatpush1.bf16.msra.mxu0 %v3363
  %3579 = vmatprep.subr.bf16.mxu0 %v3366
  %3580 = vmatpush1.bf16.msra.mxu0 %v3365
  %3581 = vmatprep.subr.bf16.mxu0 %v3368
  %3582 = vmatpush1.bf16.msra.mxu0 %v3367
  %3583 = vmatprep.subr.bf16.mxu0 %v3370
  %3584 = vmatpush1.bf16.msra.mxu0 %v3369
  %3585 = vmatprep.subr.bf16.mxu0 %v3372
  %3586 = vmatpush1.bf16.msra.mxu0 %v3371
  %3587 = vmatprep.subr.bf16.mxu0 %v3374
  %3588 = vmatpush1.bf16.msra.mxu0 %v3373
  %3589 = vmatprep.subr.bf16.mxu0 %v3376
  %3590 = vmatpush1.bf16.msra.mxu0 %v3375
  %3591 = vmatprep.subr.bf16.mxu0 %v3378
  %3592 = vmatpush1.bf16.msra.mxu0 %v3377
  %3593 = vmatprep.subr.bf16.mxu0 %v3380
  %3594 = vmatpush1.bf16.msra.mxu0 %v3379
  %3595 = vmatprep.subr.bf16.mxu0 %v3382
  %3596 = vmatpush1.bf16.msra.mxu0 %v3381
  %3597 = vmatprep.subr.bf16.mxu0 %v3384
  %3598 = vmatpush1.bf16.msra.mxu0 %v3383
  %3599 = vmatprep.subr.bf16.mxu0 %v3386
  %3600 = vmatpush1.bf16.msra.mxu0 %v3385
  %3601 = vmatprep.subr.bf16.mxu0 %v3388
  %3602 = vmatpush1.bf16.msra.mxu0 %v3387
  %3603 = vmatprep.subr.bf16.mxu0 %v3390
  %3604 = vmatpush1.bf16.msra.mxu0 %v3389
  %3605 = vmatprep.subr.bf16.mxu0 %v3392
  %3606 = vmatpush1.bf16.msra.mxu0 %v3391
  %3607 = vmatprep.subr.bf16.mxu0 %v3394
  %3608 = vmatpush1.bf16.msra.mxu0 %v3393
  %3609 = vmatprep.mubr.bf16.mxu0 %v2999
  %3610 = vmatmul.mubr.bf16.gmra.mrb[0].mxu0 %v2998
  %v3611 = vpop.f32.mrb[0].mxu0
  %v3612 = vadd.f32 %v3569, %v3611
  %v3613 = vpop.f32.mrb[0].mxu0
  %v3614 = vadd.f32 %v3571, %v3613
  %v3615 = vpop.f32.mrb[0].mxu0
  %v3616 = vadd.f32 %v3573, %v3615
  %v3617 = vpop.f32.mrb[0].mxu0
  %v3618 = vadd.f32 %v3575, %v3617
  %3619 = vdwg.mxu0
  %v3620 = vadd.f32 %v3612, %v3616
  %v3621 = vrot.slane %v3620, 4
  %v3622 = vadd.f32 %v3620, %v3621
  %v3623 = vrot.slane %v3622, 2
  %v3624 = vadd.f32 %v3622, %v3623
  %v3625 = vrot.slane %v3624, 1
  %v3626 = vadd.f32 %v3624, %v3625
  %v3627 = vadd.f32 %v3614, %v3618
  %v3628 = vrot.slane %v3627, 4
  %v3629 = vadd.f32 %v3627, %v3628
  %v3630 = vrot.slane %v3629, 2
  %v3631 = vadd.f32 %v3629, %v3630
  %v3632 = vrot.slane %v3631, 1
  %v3633 = vadd.f32 %v3631, %v3632
  %v3634 = vrcp.pop 16.0
  %v3635 = vmul.f32 %v3626, %v3634
  %v3636 = vmul.f32 %v3633, %v3634
  %v3637 = vsub.f32 %v3612, %v3635
  %v3638 = vsub.f32 %v3614, %v3636
  %v3639 = vsub.f32 %v3616, %v3635
  %v3640 = vsub.f32 %v3618, %v3636
  %v3641 = vmul.f32 %v3637, %v3637
  %v3642 = vmul.f32 %v3638, %v3638
  %v3643 = vmul.f32 %v3639, %v3639
  %v3644 = vmul.f32 %v3640, %v3640
  %v3645 = vadd.f32 %v3641, %v3643
  %v3646 = vrot.slane %v3645, 4
  %v3647 = vadd.f32 %v3645, %v3646
  %v3648 = vrot.slane %v3647, 2
  %v3649 = vadd.f32 %v3647, %v3648
  %v3650 = vrot.slane %v3649, 1
  %v3651 = vadd.f32 %v3649, %v3650
  %v3652 = vadd.f32 %v3642, %v3644
  %v3653 = vrot.slane %v3652, 4
  %v3654 = vadd.f32 %v3652, %v3653
  %v3655 = vrot.slane %v3654, 2
  %v3656 = vadd.f32 %v3654, %v3655
  %v3657 = vrot.slane %v3656, 1
  %v3658 = vadd.f32 %v3656, %v3657
  %v3659 = vmul.f32 %v3651, %v3634
  %v3660 = vmul.f32 %v3658, %v3634
  %v3662 = vlaneseq
  %v3663 = vshrl.u32 %v3662, 7
  %v3664 = vsub.s32 0, %v3663
  %v3665 = vrot.slane %v2993, %v3664
  %v3666 = vlaneseq
  %v3667 = vshrl.u32 %v3666, 7
  %v3668 = vsub.s32 1, %v3667
  %v3669 = vrot.slane %v2993, %v3668
  %v3672 = vmul.f32 %v3665, %v3637
  %v3673 = vmul.f32 %v3669, %v3638
  %v3674 = vmul.f32 %v3665, %v3639
  %v3675 = vmul.f32 %v3669, %v3640
  %v3676 = vadd.f32 %v3659, 1e-05
  %v3677 = vadd.f32 %v3660, 1e-05
  %v3678 = vrsqrt.pop %v3676
  %v3679 = vrsqrt.pop %v3677
  %v3680 = vmul.f32 %v3672, %v3678
  %v3681 = vmul.f32 %v3673, %v3679
  %v3682 = vmul.f32 %v3674, %v3678
  %v3683 = vmul.f32 %v3675, %v3679
  %v3685 = vlaneseq
  %v3686 = vshrl.u32 %v3685, 7
  %v3687 = vsub.s32 0, %v3686
  %v3688 = vrot.slane %v2995, %v3687
  %v3689 = vlaneseq
  %v3690 = vshrl.u32 %v3689, 7
  %v3691 = vsub.s32 1, %v3690
  %v3692 = vrot.slane %v2995, %v3691
  %v3695 = vadd.f32 %v3680, %v3688
  %v3696 = vadd.f32 %v3681, %v3692
  %v3697 = vadd.f32 %v3682, %v3688
  %v3698 = vadd.f32 %v3683, %v3692
  %v3699 = vmax.f32 %v3695, 0.0
  %v3700 = vmax.f32 %v3696, 0.0
  %v3701 = vmax.f32 %v3697, 0.0
  %v3702 = vmax.f32 %v3698, 0.0
  %v3703 = vld [vmem:[%s9 + $0x300] sm:$0xff]
  %v3704 = vld [vmem:[%s9 + $0x308] sm:$0xff]
  %v3705 = vld [vmem:[%s9 + $0x310] sm:$0xff]
  %v3706 = vld [vmem:[%s9 + $0x318] sm:$0xff]
  %v3707 = vld [vmem:[%s9 + $0x320] sm:$0xff]
  %v3708 = vld [vmem:[%s9 + $0x328] sm:$0xff]
  %v3709 = vld [vmem:[%s9 + $0x330] sm:$0xff]
  %v3710 = vld [vmem:[%s9 + $0x338] sm:$0xff]
  %v3711 = vld [vmem:[%s9 + $0x340] sm:$0xff]
  %v3712 = vld [vmem:[%s9 + $0x348] sm:$0xff]
  %v3713 = vld [vmem:[%s9 + $0x350] sm:$0xff]
  %v3714 = vld [vmem:[%s9 + $0x358] sm:$0xff]
  %v3715 = vld [vmem:[%s9 + $0x360] sm:$0xff]
  %v3716 = vld [vmem:[%s9 + $0x368] sm:$0xff]
  %v3717 = vld [vmem:[%s9 + $0x370] sm:$0xff]
  %v3718 = vld [vmem:[%s9 + $0x378] sm:$0xff]
  %v3719 = vld [vmem:[%s9 + $0x380] sm:$0xff]
  %v3720 = vld [vmem:[%s9 + $0x388] sm:$0xff]
  %v3721 = vld [vmem:[%s9 + $0x390] sm:$0xff]
  %v3722 = vld [vmem:[%s9 + $0x398] sm:$0xff]
  %v3723 = vld [vmem:[%s9 + $0x3a0] sm:$0xff]
  %v3724 = vld [vmem:[%s9 + $0x3a8] sm:$0xff]
  %v3725 = vld [vmem:[%s9 + $0x3b0] sm:$0xff]
  %v3726 = vld [vmem:[%s9 + $0x3b8] sm:$0xff]
  %v3727 = vld [vmem:[%s9 + $0x3c0] sm:$0xff]
  %v3728 = vld [vmem:[%s9 + $0x3c8] sm:$0xff]
  %v3729 = vld [vmem:[%s9 + $0x3d0] sm:$0xff]
  %v3730 = vld [vmem:[%s9 + $0x3d8] sm:$0xff]
  %v3731 = vld [vmem:[%s9 + $0x3e0] sm:$0xff]
  %v3732 = vld [vmem:[%s9 + $0x3e8] sm:$0xff]
  %v3733 = vld [vmem:[%s9 + $0x3f0] sm:$0xff]
  %v3734 = vld [vmem:[%s9 + $0x3f8] sm:$0xff]
  %s3735 = scalar_lea.vmem %s10, 22
  %v3736 = vld [vmem:[%s3735] ss:$8 sm:$0x3]
  %s3737 = scalar_lea.vmem %s10, 23
  %v3738 = vld [vmem:[%s3737] ss:$8 sm:$0x3]
  %s3739 = scalar_lea.vmem %s10, 32
  %v3740 = vld [vmem:[%s3739] ss:$8 sm:$0x3]
  %v3741 = vpack.c.bf16 %v3701, %v3699
  %v3742 = vpack.c.bf16 %v3702, %v3700
  %v3744 = vlaneseq
  %v3745 = vshrl.u32 %v3744, 7
  %v3746 = vsub.s32 0, %v3745
  %v3747 = vrot.slane %v3736, %v3746
  %v3748 = vlaneseq
  %v3749 = vshrl.u32 %v3748, 7
  %v3750 = vsub.s32 1, %v3749
  %v3751 = vrot.slane %v3736, %v3750
  %v3786 = vunpack.c.l.b16 %v3703
  %v3787 = vunpack.c.h.b16 %v3703
  %v3788 = vunpack.c.l.b16 %v3704
  %v3789 = vunpack.c.h.b16 %v3704
  %v3790 = vunpack.c.l.b16 %v3705
  %v3791 = vunpack.c.h.b16 %v3705
  %v3792 = vunpack.c.l.b16 %v3706
  %v3793 = vunpack.c.h.b16 %v3706
  %v3794 = vunpack.c.l.b16 %v3707
  %v3795 = vunpack.c.h.b16 %v3707
  %v3796 = vunpack.c.l.b16 %v3708
  %v3797 = vunpack.c.h.b16 %v3708
  %v3798 = vunpack.c.l.b16 %v3709
  %v3799 = vunpack.c.h.b16 %v3709
  %v3800 = vunpack.c.l.b16 %v3710
  %v3801 = vunpack.c.h.b16 %v3710
  %v3802 = vunpack.c.l.b16 %v3711
  %v3803 = vunpack.c.h.b16 %v3711
  %v3804 = vunpack.c.l.b16 %v3712
  %v3805 = vunpack.c.h.b16 %v3712
  %v3806 = vunpack.c.l.b16 %v3713
  %v3807 = vunpack.c.h.b16 %v3713
  %v3808 = vunpack.c.l.b16 %v3714
  %v3809 = vunpack.c.h.b16 %v3714
  %v3810 = vunpack.c.l.b16 %v3715
  %v3811 = vunpack.c.h.b16 %v3715
  %v3812 = vunpack.c.l.b16 %v3716
  %v3813 = vunpack.c.h.b16 %v3716
  %v3814 = vunpack.c.l.b16 %v3717
  %v3815 = vunpack.c.h.b16 %v3717
  %v3816 = vunpack.c.l.b16 %v3718
  %v3817 = vunpack.c.h.b16 %v3718
  %v3818 = vunpack.c.l.b16 %v3719
  %v3819 = vunpack.c.h.b16 %v3719
  %v3820 = vunpack.c.l.b16 %v3720
  %v3821 = vunpack.c.h.b16 %v3720
  %v3822 = vunpack.c.l.b16 %v3721
  %v3823 = vunpack.c.h.b16 %v3721
  %v3824 = vunpack.c.l.b16 %v3722
  %v3825 = vunpack.c.h.b16 %v3722
  %v3826 = vunpack.c.l.b16 %v3723
  %v3827 = vunpack.c.h.b16 %v3723
  %v3828 = vunpack.c.l.b16 %v3724
  %v3829 = vunpack.c.h.b16 %v3724
  %v3830 = vunpack.c.l.b16 %v3725
  %v3831 = vunpack.c.h.b16 %v3725
  %v3832 = vunpack.c.l.b16 %v3726
  %v3833 = vunpack.c.h.b16 %v3726
  %v3834 = vunpack.c.l.b16 %v3727
  %v3835 = vunpack.c.h.b16 %v3727
  %v3836 = vunpack.c.l.b16 %v3728
  %v3837 = vunpack.c.h.b16 %v3728
  %v3838 = vunpack.c.l.b16 %v3729
  %v3839 = vunpack.c.h.b16 %v3729
  %v3840 = vunpack.c.l.b16 %v3730
  %v3841 = vunpack.c.h.b16 %v3730
  %v3842 = vunpack.c.l.b16 %v3731
  %v3843 = vunpack.c.h.b16 %v3731
  %v3844 = vunpack.c.l.b16 %v3732
  %v3845 = vunpack.c.h.b16 %v3732
  %v3846 = vunpack.c.l.b16 %v3733
  %v3847 = vunpack.c.h.b16 %v3733
  %v3848 = vunpack.c.l.b16 %v3734
  %v3849 = vunpack.c.h.b16 %v3734
  %v3850 = vpack.c.b16 %v3788, %v3786
  %v3851 = vpack.c.b16 %v3789, %v3787
  %v3852 = vpack.c.b16 %v3792, %v3790
  %v3853 = vpack.c.b16 %v3793, %v3791
  %v3854 = vpack.c.b16 %v3796, %v3794
  %v3855 = vpack.c.b16 %v3797, %v3795
  %v3856 = vpack.c.b16 %v3800, %v3798
  %v3857 = vpack.c.b16 %v3801, %v3799
  %v3858 = vpack.c.b16 %v3804, %v3802
  %v3859 = vpack.c.b16 %v3805, %v3803
  %v3860 = vpack.c.b16 %v3808, %v3806
  %v3861 = vpack.c.b16 %v3809, %v3807
  %v3862 = vpack.c.b16 %v3812, %v3810
  %v3863 = vpack.c.b16 %v3813, %v3811
  %v3864 = vpack.c.b16 %v3816, %v3814
  %v3865 = vpack.c.b16 %v3817, %v3815
  %v3866 = vpack.c.b16 %v3820, %v3818
  %v3867 = vpack.c.b16 %v3821, %v3819
  %v3868 = vpack.c.b16 %v3824, %v3822
  %v3869 = vpack.c.b16 %v3825, %v3823
  %v3870 = vpack.c.b16 %v3828, %v3826
  %v3871 = vpack.c.b16 %v3829, %v3827
  %v3872 = vpack.c.b16 %v3832, %v3830
  %v3873 = vpack.c.b16 %v3833, %v3831
  %v3874 = vpack.c.b16 %v3836, %v3834
  %v3875 = vpack.c.b16 %v3837, %v3835
  %v3876 = vpack.c.b16 %v3840, %v3838
  %v3877 = vpack.c.b16 %v3841, %v3839
  %v3878 = vpack.c.b16 %v3844, %v3842
  %v3879 = vpack.c.b16 %v3845, %v3843
  %v3880 = vpack.c.b16 %v3848, %v3846
  %v3881 = vpack.c.b16 %v3849, %v3847
  %3914 = vmatprep.subr.bf16.mxu0 %v3851
  %3915 = vmatpush1.bf16.msra.mxu0 %v3850
  %3916 = vmatprep.subr.bf16.mxu0 %v3853
  %3917 = vmatpush1.bf16.msra.mxu0 %v3852
  %3918 = vmatprep.subr.bf16.mxu0 %v3855
  %3919 = vmatpush1.bf16.msra.mxu0 %v3854
  %3920 = vmatprep.subr.bf16.mxu0 %v3857
  %3921 = vmatpush1.bf16.msra.mxu0 %v3856
  %3922 = vmatprep.subr.bf16.mxu0 %v3859
  %3923 = vmatpush1.bf16.msra.mxu0 %v3858
  %3924 = vmatprep.subr.bf16.mxu0 %v3861
  %3925 = vmatpush1.bf16.msra.mxu0 %v3860
  %3926 = vmatprep.subr.bf16.mxu0 %v3863
  %3927 = vmatpush1.bf16.msra.mxu0 %v3862
  %3928 = vmatprep.subr.bf16.mxu0 %v3865
  %3929 = vmatpush1.bf16.msra.mxu0 %v3864
  %3930 = vmatprep.subr.bf16.mxu0 %v3867
  %3931 = vmatpush1.bf16.msra.mxu0 %v3866
  %3932 = vmatprep.subr.bf16.mxu0 %v3869
  %3933 = vmatpush1.bf16.msra.mxu0 %v3868
  %3934 = vmatprep.subr.bf16.mxu0 %v3871
  %3935 = vmatpush1.bf16.msra.mxu0 %v3870
  %3936 = vmatprep.subr.bf16.mxu0 %v3873
  %3937 = vmatpush1.bf16.msra.mxu0 %v3872
  %3938 = vmatprep.subr.bf16.mxu0 %v3875
  %3939 = vmatpush1.bf16.msra.mxu0 %v3874
  %3940 = vmatprep.subr.bf16.mxu0 %v3877
  %3941 = vmatpush1.bf16.msra.mxu0 %v3876
  %3942 = vmatprep.subr.bf16.mxu0 %v3879
  %3943 = vmatpush1.bf16.msra.mxu0 %v3878
  %3944 = vmatprep.subr.bf16.mxu0 %v3881
  %3945 = vmatpush1.bf16.msra.mxu0 %v3880
  %3946 = vmatprep.mubr.bf16.mxu0 %v3742
  %3947 = vmatmul.mubr.bf16.gmra.mrb[0].mxu0 %v3741
  %v3948 = vpop.f32.mrb[0].mxu0
  %v3949 = vadd.f32 %v3747, %v3948
  %v3950 = vpop.f32.mrb[0].mxu0
  %v3951 = vadd.f32 %v3751, %v3950
  %v3952 = vpop.f32.mrb[0].mxu0
  %v3953 = vadd.f32 %v3747, %v3952
  %v3954 = vpop.f32.mrb[0].mxu0
  %v3955 = vadd.f32 %v3751, %v3954
  %3956 = vdwg.mxu0
  %v3957 = vadd.f32 %v3949, %v3953
  %v3958 = vrot.slane %v3957, 4
  %v3959 = vadd.f32 %v3957, %v3958
  %v3960 = vrot.slane %v3959, 2
  %v3961 = vadd.f32 %v3959, %v3960
  %v3962 = vrot.slane %v3961, 1
  %v3963 = vadd.f32 %v3961, %v3962
  %v3964 = vadd.f32 %v3951, %v3955
  %v3965 = vrot.slane %v3964, 4
  %v3966 = vadd.f32 %v3964, %v3965
  %v3967 = vrot.slane %v3966, 2
  %v3968 = vadd.f32 %v3966, %v3967
  %v3969 = vrot.slane %v3968, 1
  %v3970 = vadd.f32 %v3968, %v3969
  %v3971 = vmul.f32 %v3963, %v3634
  %v3972 = vmul.f32 %v3970, %v3634
  %v3973 = vsub.f32 %v3949, %v3971
  %v3974 = vsub.f32 %v3951, %v3972
  %v3975 = vsub.f32 %v3953, %v3971
  %v3976 = vsub.f32 %v3955, %v3972
  %v3977 = vmul.f32 %v3973, %v3973
  %v3978 = vmul.f32 %v3974, %v3974
  %v3979 = vmul.f32 %v3975, %v3975
  %v3980 = vmul.f32 %v3976, %v3976
  %v3981 = vadd.f32 %v3977, %v3979
  %v3982 = vrot.slane %v3981, 4
  %v3983 = vadd.f32 %v3981, %v3982
  %v3984 = vrot.slane %v3983, 2
  %v3985 = vadd.f32 %v3983, %v3984
  %v3986 = vrot.slane %v3985, 1
  %v3987 = vadd.f32 %v3985, %v3986
  %v3988 = vadd.f32 %v3978, %v3980
  %v3989 = vrot.slane %v3988, 4
  %v3990 = vadd.f32 %v3988, %v3989
  %v3991 = vrot.slane %v3990, 2
  %v3992 = vadd.f32 %v3990, %v3991
  %v3993 = vrot.slane %v3992, 1
  %v3994 = vadd.f32 %v3992, %v3993
  %v3995 = vmul.f32 %v3987, %v3634
  %v3996 = vmul.f32 %v3994, %v3634
  %v3998 = vlaneseq
  %v3999 = vshrl.u32 %v3998, 7
  %v4000 = vsub.s32 0, %v3999
  %v4001 = vrot.slane %v3738, %v4000
  %v4002 = vlaneseq
  %v4003 = vshrl.u32 %v4002, 7
  %v4004 = vsub.s32 1, %v4003
  %v4005 = vrot.slane %v3738, %v4004
  %v4008 = vmul.f32 %v4001, %v3973
  %v4009 = vmul.f32 %v4005, %v3974
  %v4010 = vmul.f32 %v4001, %v3975
  %v4011 = vmul.f32 %v4005, %v3976
  %v4012 = vadd.f32 %v3995, 1e-05
  %v4013 = vadd.f32 %v3996, 1e-05
  %v4014 = vrsqrt.pop %v4012
  %v4015 = vrsqrt.pop %v4013
  %v4016 = vmul.f32 %v4008, %v4014
  %v4017 = vmul.f32 %v4009, %v4015
  %v4018 = vmul.f32 %v4010, %v4014
  %v4019 = vmul.f32 %v4011, %v4015
  %v4021 = vlaneseq
  %v4022 = vshrl.u32 %v4021, 7
  %v4023 = vsub.s32 0, %v4022
  %v4024 = vrot.slane %v3740, %v4023
  %v4025 = vlaneseq
  %v4026 = vshrl.u32 %v4025, 7
  %v4027 = vsub.s32 1, %v4026
  %v4028 = vrot.slane %v3740, %v4027
  %v4031 = vadd.f32 %v4016, %v4024
  %v4032 = vadd.f32 %v4017, %v4028
  %v4033 = vadd.f32 %v4018, %v4024
  %v4034 = vadd.f32 %v4019, %v4028
  %v4035 = vmax.f32 %v4031, 0.0
  %v4036 = vmax.f32 %v4032, 0.0
  %v4037 = vmax.f32 %v4033, 0.0
  %v4038 = vmax.f32 %v4034, 0.0
  %4039 = vst [vmem:[%s11] sm:$0xff] %v4035
  %4040 = vst [vmem:[%s11 + $0x8] sm:$0xff] %v4036
  %4041 = vst [vmem:[%s11 + $0x10] sm:$0xff] %v4037
  %4042 = vst [vmem:[%s11 + $0x18] sm:$0xff] %v4038
  // Predicated region
  $region46: #{edge_cycle_forward.1} parent=0 // pred_check
    _
  $region47: #{edge_cycle_forward.1} parent=0 // pred_check_branch
    %4044 = sbr.rel (0) target = $region49
  $region48: #{edge_cycle_forward.1} parent=0 // pred_region
    _
  $region49: #{edge_cycle_forward.1} parent=0 // pred_fallthru
    _
  // Predicated region
  $region50: #{edge_cycle_forward.1} parent=0 // pred_check
    _
  $region51: #{edge_cycle_forward.1} parent=0 // pred_check_branch
    %4046 = sbr.rel (0) target = $region53
  $region52: #{edge_cycle_forward.1} parent=0 // pred_region
    _
  $region53: #{edge_cycle_forward.1} parent=0 // pred_fallthru
    _
  // Predicated region
  $region54: #{edge_cycle_forward.1} parent=0 // pred_check
    _
  $region55: #{edge_cycle_forward.1} parent=0 // pred_check_branch
    %4048 = sbr.rel (0) target = $region57
  $region56: #{edge_cycle_forward.1} parent=0 // pred_region
    _
  $region57: #{edge_cycle_forward.1} parent=0 // pred_fallthru
    _
  // Predicated region
  $region58: #{edge_cycle_forward.1} parent=0 // pred_check
    _
  $region59: #{edge_cycle_forward.1} parent=0 // pred_check_branch
    %4050 = sbr.rel (0) target = $region61
  $region60: #{edge_cycle_forward.1} parent=0 // pred_region
    _
  $region61: #{edge_cycle_forward.1} parent=0 // pred_fallthru
    _

</llo_original>
